<compile_context>
chip_gen: v5e
topology: v5e:2x2
jax: 0.10.0
libtpu: 0.0.40
codegen_flags: <defaults>
</compile_context>

<pallas_src>
import math

import jax
import jax.numpy as jnp
from jax import lax
from jax.experimental import pallas as pl
from jax.experimental.pallas import tpu as pltpu

CHUNK = 8            # timesteps per grid step (both kernels)
LANE = 128           # vreg lane width
SUBLANE_BF16 = 16    # bf16 sublane packing


def _round_up(x, m):
    return (x + m - 1) // m * m


# ---------------------------------------------------------------------------
# Kernel 1: input projection for both directions (one streaming GEMM).
# ---------------------------------------------------------------------------
def _proj_kernel(x_ref, w_ref, b_ref, g_ref):
    # x_ref: (CHUNK, Bp, Hp) bf16   w_ref: (Hp, 8*Hdp) bf16   b_ref: (1, 8*Hdp) f32
    # g_ref: (2, CHUNK, Bp, 4*Hdp) f32     [0] = forward gates, [1] = backward
    tch, bp, hp = x_ref.shape
    g4 = g_ref.shape[-1]
    x = x_ref[...].reshape(tch * bp, hp)          # sublane-aligned merge (free)
    g = jnp.dot(x, w_ref[...], preferred_element_type=jnp.float32) + b_ref[...]
    g = g.reshape(tch, bp, 2 * g4)
    g_ref[0] = g[..., :g4]
    g_ref[1] = g[..., g4:]


# ---------------------------------------------------------------------------
# Kernel 2: bidirectional LSTM recurrence over precomputed input gates.
#   grid = (direction, time-chunk); hn/cn output blocks carry the state.
# ---------------------------------------------------------------------------
def _lstm_rec_kernel(len_ref, g_ref, whh_ref, out_ref, hn_ref, cn_ref):
    d = pl.program_id(0)                  # 0 = forward, 1 = backward
    k = pl.program_id(1)                  # chunk step (processing order)
    n_chunks = pl.num_programs(1)

    r, bp, g4 = g_ref.shape               # (CHUNK, Bp, 4*Hdp)
    hd = g4 // 4

    @pl.when(k == 0)
    def _():
        hn_ref[...] = jnp.zeros_like(hn_ref)
        cn_ref[...] = jnp.zeros_like(cn_ref)

    lens = len_ref[...]                   # (Bp, 1) int32
    whh = whh_ref[...]                    # (Hdp, 4*Hdp) bf16
    chunk = (1 - d) * k + d * (n_chunks - 1 - k)
    base = chunk * r

    def step(j, carry):
        h, c = carry
        # local time inside the chunk: fwd walks j, bwd walks r-1-j
        lt = (1 - d) * j + d * (r - 1 - j)
        t = base + lt                                    # absolute timestep
        gates = g_ref[lt] + jnp.dot(h.astype(whh.dtype), whh,
                                    preferred_element_type=jnp.float32)
        i_g = jax.nn.sigmoid(gates[:, 0 * hd:1 * hd])    # PyTorch order i,f,g,o
        f_g = jax.nn.sigmoid(gates[:, 1 * hd:2 * hd])
        g_g = jnp.tanh(gates[:, 2 * hd:3 * hd])
        o_g = jax.nn.sigmoid(gates[:, 3 * hd:4 * hd])
        c_new = f_g * c + i_g * g_g
        h_new = o_g * jnp.tanh(c_new)
        mask = t < lens                                  # (Bp,1), broadcasts
        out_ref[lt] = jnp.where(mask, h_new, 0.0)        # padded rows -> 0
        return jnp.where(mask, h_new, h), jnp.where(mask, c_new, c)

    h_fin, c_fin = lax.fori_loop(0, r, step, (hn_ref[...], cn_ref[...]),
                                 unroll=True)
    hn_ref[...] = h_fin
    cn_ref[...] = c_fin


# ---------------------------------------------------------------------------
# Wrapper
# ---------------------------------------------------------------------------
def _pad_gate_cols(w, hd, hd_p):
    """(in_dim, 4*hd) -> (in_dim, 4*hd_p): zero-pad each of the 4 gate blocks."""
    if hd_p == hd:
        return w
    in_dim = w.shape[0]
    w = w.reshape(in_dim, 4, hd)
    w = jnp.pad(w, ((0, 0), (0, 0), (0, hd_p - hd)))
    return w.reshape(in_dim, 4 * hd_p)


@jax.jit
def encoder_forward(src, lengths, params):
    """src: (B, T) int32 token ids; lengths: (B,) int32.

    Returns (enc_output (B, T, H) f32, (h_n (2, B, Hd), c_n (2, B, Hd))),
    matching Embedding -> pack -> bidirectional LSTM -> unpack in eval().
    """
    emb = params["embedding"]                         # (V, H), pad row is zero
    B, T = src.shape
    H = emb.shape[1]
    Hd = H // 2

    Hd_p = _round_up(Hd, LANE)
    H_p = 2 * Hd_p
    B_p = _round_up(B, SUBLANE_BF16)
    T_p = _round_up(T, CHUNK)
    n_chunks = T_p // CHUNK

    # Embedding gather directly in time-major order; dropout(eval) -> identity.
    x = jnp.take(emb, src.T, axis=0).astype(jnp.float32)            # (T, B, H)
    x = jnp.pad(x, ((0, T_p - T), (0, B_p - B), (0, H_p - H)))
    x = x.astype(jnp.bfloat16)                                       # MXU operand

    lens = jnp.pad(lengths.astype(jnp.int32), (0, B_p - B)).reshape(B_p, 1)

    def prep_dir(sfx):
        wih = _pad_gate_cols(params[f"wih_{sfx}"], Hd, Hd_p)         # (H, 4Hdp)
        wih = jnp.pad(wih, ((0, H_p - H), (0, 0)))                   # (Hp, 4Hdp)
        whh = _pad_gate_cols(params[f"whh_{sfx}"], Hd, Hd_p)         # (Hd, 4Hdp)
        whh = jnp.pad(whh, ((0, Hd_p - Hd), (0, 0)))                 # (Hdp, 4Hdp)
        b = _pad_gate_cols(params[f"b_{sfx}"], Hd, Hd_p)             # (1, 4Hdp)
        return wih, whh, b

    wih_f, whh_f, b_f = prep_dir("f")
    wih_b, whh_b, b_b = prep_dir("b")
    w_all = jnp.concatenate([wih_f, wih_b], axis=1).astype(jnp.bfloat16)
    b_all = jnp.concatenate([b_f, b_b], axis=1)                      # f32
    whh_all = jnp.stack([whh_f, whh_b]).astype(jnp.bfloat16)         # (2,Hdp,4Hdp)

    # ---- kernel 1: gates_in[d, t] = x_t @ W_ih[d] + b[d] (streamed GEMM) ----
    proj_vmem = (2 * (CHUNK * B_p * H_p * 2 + 2 * CHUNK * B_p * 4 * Hd_p * 4)
                 + 2 * H_p * 8 * Hd_p * 2 + 8 * Hd_p * 4)
    gates = pl.pallas_call(
        _proj_kernel,
        grid=(n_chunks,),
        in_specs=[
            pl.BlockSpec((CHUNK, B_p, H_p), lambda i: (i, 0, 0)),
            pl.BlockSpec((H_p, 8 * Hd_p), lambda i: (0, 0)),
            pl.BlockSpec((1, 8 * Hd_p), lambda i: (0, 0)),
        ],
        out_specs=pl.BlockSpec((2, CHUNK, B_p, 4 * Hd_p),
                               lambda i: (0, i, 0, 0)),
        out_shape=jax.ShapeDtypeStruct((2, T_p, B_p, 4 * Hd_p), jnp.float32),
        compiler_params=pltpu.CompilerParams(
            dimension_semantics=("parallel",),
            vmem_limit_bytes=int(min(max(2 * proj_vmem, 16 << 20), 48 << 20))),
    )(x, w_all, b_all)

    # ---- kernel 2: the recurrence (grid over direction x time-chunks) ----
    rec_vmem = (2 * (CHUNK * B_p * 4 * Hd_p * 4 + CHUNK * B_p * Hd_p * 4
                     + Hd_p * 4 * Hd_p * 2 + 2 * B_p * Hd_p * 4) + B_p * 4)
    out, h_n, c_n = pl.pallas_call(
        _lstm_rec_kernel,
        grid=(2, n_chunks),
        in_specs=[
            pl.BlockSpec((B_p, 1), lambda d, k: (0, 0)),
            pl.BlockSpec((None, CHUNK, B_p, 4 * Hd_p),
                         lambda d, k: (d, (1 - d) * k + d * (n_chunks - 1 - k),
                                       0, 0)),
            pl.BlockSpec((None, Hd_p, 4 * Hd_p), lambda d, k: (d, 0, 0)),
        ],
        out_specs=(
            pl.BlockSpec((CHUNK, B_p, Hd_p),
                         lambda d, k: ((1 - d) * k + d * (n_chunks - 1 - k),
                                       0, d)),
            pl.BlockSpec((None, B_p, Hd_p), lambda d, k: (d, 0, 0)),
            pl.BlockSpec((None, B_p, Hd_p), lambda d, k: (d, 0, 0)),
        ),
        out_shape=(
            jax.ShapeDtypeStruct((T_p, B_p, H_p), jnp.float32),   # fused fwd|bwd
            jax.ShapeDtypeStruct((2, B_p, Hd_p), jnp.float32),    # h_n
            jax.ShapeDtypeStruct((2, B_p, Hd_p), jnp.float32),    # c_n
        ),
        compiler_params=pltpu.CompilerParams(
            dimension_semantics=("parallel", "arbitrary"),
            vmem_limit_bytes=int(min(max(2 * rec_vmem, 16 << 20), 48 << 20))),
    )(lens, gates, whh_all)

    # Strip padding, back to batch_first; dropout(eval) -> identity.
    if Hd_p == Hd and B_p == B and T_p == T:
        enc = out
    else:
        enc = jnp.concatenate(
            [out[:T, :B, :Hd], out[:T, :B, Hd_p:Hd_p + Hd]], axis=-1)
    enc_output = jnp.transpose(enc, (1, 0, 2))                       # (B, T, H)
    return enc_output, (h_n[:, :B, :Hd], c_n[:, :B, :Hd])


# ---------------------------------------------------------------------------
# Parameters (PyTorch-equivalent init, pre-transposed, fused biases)
# ---------------------------------------------------------------------------
def init_params(key, src_vocab_size, hidden_size, padding_idx):
    Hd = hidden_size // 2
    k = 1.0 / math.sqrt(Hd)
    ks = jax.random.split(key, 9)

    emb = jax.random.normal(ks[0], (src_vocab_size, hidden_size), jnp.float32)
    emb = emb.at[padding_idx].set(0.0)               # nn.Embedding padding row

    def u(key, shape):
        return jax.random.uniform(key, shape, jnp.float32, -k, k)

    # nn.LSTM params W_ih (4Hd,H), W_hh (4Hd,Hd), b_ih+b_hh, stored transposed
    # as (in_features, 4Hd) with fused bias.
    return {
        "embedding": emb,
        "wih_f": u(ks[1], (hidden_size, 4 * Hd)),
        "whh_f": u(ks[2], (Hd, 4 * Hd)),
        "b_f": u(ks[3], (1, 4 * Hd)) + u(ks[4], (1, 4 * Hd)),
        "wih_b": u(ks[5], (hidden_size, 4 * Hd)),
        "whh_b": u(ks[6], (Hd, 4 * Hd)),
        "b_b": u(ks[7], (1, 4 * Hd)) + u(ks[8], (1, 4 * Hd)),
    }


# ---------------------------------------------------------------------------
# Pure-JAX reference (lax.scan) mirroring the kernel's bf16 matmul operands.
# ---------------------------------------------------------------------------
def encoder_reference(src, lengths, params):
    emb = params["embedding"]
    x = jnp.take(emb, src.T, axis=0).astype(jnp.float32)            # (T, B, H)
    T, B, H = x.shape
    Hd = H // 2
    q = lambda a: a.astype(jnp.bfloat16).astype(jnp.float32)
    xq = q(x)
    lens = lengths.astype(jnp.int32)

    def run(wih, whh, b, reverse):
        wih, whh = q(wih), q(whh)
        ts = jnp.arange(T - 1, -1, -1) if reverse else jnp.arange(T)

        def step(carry, t):
            h, c = carry
            gates = xq[t] @ wih + q(h) @ whh + b
            i = jax.nn.sigmoid(gates[:, :Hd])
            f = jax.nn.sigmoid(gates[:, Hd:2 * Hd])
            g = jnp.tanh(gates[:, 2 * Hd:3 * Hd])
            o = jax.nn.sigmoid(gates[:, 3 * Hd:])
            c_new = f * c + i * g
            h_new = o * jnp.tanh(c_new)
            m = (t < lens)[:, None]
            y = jnp.where(m, h_new, 0.0)
            return (jnp.where(m, h_new, h), jnp.where(m, c_new, c)), y

        (h, c), ys = lax.scan(step, (jnp.zeros((B, Hd)), jnp.zeros((B, Hd))), ts)
        if reverse:
            ys = ys[::-1]
        return ys, h, c

    yf, hf, cf = run(params["wih_f"], params["whh_f"], params["b_f"], False)
    yb, hb, cb = run(params["wih_b"], params["whh_b"], params["b_b"], True)
    enc = jnp.concatenate([yf, yb], axis=-1)
    return jnp.transpose(enc, (1, 0, 2)), (jnp.stack([hf, hb]),
                                           jnp.stack([cf, cb]))


if __name__ == "__main__":
    SRC_VOCAB = 32
    HIDDEN = 32          # per-direction hidden = 16
    PADDING_IDX = 0
    B, T = 2, 8

    key = jax.random.PRNGKey(0)
    pkey, skey = jax.random.split(key)
    params = init_params(pkey, SRC_VOCAB, HIDDEN, PADDING_IDX)

    lengths = jnp.array([8, 5], dtype=jnp.int32)
    src = jax.random.randint(skey, (B, T), 1, SRC_VOCAB, dtype=jnp.int32)
    pos = jnp.arange(T)[None, :]
    src = jnp.where(pos < lengths[:, None], src, PADDING_IDX)

    enc_output, (h_n, c_n) = encoder_forward(src, lengths, params)
    jax.block_until_ready((enc_output, h_n, c_n))

    assert enc_output.shape == (B, T, HIDDEN)
    assert h_n.shape == (2, B, HIDDEN // 2)
    assert c_n.shape == (2, B, HIDDEN // 2)

    # Self-check vs a pure-JAX reference with identical bf16 operand rounding;
    # loose tolerance absorbs MXU accumulation-order / EUP approximation deltas.
    ref_out, (ref_h, ref_c) = encoder_reference(src, lengths, params)
    for got, ref in ((enc_output, ref_out), (h_n, ref_h), (c_n, ref_c)):
        err = jnp.max(jnp.abs(got - ref))
        assert bool(err < 5e-2), f"mismatch vs reference: max abs err {err}"

    print("KERNEL_OK")
</pallas_src>

<mosaic_0001>
module attributes {stable_mosaic.version = 11 : i64} {
  func.func @_proj_kernel(%arg0: i32, %arg1: memref<8x16x256xbf16, #tpu.memory_space<vmem>>, %arg2: memref<256x1024xbf16, #tpu.memory_space<vmem>>, %arg3: memref<1x1024xf32, #tpu.memory_space<vmem>>, %arg4: memref<2x8x16x512xf32, #tpu.memory_space<vmem>>) attributes {dimension_semantics = [#tpu.dimension_semantics<parallel>], iteration_bounds = array<i64: 1>, scalar_prefetch = 0 : i64, scratch_operands = 0 : i64, tpu.core_type = #tpu.core_type<tc>, window_params = [{transform_indices = @transform_0, window_bounds = array<i64: 8, 16, 256>}, {pipeline_mode = #tpu.pipeline_mode<synchronous>, transform_indices = @transform_1, window_bounds = array<i64: 256, 1024>}, {pipeline_mode = #tpu.pipeline_mode<synchronous>, transform_indices = @transform_2, window_bounds = array<i64: 1, 1024>}, {transform_indices = @transform_3, window_bounds = array<i64: 2, 8, 16, 512>}]} {
    %c0 = arith.constant 0 : index
    %c0_0 = arith.constant 0 : index
    %c0_1 = arith.constant 0 : index
    %0 = vector.load %arg1[%c0, %c0_0, %c0_1] : memref<8x16x256xbf16, #tpu.memory_space<vmem>>, vector<8x16x256xbf16>
    %1 = vector.shape_cast %0 : vector<8x16x256xbf16> to vector<128x256xbf16>
    %c0_2 = arith.constant 0 : index
    %c0_3 = arith.constant 0 : index
    %2 = vector.load %arg2[%c0_2, %c0_3] : memref<256x1024xbf16, #tpu.memory_space<vmem>>, vector<256x1024xbf16>
    %cst = arith.constant dense<0.000000e+00> : vector<128x1024xf32>
    %3 = tpu.matmul %1, %2, %cst {dimension_numbers = #tpu.dot_dimension_numbers<[1], [0], [0], [1], [0, 0, 1, 1], [], []>} : vector<128x256xbf16>, vector<256x1024xbf16>, vector<128x1024xf32> -> vector<128x1024xf32>
    %c0_4 = arith.constant 0 : index
    %c0_5 = arith.constant 0 : index
    %4 = vector.load %arg3[%c0_4, %c0_5] : memref<1x1024xf32, #tpu.memory_space<vmem>>, vector<1x1024xf32>
    %5 = vector.broadcast %4 : vector<1x1024xf32> to vector<128x1024xf32>
    %6 = arith.addf %3, %5 : vector<128x1024xf32>
    %7 = vector.shape_cast %6 : vector<128x1024xf32> to vector<8x16x1024xf32>
    %8 = vector.extract_strided_slice %7 {offsets = [0, 0, 0], sizes = [8, 16, 512], strides = [1, 1, 1]} : vector<8x16x1024xf32> to vector<8x16x512xf32>
    %c0_6 = arith.constant 0 : index
    %c0_7 = arith.constant 0 : index
    %c0_8 = arith.constant 0 : index
    %c0_9 = arith.constant 0 : index
    %9 = vector.load %arg4[%c0_6, %c0_7, %c0_8, %c0_9] : memref<2x8x16x512xf32, #tpu.memory_space<vmem>>, vector<1x8x16x512xf32>
    %10 = vector.shape_cast %9 : vector<1x8x16x512xf32> to vector<8x16x512xf32>
    %11 = vector.shape_cast %8 : vector<8x16x512xf32> to vector<1x8x16x512xf32>
    tpu.vector_store %arg4[%c0_6, %c0_7, %c0_8, %c0_9], %11 {strides = array<i32>} : memref<2x8x16x512xf32, #tpu.memory_space<vmem>>, vector<1x8x16x512xf32>,
    %12 = vector.extract_strided_slice %7 {offsets = [0, 0, 512], sizes = [8, 16, 512], strides = [1, 1, 1]} : vector<8x16x1024xf32> to vector<8x16x512xf32>
    %c1 = arith.constant 1 : index
    %c0_10 = arith.constant 0 : index
    %c0_11 = arith.constant 0 : index
    %c0_12 = arith.constant 0 : index
    %13 = vector.load %arg4[%c1, %c0_10, %c0_11, %c0_12] : memref<2x8x16x512xf32, #tpu.memory_space<vmem>>, vector<1x8x16x512xf32>
    %14 = vector.shape_cast %13 : vector<1x8x16x512xf32> to vector<8x16x512xf32>
    %15 = vector.shape_cast %12 : vector<8x16x512xf32> to vector<1x8x16x512xf32>
    tpu.vector_store %arg4[%c1, %c0_10, %c0_11, %c0_12], %15 {strides = array<i32>} : memref<2x8x16x512xf32, #tpu.memory_space<vmem>>, vector<1x8x16x512xf32>,
    return
  }
  func.func @transform_0(%arg0: i32) -> (i32, i32, i32) {
    %c0_i32 = arith.constant 0 : i32
    %c0_i32_0 = arith.constant 0 : i32
    %c0_i32_1 = arith.constant 0 : i32
    return %arg0, %c0_i32, %c0_i32_0 : i32, i32, i32
  }
  func.func @transform_1(%arg0: i32) -> (i32, i32) {
    %c0_i32 = arith.constant 0 : i32
    %c0_i32_0 = arith.constant 0 : i32
    %c0_i32_1 = arith.constant 0 : i32
    return %c0_i32, %c0_i32_0 : i32, i32
  }
  func.func @transform_2(%arg0: i32) -> (i32, i32) {
    %c0_i32 = arith.constant 0 : i32
    %c0_i32_0 = arith.constant 0 : i32
    %c0_i32_1 = arith.constant 0 : i32
    return %c0_i32, %c0_i32_0 : i32, i32
  }
  func.func @transform_3(%arg0: i32) -> (i32, i32, i32, i32) {
    %c0_i32 = arith.constant 0 : i32
    %c0_i32_0 = arith.constant 0 : i32
    %c0_i32_1 = arith.constant 0 : i32
    %c0_i32_2 = arith.constant 0 : i32
    return %c0_i32, %arg0, %c0_i32_0, %c0_i32_1 : i32, i32, i32, i32
  }
}

module attributes {stable_mosaic.version = 11 : i64} {
  func.func @_lstm_rec_kernel(%arg0: i32, %arg1: i32, %arg2: memref<16x1xi32, #tpu.memory_space<vmem>>, %arg3: memref<1x8x16x512xf32, #tpu.memory_space<vmem>>, %arg4: memref<1x128x512xbf16, #tpu.memory_space<vmem>>, %arg5: memref<8x16x128xf32, #tpu.memory_space<vmem>>, %arg6: memref<1x16x128xf32, #tpu.memory_space<vmem>>, %arg7: memref<1x16x128xf32, #tpu.memory_space<vmem>>) attributes {dimension_semantics = [#tpu.dimension_semantics<parallel>, #tpu.dimension_semantics<arbitrary>], iteration_bounds = array<i64: 2, 1>, scalar_prefetch = 0 : i64, scratch_operands = 0 : i64, tpu.core_type = #tpu.core_type<tc>, window_params = [{pipeline_mode = #tpu.pipeline_mode<synchronous>, transform_indices = @transform_0, window_bounds = array<i64: 16, 1>}, {transform_indices = @transform_1, window_bounds = array<i64: 1, 8, 16, 512>}, {transform_indices = @transform_2, window_bounds = array<i64: 1, 128, 512>}, {transform_indices = @transform_3, window_bounds = array<i64: 8, 16, 128>}, {transform_indices = @transform_4, window_bounds = array<i64: 1, 16, 128>}, {transform_indices = @transform_5, window_bounds = array<i64: 1, 16, 128>}]} {
    %c0_i32 = arith.constant 0 : i32
    %0 = arith.cmpi eq, %arg1, %c0_i32 : i32
    %1 = arith.extui %0 : i1 to i32
    %c0_i32_0 = arith.constant 0 : i32
    %2 = arith.cmpi ne, %1, %c0_i32_0 : i32
    scf.if %2 {
      %cst_116 = arith.constant 0.000000e+00 : f32
      %446 = vector.broadcast %cst_116 : f32 to vector<16x128xf32>
      %c0_117 = arith.constant 0 : index
      %c0_118 = arith.constant 0 : index
      %c0_119 = arith.constant 0 : index
      %447 = vector.load %arg6[%c0_117, %c0_118, %c0_119] : memref<1x16x128xf32, #tpu.memory_space<vmem>>, vector<1x16x128xf32>
      %448 = vector.shape_cast %447 : vector<1x16x128xf32> to vector<16x128xf32>
      %449 = vector.shape_cast %446 : vector<16x128xf32> to vector<1x16x128xf32>
      tpu.vector_store %arg6[%c0_117, %c0_118, %c0_119], %449 {strides = array<i32>} : memref<1x16x128xf32, #tpu.memory_space<vmem>>, vector<1x16x128xf32>,
      %cst_120 = arith.constant 0.000000e+00 : f32
      %450 = vector.broadcast %cst_120 : f32 to vector<16x128xf32>
      %c0_121 = arith.constant 0 : index
      %c0_122 = arith.constant 0 : index
      %c0_123 = arith.constant 0 : index
      %451 = vector.load %arg7[%c0_121, %c0_122, %c0_123] : memref<1x16x128xf32, #tpu.memory_space<vmem>>, vector<1x16x128xf32>
      %452 = vector.shape_cast %451 : vector<1x16x128xf32> to vector<16x128xf32>
      %453 = vector.shape_cast %450 : vector<16x128xf32> to vector<1x16x128xf32>
      tpu.vector_store %arg7[%c0_121, %c0_122, %c0_123], %453 {strides = array<i32>} : memref<1x16x128xf32, #tpu.memory_space<vmem>>, vector<1x16x128xf32>,
    } else {
    }
    %c0 = arith.constant 0 : index
    %c0_1 = arith.constant 0 : index
    %3 = vector.load %arg2[%c0, %c0_1] : memref<16x1xi32, #tpu.memory_space<vmem>>, vector<16x1xi32>
    %c0_2 = arith.constant 0 : index
    %c0_3 = arith.constant 0 : index
    %c0_4 = arith.constant 0 : index
    %4 = vector.load %arg4[%c0_2, %c0_3, %c0_4] : memref<1x128x512xbf16, #tpu.memory_space<vmem>>, vector<1x128x512xbf16>
    %5 = vector.shape_cast %4 : vector<1x128x512xbf16> to vector<128x512xbf16>
    %c1_i32 = arith.constant 1 : i32
    %6 = arith.subi %c1_i32, %arg0 : i32
    %7 = arith.muli %6, %arg1 : i32
    %c0_i32_5 = arith.constant 0 : i32
    %8 = arith.subi %c0_i32_5, %arg1 : i32
    %9 = arith.muli %arg0, %8 : i32
    %10 = arith.addi %7, %9 : i32
    %c8_i32 = arith.constant 8 : i32
    %11 = arith.muli %10, %c8_i32 : i32
    %c0_6 = arith.constant 0 : index
    %c0_7 = arith.constant 0 : index
    %c0_8 = arith.constant 0 : index
    %12 = vector.load %arg6[%c0_6, %c0_7, %c0_8] : memref<1x16x128xf32, #tpu.memory_space<vmem>>, vector<1x16x128xf32>
    %13 = vector.shape_cast %12 : vector<1x16x128xf32> to vector<16x128xf32>
    %c0_9 = arith.constant 0 : index
    %c0_10 = arith.constant 0 : index
    %c0_11 = arith.constant 0 : index
    %14 = vector.load %arg7[%c0_9, %c0_10, %c0_11] : memref<1x16x128xf32, #tpu.memory_space<vmem>>, vector<1x16x128xf32>
    %15 = vector.shape_cast %14 : vector<1x16x128xf32> to vector<16x128xf32>
    %c0_i32_12 = arith.constant 0 : i32
    %c1_i32_13 = arith.constant 1 : i32
    %16 = arith.subi %c1_i32_13, %arg0 : i32
    %17 = arith.muli %16, %c0_i32_12 : i32
    %c7_i32 = arith.constant 7 : i32
    %18 = arith.subi %c7_i32, %c0_i32_12 : i32
    %19 = arith.muli %arg0, %18 : i32
    %20 = arith.addi %17, %19 : i32
    %21 = arith.addi %11, %20 : i32
    %c0_14 = arith.constant 0 : index
    %22 = arith.index_cast %20 : i32 to index
    %c0_15 = arith.constant 0 : index
    %c0_16 = arith.constant 0 : index
    %23 = vector.load %arg3[%c0_14, %22, %c0_15, %c0_16] : memref<1x8x16x512xf32, #tpu.memory_space<vmem>>, vector<1x1x16x512xf32>
    %24 = vector.shape_cast %23 : vector<1x1x16x512xf32> to vector<16x512xf32>
    %25 = arith.truncf %13 : vector<16x128xf32> to vector<16x128xbf16>
    %cst = arith.constant dense<0.000000e+00> : vector<16x512xf32>
    %26 = tpu.matmul %25, %5, %cst {dimension_numbers = #tpu.dot_dimension_numbers<[1], [0], [0], [1], [0, 0, 1, 1], [], []>} : vector<16x128xbf16>, vector<128x512xbf16>, vector<16x512xf32> -> vector<16x512xf32>
    %27 = arith.addf %24, %26 : vector<16x512xf32>
    %28 = vector.extract_strided_slice %27 {offsets = [0, 0], sizes = [16, 128], strides = [1, 1]} : vector<16x512xf32> to vector<16x128xf32>
    %29 = arith.negf %28 : vector<16x128xf32>
    %30 = math.exp %29 : vector<16x128xf32>
    %cst_17 = arith.constant 1.000000e+00 : f32
    %31 = vector.broadcast %cst_17 : f32 to vector<16x128xf32>
    %32 = arith.addf %31, %30 : vector<16x128xf32>
    %33 = arith.divf %31, %32 : vector<16x128xf32>
    %34 = vector.extract_strided_slice %27 {offsets = [0, 128], sizes = [16, 128], strides = [1, 1]} : vector<16x512xf32> to vector<16x128xf32>
    %35 = arith.negf %34 : vector<16x128xf32>
    %36 = math.exp %35 : vector<16x128xf32>
    %cst_18 = arith.constant 1.000000e+00 : f32
    %37 = vector.broadcast %cst_18 : f32 to vector<16x128xf32>
    %38 = arith.addf %37, %36 : vector<16x128xf32>
    %39 = arith.divf %37, %38 : vector<16x128xf32>
    %40 = vector.extract_strided_slice %27 {offsets = [0, 256], sizes = [16, 128], strides = [1, 1]} : vector<16x512xf32> to vector<16x128xf32>
    %41 = math.tanh %40 : vector<16x128xf32>
    %42 = vector.extract_strided_slice %27 {offsets = [0, 384], sizes = [16, 128], strides = [1, 1]} : vector<16x512xf32> to vector<16x128xf32>
    %43 = arith.negf %42 : vector<16x128xf32>
    %44 = math.exp %43 : vector<16x128xf32>
    %cst_19 = arith.constant 1.000000e+00 : f32
    %45 = vector.broadcast %cst_19 : f32 to vector<16x128xf32>
    %46 = arith.addf %45, %44 : vector<16x128xf32>
    %47 = arith.divf %45, %46 : vector<16x128xf32>
    %48 = arith.mulf %39, %15 : vector<16x128xf32>
    %49 = arith.mulf %33, %41 : vector<16x128xf32>
    %50 = arith.addf %48, %49 : vector<16x128xf32>
    %51 = math.tanh %50 : vector<16x128xf32>
    %52 = arith.mulf %47, %51 : vector<16x128xf32>
    %53 = vector.broadcast %21 : i32 to vector<16x1xi32>
    %54 = arith.cmpi slt, %53, %3 : vector<16x1xi32>
    %cst_20 = arith.constant 0.000000e+00 : f32
    %55 = vector.shape_cast %54 : vector<16x1xi1> to vector<16x1xi1>
    %56 = vector.broadcast %55 : vector<16x1xi1> to vector<16x128xi1>
    %57 = vector.broadcast %cst_20 : f32 to vector<16x128xf32>
    %58 = arith.select %56, %52, %57 : vector<16x128xi1>, vector<16x128xf32>
    %59 = arith.index_cast %20 : i32 to index
    %c0_21 = arith.constant 0 : index
    %c0_22 = arith.constant 0 : index
    %60 = vector.load %arg5[%59, %c0_21, %c0_22] : memref<8x16x128xf32, #tpu.memory_space<vmem>>, vector<1x16x128xf32>
    %61 = vector.shape_cast %60 : vector<1x16x128xf32> to vector<16x128xf32>
    %62 = vector.shape_cast %58 : vector<16x128xf32> to vector<1x16x128xf32>
    tpu.vector_store %arg5[%59, %c0_21, %c0_22], %62 {strides = array<i32>} : memref<8x16x128xf32, #tpu.memory_space<vmem>>, vector<1x16x128xf32>,
    %63 = vector.shape_cast %54 : vector<16x1xi1> to vector<16x1xi1>
    %64 = vector.broadcast %63 : vector<16x1xi1> to vector<16x128xi1>
    %65 = arith.select %64, %52, %13 : vector<16x128xi1>, vector<16x128xf32>
    %66 = vector.shape_cast %54 : vector<16x1xi1> to vector<16x1xi1>
    %67 = vector.broadcast %66 : vector<16x1xi1> to vector<16x128xi1>
    %68 = arith.select %67, %50, %15 : vector<16x128xi1>, vector<16x128xf32>
    %c1_i32_23 = arith.constant 1 : i32
    %c1_i32_24 = arith.constant 1 : i32
    %69 = arith.subi %c1_i32_24, %arg0 : i32
    %70 = arith.muli %69, %c1_i32_23 : i32
    %c7_i32_25 = arith.constant 7 : i32
    %71 = arith.subi %c7_i32_25, %c1_i32_23 : i32
    %72 = arith.muli %arg0, %71 : i32
    %73 = arith.addi %70, %72 : i32
    %74 = arith.addi %11, %73 : i32
    %c0_26 = arith.constant 0 : index
    %75 = arith.index_cast %73 : i32 to index
    %c0_27 = arith.constant 0 : index
    %c0_28 = arith.constant 0 : index
    %76 = vector.load %arg3[%c0_26, %75, %c0_27, %c0_28] : memref<1x8x16x512xf32, #tpu.memory_space<vmem>>, vector<1x1x16x512xf32>
    %77 = vector.shape_cast %76 : vector<1x1x16x512xf32> to vector<16x512xf32>
    %78 = arith.truncf %65 : vector<16x128xf32> to vector<16x128xbf16>
    %cst_29 = arith.constant dense<0.000000e+00> : vector<16x512xf32>
    %79 = tpu.matmul %78, %5, %cst_29 {dimension_numbers = #tpu.dot_dimension_numbers<[1], [0], [0], [1], [0, 0, 1, 1], [], []>} : vector<16x128xbf16>, vector<128x512xbf16>, vector<16x512xf32> -> vector<16x512xf32>
    %80 = arith.addf %77, %79 : vector<16x512xf32>
    %81 = vector.extract_strided_slice %80 {offsets = [0, 0], sizes = [16, 128], strides = [1, 1]} : vector<16x512xf32> to vector<16x128xf32>
    %82 = arith.negf %81 : vector<16x128xf32>
    %83 = math.exp %82 : vector<16x128xf32>
    %cst_30 = arith.constant 1.000000e+00 : f32
    %84 = vector.broadcast %cst_30 : f32 to vector<16x128xf32>
    %85 = arith.addf %84, %83 : vector<16x128xf32>
    %86 = arith.divf %84, %85 : vector<16x128xf32>
    %87 = vector.extract_strided_slice %80 {offsets = [0, 128], sizes = [16, 128], strides = [1, 1]} : vector<16x512xf32> to vector<16x128xf32>
    %88 = arith.negf %87 : vector<16x128xf32>
    %89 = math.exp %88 : vector<16x128xf32>
    %cst_31 = arith.constant 1.000000e+00 : f32
    %90 = vector.broadcast %cst_31 : f32 to vector<16x128xf32>
    %91 = arith.addf %90, %89 : vector<16x128xf32>
    %92 = arith.divf %90, %91 : vector<16x128xf32>
    %93 = vector.extract_strided_slice %80 {offsets = [0, 256], sizes = [16, 128], strides = [1, 1]} : vector<16x512xf32> to vector<16x128xf32>
    %94 = math.tanh %93 : vector<16x128xf32>
    %95 = vector.extract_strided_slice %80 {offsets = [0, 384], sizes = [16, 128], strides = [1, 1]} : vector<16x512xf32> to vector<16x128xf32>
    %96 = arith.negf %95 : vector<16x128xf32>
    %97 = math.exp %96 : vector<16x128xf32>
    %cst_32 = arith.constant 1.000000e+00 : f32
    %98 = vector.broadcast %cst_32 : f32 to vector<16x128xf32>
    %99 = arith.addf %98, %97 : vector<16x128xf32>
    %100 = arith.divf %98, %99 : vector<16x128xf32>
    %101 = arith.mulf %92, %68 : vector<16x128xf32>
    %102 = arith.mulf %86, %94 : vector<16x128xf32>
    %103 = arith.addf %101, %102 : vector<16x128xf32>
    %104 = math.tanh %103 : vector<16x128xf32>
    %105 = arith.mulf %100, %104 : vector<16x128xf32>
    %106 = vector.broadcast %74 : i32 to vector<16x1xi32>
    %107 = arith.cmpi slt, %106, %3 : vector<16x1xi32>
    %cst_33 = arith.constant 0.000000e+00 : f32
    %108 = vector.shape_cast %107 : vector<16x1xi1> to vector<16x1xi1>
    %109 = vector.broadcast %108 : vector<16x1xi1> to vector<16x128xi1>
    %110 = vector.broadcast %cst_33 : f32 to vector<16x128xf32>
    %111 = arith.select %109, %105, %110 : vector<16x128xi1>, vector<16x128xf32>
    %112 = arith.index_cast %73 : i32 to index
    %c0_34 = arith.constant 0 : index
    %c0_35 = arith.constant 0 : index
    %113 = vector.load %arg5[%112, %c0_34, %c0_35] : memref<8x16x128xf32, #tpu.memory_space<vmem>>, vector<1x16x128xf32>
    %114 = vector.shape_cast %113 : vector<1x16x128xf32> to vector<16x128xf32>
    %115 = vector.shape_cast %111 : vector<16x128xf32> to vector<1x16x128xf32>
    tpu.vector_store %arg5[%112, %c0_34, %c0_35], %115 {strides = array<i32>} : memref<8x16x128xf32, #tpu.memory_space<vmem>>, vector<1x16x128xf32>,
    %116 = vector.shape_cast %107 : vector<16x1xi1> to vector<16x1xi1>
    %117 = vector.broadcast %116 : vector<16x1xi1> to vector<16x128xi1>
    %118 = arith.select %117, %105, %65 : vector<16x128xi1>, vector<16x128xf32>
    %119 = vector.shape_cast %107 : vector<16x1xi1> to vector<16x1xi1>
    %120 = vector.broadcast %119 : vector<16x1xi1> to vector<16x128xi1>
    %121 = arith.select %120, %103, %68 : vector<16x128xi1>, vector<16x128xf32>
    %c2_i32 = arith.constant 2 : i32
    %c1_i32_36 = arith.constant 1 : i32
    %122 = arith.subi %c1_i32_36, %arg0 : i32
    %123 = arith.muli %122, %c2_i32 : i32
    %c7_i32_37 = arith.constant 7 : i32
    %124 = arith.subi %c7_i32_37, %c2_i32 : i32
    %125 = arith.muli %arg0, %124 : i32
    %126 = arith.addi %123, %125 : i32
    %127 = arith.addi %11, %126 : i32
    %c0_38 = arith.constant 0 : index
    %128 = arith.index_cast %126 : i32 to index
    %c0_39 = arith.constant 0 : index
    %c0_40 = arith.constant 0 : index
    %129 = vector.load %arg3[%c0_38, %128, %c0_39, %c0_40] : memref<1x8x16x512xf32, #tpu.memory_space<vmem>>, vector<1x1x16x512xf32>
    %130 = vector.shape_cast %129 : vector<1x1x16x512xf32> to vector<16x512xf32>
    %131 = arith.truncf %118 : vector<16x128xf32> to vector<16x128xbf16>
    %cst_41 = arith.constant dense<0.000000e+00> : vector<16x512xf32>
    %132 = tpu.matmul %131, %5, %cst_41 {dimension_numbers = #tpu.dot_dimension_numbers<[1], [0], [0], [1], [0, 0, 1, 1], [], []>} : vector<16x128xbf16>, vector<128x512xbf16>, vector<16x512xf32> -> vector<16x512xf32>
    %133 = arith.addf %130, %132 : vector<16x512xf32>
    %134 = vector.extract_strided_slice %133 {offsets = [0, 0], sizes = [16, 128], strides = [1, 1]} : vector<16x512xf32> to vector<16x128xf32>
    %135 = arith.negf %134 : vector<16x128xf32>
    %136 = math.exp %135 : vector<16x128xf32>
    %cst_42 = arith.constant 1.000000e+00 : f32
    %137 = vector.broadcast %cst_42 : f32 to vector<16x128xf32>
    %138 = arith.addf %137, %136 : vector<16x128xf32>
    %139 = arith.divf %137, %138 : vector<16x128xf32>
    %140 = vector.extract_strided_slice %133 {offsets = [0, 128], sizes = [16, 128], strides = [1, 1]} : vector<16x512xf32> to vector<16x128xf32>
    %141 = arith.negf %140 : vector<16x128xf32>
    %142 = math.exp %141 : vector<16x128xf32>
    %cst_43 = arith.constant 1.000000e+00 : f32
    %143 = vector.broadcast %cst_43 : f32 to vector<16x128xf32>
    %144 = arith.addf %143, %142 : vector<16x128xf32>
    %145 = arith.divf %143, %144 : vector<16x128xf32>
    %146 = vector.extract_strided_slice %133 {offsets = [0, 256], sizes = [16, 128], strides = [1, 1]} : vector<16x512xf32> to vector<16x128xf32>
    %147 = math.tanh %146 : vector<16x128xf32>
    %148 = vector.extract_strided_slice %133 {offsets = [0, 384], sizes = [16, 128], strides = [1, 1]} : vector<16x512xf32> to vector<16x128xf32>
    %149 = arith.negf %148 : vector<16x128xf32>
    %150 = math.exp %149 : vector<16x128xf32>
    %cst_44 = arith.constant 1.000000e+00 : f32
    %151 = vector.broadcast %cst_44 : f32 to vector<16x128xf32>
    %152 = arith.addf %151, %150 : vector<16x128xf32>
    %153 = arith.divf %151, %152 : vector<16x128xf32>
    %154 = arith.mulf %145, %121 : vector<16x128xf32>
    %155 = arith.mulf %139, %147 : vector<16x128xf32>
    %156 = arith.addf %154, %155 : vector<16x128xf32>
    %157 = math.tanh %156 : vector<16x128xf32>
    %158 = arith.mulf %153, %157 : vector<16x128xf32>
    %159 = vector.broadcast %127 : i32 to vector<16x1xi32>
    %160 = arith.cmpi slt, %159, %3 : vector<16x1xi32>
    %cst_45 = arith.constant 0.000000e+00 : f32
    %161 = vector.shape_cast %160 : vector<16x1xi1> to vector<16x1xi1>
    %162 = vector.broadcast %161 : vector<16x1xi1> to vector<16x128xi1>
    %163 = vector.broadcast %cst_45 : f32 to vector<16x128xf32>
    %164 = arith.select %162, %158, %163 : vector<16x128xi1>, vector<16x128xf32>
    %165 = arith.index_cast %126 : i32 to index
    %c0_46 = arith.constant 0 : index
    %c0_47 = arith.constant 0 : index
    %166 = vector.load %arg5[%165, %c0_46, %c0_47] : memref<8x16x128xf32, #tpu.memory_space<vmem>>, vector<1x16x128xf32>
    %167 = vector.shape_cast %166 : vector<1x16x128xf32> to vector<16x128xf32>
    %168 = vector.shape_cast %164 : vector<16x128xf32> to vector<1x16x128xf32>
    tpu.vector_store %arg5[%165, %c0_46, %c0_47], %168 {strides = array<i32>} : memref<8x16x128xf32, #tpu.memory_space<vmem>>, vector<1x16x128xf32>,
    %169 = vector.shape_cast %160 : vector<16x1xi1> to vector<16x1xi1>
    %170 = vector.broadcast %169 : vector<16x1xi1> to vector<16x128xi1>
    %171 = arith.select %170, %158, %118 : vector<16x128xi1>, vector<16x128xf32>
    %172 = vector.shape_cast %160 : vector<16x1xi1> to vector<16x1xi1>
    %173 = vector.broadcast %172 : vector<16x1xi1> to vector<16x128xi1>
    %174 = arith.select %173, %156, %121 : vector<16x128xi1>, vector<16x128xf32>
    %c3_i32 = arith.constant 3 : i32
    %c1_i32_48 = arith.constant 1 : i32
    %175 = arith.subi %c1_i32_48, %arg0 : i32
    %176 = arith.muli %175, %c3_i32 : i32
    %c7_i32_49 = arith.constant 7 : i32
    %177 = arith.subi %c7_i32_49, %c3_i32 : i32
    %178 = arith.muli %arg0, %177 : i32
    %179 = arith.addi %176, %178 : i32
    %180 = arith.addi %11, %179 : i32
    %c0_50 = arith.constant 0 : index
    %181 = arith.index_cast %179 : i32 to index
    %c0_51 = arith.constant 0 : index
    %c0_52 = arith.constant 0 : index
    %182 = vector.load %arg3[%c0_50, %181, %c0_51, %c0_52] : memref<1x8x16x512xf32, #tpu.memory_space<vmem>>, vector<1x1x16x512xf32>
    %183 = vector.shape_cast %182 : vector<1x1x16x512xf32> to vector<16x512xf32>
    %184 = arith.truncf %171 : vector<16x128xf32> to vector<16x128xbf16>
    %cst_53 = arith.constant dense<0.000000e+00> : vector<16x512xf32>
    %185 = tpu.matmul %184, %5, %cst_53 {dimension_numbers = #tpu.dot_dimension_numbers<[1], [0], [0], [1], [0, 0, 1, 1], [], []>} : vector<16x128xbf16>, vector<128x512xbf16>, vector<16x512xf32> -> vector<16x512xf32>
    %186 = arith.addf %183, %185 : vector<16x512xf32>
    %187 = vector.extract_strided_slice %186 {offsets = [0, 0], sizes = [16, 128], strides = [1, 1]} : vector<16x512xf32> to vector<16x128xf32>
    %188 = arith.negf %187 : vector<16x128xf32>
    %189 = math.exp %188 : vector<16x128xf32>
    %cst_54 = arith.constant 1.000000e+00 : f32
    %190 = vector.broadcast %cst_54 : f32 to vector<16x128xf32>
    %191 = arith.addf %190, %189 : vector<16x128xf32>
    %192 = arith.divf %190, %191 : vector<16x128xf32>
    %193 = vector.extract_strided_slice %186 {offsets = [0, 128], sizes = [16, 128], strides = [1, 1]} : vector<16x512xf32> to vector<16x128xf32>
    %194 = arith.negf %193 : vector<16x128xf32>
    %195 = math.exp %194 : vector<16x128xf32>
    %cst_55 = arith.constant 1.000000e+00 : f32
    %196 = vector.broadcast %cst_55 : f32 to vector<16x128xf32>
    %197 = arith.addf %196, %195 : vector<16x128xf32>
    %198 = arith.divf %196, %197 : vector<16x128xf32>
    %199 = vector.extract_strided_slice %186 {offsets = [0, 256], sizes = [16, 128], strides = [1, 1]} : vector<16x512xf32> to vector<16x128xf32>
    %200 = math.tanh %199 : vector<16x128xf32>
    %201 = vector.extract_strided_slice %186 {offsets = [0, 384], sizes = [16, 128], strides = [1, 1]} : vector<16x512xf32> to vector<16x128xf32>
    %202 = arith.negf %201 : vector<16x128xf32>
    %203 = math.exp %202 : vector<16x128xf32>
    %cst_56 = arith.constant 1.000000e+00 : f32
    %204 = vector.broadcast %cst_56 : f32 to vector<16x128xf32>
    %205 = arith.addf %204, %203 : vector<16x128xf32>
    %206 = arith.divf %204, %205 : vector<16x128xf32>
    %207 = arith.mulf %198, %174 : vector<16x128xf32>
    %208 = arith.mulf %192, %200 : vector<16x128xf32>
    %209 = arith.addf %207, %208 : vector<16x128xf32>
    %210 = math.tanh %209 : vector<16x128xf32>
    %211 = arith.mulf %206, %210 : vector<16x128xf32>
    %212 = vector.broadcast %180 : i32 to vector<16x1xi32>
    %213 = arith.cmpi slt, %212, %3 : vector<16x1xi32>
    %cst_57 = arith.constant 0.000000e+00 : f32
    %214 = vector.shape_cast %213 : vector<16x1xi1> to vector<16x1xi1>
    %215 = vector.broadcast %214 : vector<16x1xi1> to vector<16x128xi1>
    %216 = vector.broadcast %cst_57 : f32 to vector<16x128xf32>
    %217 = arith.select %215, %211, %216 : vector<16x128xi1>, vector<16x128xf32>
    %218 = arith.index_cast %179 : i32 to index
    %c0_58 = arith.constant 0 : index
    %c0_59 = arith.constant 0 : index
    %219 = vector.load %arg5[%218, %c0_58, %c0_59] : memref<8x16x128xf32, #tpu.memory_space<vmem>>, vector<1x16x128xf32>
    %220 = vector.shape_cast %219 : vector<1x16x128xf32> to vector<16x128xf32>
    %221 = vector.shape_cast %217 : vector<16x128xf32> to vector<1x16x128xf32>
    tpu.vector_store %arg5[%218, %c0_58, %c0_59], %221 {strides = array<i32>} : memref<8x16x128xf32, #tpu.memory_space<vmem>>, vector<1x16x128xf32>,
    %222 = vector.shape_cast %213 : vector<16x1xi1> to vector<16x1xi1>
    %223 = vector.broadcast %222 : vector<16x1xi1> to vector<16x128xi1>
    %224 = arith.select %223, %211, %171 : vector<16x128xi1>, vector<16x128xf32>
    %225 = vector.shape_cast %213 : vector<16x1xi1> to vector<16x1xi1>
    %226 = vector.broadcast %225 : vector<16x1xi1> to vector<16x128xi1>
    %227 = arith.select %226, %209, %174 : vector<16x128xi1>, vector<16x128xf32>
    %c4_i32 = arith.constant 4 : i32
    %c1_i32_60 = arith.constant 1 : i32
    %228 = arith.subi %c1_i32_60, %arg0 : i32
    %229 = arith.muli %228, %c4_i32 : i32
    %c7_i32_61 = arith.constant 7 : i32
    %230 = arith.subi %c7_i32_61, %c4_i32 : i32
    %231 = arith.muli %arg0, %230 : i32
    %232 = arith.addi %229, %231 : i32
    %233 = arith.addi %11, %232 : i32
    %c0_62 = arith.constant 0 : index
    %234 = arith.index_cast %232 : i32 to index
    %c0_63 = arith.constant 0 : index
    %c0_64 = arith.constant 0 : index
    %235 = vector.load %arg3[%c0_62, %234, %c0_63, %c0_64] : memref<1x8x16x512xf32, #tpu.memory_space<vmem>>, vector<1x1x16x512xf32>
    %236 = vector.shape_cast %235 : vector<1x1x16x512xf32> to vector<16x512xf32>
    %237 = arith.truncf %224 : vector<16x128xf32> to vector<16x128xbf16>
    %cst_65 = arith.constant dense<0.000000e+00> : vector<16x512xf32>
    %238 = tpu.matmul %237, %5, %cst_65 {dimension_numbers = #tpu.dot_dimension_numbers<[1], [0], [0], [1], [0, 0, 1, 1], [], []>} : vector<16x128xbf16>, vector<128x512xbf16>, vector<16x512xf32> -> vector<16x512xf32>
    %239 = arith.addf %236, %238 : vector<16x512xf32>
    %240 = vector.extract_strided_slice %239 {offsets = [0, 0], sizes = [16, 128], strides = [1, 1]} : vector<16x512xf32> to vector<16x128xf32>
    %241 = arith.negf %240 : vector<16x128xf32>
    %242 = math.exp %241 : vector<16x128xf32>
    %cst_66 = arith.constant 1.000000e+00 : f32
    %243 = vector.broadcast %cst_66 : f32 to vector<16x128xf32>
    %244 = arith.addf %243, %242 : vector<16x128xf32>
    %245 = arith.divf %243, %244 : vector<16x128xf32>
    %246 = vector.extract_strided_slice %239 {offsets = [0, 128], sizes = [16, 128], strides = [1, 1]} : vector<16x512xf32> to vector<16x128xf32>
    %247 = arith.negf %246 : vector<16x128xf32>
    %248 = math.exp %247 : vector<16x128xf32>
    %cst_67 = arith.constant 1.000000e+00 : f32
    %249 = vector.broadcast %cst_67 : f32 to vector<16x128xf32>
    %250 = arith.addf %249, %248 : vector<16x128xf32>
    %251 = arith.divf %249, %250 : vector<16x128xf32>
    %252 = vector.extract_strided_slice %239 {offsets = [0, 256], sizes = [16, 128], strides = [1, 1]} : vector<16x512xf32> to vector<16x128xf32>
    %253 = math.tanh %252 : vector<16x128xf32>
    %254 = vector.extract_strided_slice %239 {offsets = [0, 384], sizes = [16, 128], strides = [1, 1]} : vector<16x512xf32> to vector<16x128xf32>
    %255 = arith.negf %254 : vector<16x128xf32>
    %256 = math.exp %255 : vector<16x128xf32>
    %cst_68 = arith.constant 1.000000e+00 : f32
    %257 = vector.broadcast %cst_68 : f32 to vector<16x128xf32>
    %258 = arith.addf %257, %256 : vector<16x128xf32>
    %259 = arith.divf %257, %258 : vector<16x128xf32>
    %260 = arith.mulf %251, %227 : vector<16x128xf32>
    %261 = arith.mulf %245, %253 : vector<16x128xf32>
    %262 = arith.addf %260, %261 : vector<16x128xf32>
    %263 = math.tanh %262 : vector<16x128xf32>
    %264 = arith.mulf %259, %263 : vector<16x128xf32>
    %265 = vector.broadcast %233 : i32 to vector<16x1xi32>
    %266 = arith.cmpi slt, %265, %3 : vector<16x1xi32>
    %cst_69 = arith.constant 0.000000e+00 : f32
    %267 = vector.shape_cast %266 : vector<16x1xi1> to vector<16x1xi1>
    %268 = vector.broadcast %267 : vector<16x1xi1> to vector<16x128xi1>
    %269 = vector.broadcast %cst_69 : f32 to vector<16x128xf32>
    %270 = arith.select %268, %264, %269 : vector<16x128xi1>, vector<16x128xf32>
    %271 = arith.index_cast %232 : i32 to index
    %c0_70 = arith.constant 0 : index
    %c0_71 = arith.constant 0 : index
    %272 = vector.load %arg5[%271, %c0_70, %c0_71] : memref<8x16x128xf32, #tpu.memory_space<vmem>>, vector<1x16x128xf32>
    %273 = vector.shape_cast %272 : vector<1x16x128xf32> to vector<16x128xf32>
    %274 = vector.shape_cast %270 : vector<16x128xf32> to vector<1x16x128xf32>
    tpu.vector_store %arg5[%271, %c0_70, %c0_71], %274 {strides = array<i32>} : memref<8x16x128xf32, #tpu.memory_space<vmem>>, vector<1x16x128xf32>,
    %275 = vector.shape_cast %266 : vector<16x1xi1> to vector<16x1xi1>
    %276 = vector.broadcast %275 : vector<16x1xi1> to vector<16x128xi1>
    %277 = arith.select %276, %264, %224 : vector<16x128xi1>, vector<16x128xf32>
    %278 = vector.shape_cast %266 : vector<16x1xi1> to vector<16x1xi1>
    %279 = vector.broadcast %278 : vector<16x1xi1> to vector<16x128xi1>
    %280 = arith.select %279, %262, %227 : vector<16x128xi1>, vector<16x128xf32>
    %c5_i32 = arith.constant 5 : i32
    %c1_i32_72 = arith.constant 1 : i32
    %281 = arith.subi %c1_i32_72, %arg0 : i32
    %282 = arith.muli %281, %c5_i32 : i32
    %c7_i32_73 = arith.constant 7 : i32
    %283 = arith.subi %c7_i32_73, %c5_i32 : i32
    %284 = arith.muli %arg0, %283 : i32
    %285 = arith.addi %282, %284 : i32
    %286 = arith.addi %11, %285 : i32
    %c0_74 = arith.constant 0 : index
    %287 = arith.index_cast %285 : i32 to index
    %c0_75 = arith.constant 0 : index
    %c0_76 = arith.constant 0 : index
    %288 = vector.load %arg3[%c0_74, %287, %c0_75, %c0_76] : memref<1x8x16x512xf32, #tpu.memory_space<vmem>>, vector<1x1x16x512xf32>
    %289 = vector.shape_cast %288 : vector<1x1x16x512xf32> to vector<16x512xf32>
    %290 = arith.truncf %277 : vector<16x128xf32> to vector<16x128xbf16>
    %cst_77 = arith.constant dense<0.000000e+00> : vector<16x512xf32>
    %291 = tpu.matmul %290, %5, %cst_77 {dimension_numbers = #tpu.dot_dimension_numbers<[1], [0], [0], [1], [0, 0, 1, 1], [], []>} : vector<16x128xbf16>, vector<128x512xbf16>, vector<16x512xf32> -> vector<16x512xf32>
    %292 = arith.addf %289, %291 : vector<16x512xf32>
    %293 = vector.extract_strided_slice %292 {offsets = [0, 0], sizes = [16, 128], strides = [1, 1]} : vector<16x512xf32> to vector<16x128xf32>
    %294 = arith.negf %293 : vector<16x128xf32>
    %295 = math.exp %294 : vector<16x128xf32>
    %cst_78 = arith.constant 1.000000e+00 : f32
    %296 = vector.broadcast %cst_78 : f32 to vector<16x128xf32>
    %297 = arith.addf %296, %295 : vector<16x128xf32>
    %298 = arith.divf %296, %297 : vector<16x128xf32>
    %299 = vector.extract_strided_slice %292 {offsets = [0, 128], sizes = [16, 128], strides = [1, 1]} : vector<16x512xf32> to vector<16x128xf32>
    %300 = arith.negf %299 : vector<16x128xf32>
    %301 = math.exp %300 : vector<16x128xf32>
    %cst_79 = arith.constant 1.000000e+00 : f32
    %302 = vector.broadcast %cst_79 : f32 to vector<16x128xf32>
    %303 = arith.addf %302, %301 : vector<16x128xf32>
    %304 = arith.divf %302, %303 : vector<16x128xf32>
    %305 = vector.extract_strided_slice %292 {offsets = [0, 256], sizes = [16, 128], strides = [1, 1]} : vector<16x512xf32> to vector<16x128xf32>
    %306 = math.tanh %305 : vector<16x128xf32>
    %307 = vector.extract_strided_slice %292 {offsets = [0, 384], sizes = [16, 128], strides = [1, 1]} : vector<16x512xf32> to vector<16x128xf32>
    %308 = arith.negf %307 : vector<16x128xf32>
    %309 = math.exp %308 : vector<16x128xf32>
    %cst_80 = arith.constant 1.000000e+00 : f32
    %310 = vector.broadcast %cst_80 : f32 to vector<16x128xf32>
    %311 = arith.addf %310, %309 : vector<16x128xf32>
    %312 = arith.divf %310, %311 : vector<16x128xf32>
    %313 = arith.mulf %304, %280 : vector<16x128xf32>
    %314 = arith.mulf %298, %306 : vector<16x128xf32>
    %315 = arith.addf %313, %314 : vector<16x128xf32>
    %316 = math.tanh %315 : vector<16x128xf32>
    %317 = arith.mulf %312, %316 : vector<16x128xf32>
    %318 = vector.broadcast %286 : i32 to vector<16x1xi32>
    %319 = arith.cmpi slt, %318, %3 : vector<16x1xi32>
    %cst_81 = arith.constant 0.000000e+00 : f32
    %320 = vector.shape_cast %319 : vector<16x1xi1> to vector<16x1xi1>
    %321 = vector.broadcast %320 : vector<16x1xi1> to vector<16x128xi1>
    %322 = vector.broadcast %cst_81 : f32 to vector<16x128xf32>
    %323 = arith.select %321, %317, %322 : vector<16x128xi1>, vector<16x128xf32>
    %324 = arith.index_cast %285 : i32 to index
    %c0_82 = arith.constant 0 : index
    %c0_83 = arith.constant 0 : index
    %325 = vector.load %arg5[%324, %c0_82, %c0_83] : memref<8x16x128xf32, #tpu.memory_space<vmem>>, vector<1x16x128xf32>
    %326 = vector.shape_cast %325 : vector<1x16x128xf32> to vector<16x128xf32>
    %327 = vector.shape_cast %323 : vector<16x128xf32> to vector<1x16x128xf32>
    tpu.vector_store %arg5[%324, %c0_82, %c0_83], %327 {strides = array<i32>} : memref<8x16x128xf32, #tpu.memory_space<vmem>>, vector<1x16x128xf32>,
    %328 = vector.shape_cast %319 : vector<16x1xi1> to vector<16x1xi1>
    %329 = vector.broadcast %328 : vector<16x1xi1> to vector<16x128xi1>
    %330 = arith.select %329, %317, %277 : vector<16x128xi1>, vector<16x128xf32>
    %331 = vector.shape_cast %319 : vector<16x1xi1> to vector<16x1xi1>
    %332 = vector.broadcast %331 : vector<16x1xi1> to vector<16x128xi1>
    %333 = arith.select %332, %315, %280 : vector<16x128xi1>, vector<16x128xf32>
    %c6_i32 = arith.constant 6 : i32
    %c1_i32_84 = arith.constant 1 : i32
    %334 = arith.subi %c1_i32_84, %arg0 : i32
    %335 = arith.muli %334, %c6_i32 : i32
    %c7_i32_85 = arith.constant 7 : i32
    %336 = arith.subi %c7_i32_85, %c6_i32 : i32
    %337 = arith.muli %arg0, %336 : i32
    %338 = arith.addi %335, %337 : i32
    %339 = arith.addi %11, %338 : i32
    %c0_86 = arith.constant 0 : index
    %340 = arith.index_cast %338 : i32 to index
    %c0_87 = arith.constant 0 : index
    %c0_88 = arith.constant 0 : index
    %341 = vector.load %arg3[%c0_86, %340, %c0_87, %c0_88] : memref<1x8x16x512xf32, #tpu.memory_space<vmem>>, vector<1x1x16x512xf32>
    %342 = vector.shape_cast %341 : vector<1x1x16x512xf32> to vector<16x512xf32>
    %343 = arith.truncf %330 : vector<16x128xf32> to vector<16x128xbf16>
    %cst_89 = arith.constant dense<0.000000e+00> : vector<16x512xf32>
    %344 = tpu.matmul %343, %5, %cst_89 {dimension_numbers = #tpu.dot_dimension_numbers<[1], [0], [0], [1], [0, 0, 1, 1], [], []>} : vector<16x128xbf16>, vector<128x512xbf16>, vector<16x512xf32> -> vector<16x512xf32>
    %345 = arith.addf %342, %344 : vector<16x512xf32>
    %346 = vector.extract_strided_slice %345 {offsets = [0, 0], sizes = [16, 128], strides = [1, 1]} : vector<16x512xf32> to vector<16x128xf32>
    %347 = arith.negf %346 : vector<16x128xf32>
    %348 = math.exp %347 : vector<16x128xf32>
    %cst_90 = arith.constant 1.000000e+00 : f32
    %349 = vector.broadcast %cst_90 : f32 to vector<16x128xf32>
    %350 = arith.addf %349, %348 : vector<16x128xf32>
    %351 = arith.divf %349, %350 : vector<16x128xf32>
    %352 = vector.extract_strided_slice %345 {offsets = [0, 128], sizes = [16, 128], strides = [1, 1]} : vector<16x512xf32> to vector<16x128xf32>
    %353 = arith.negf %352 : vector<16x128xf32>
    %354 = math.exp %353 : vector<16x128xf32>
    %cst_91 = arith.constant 1.000000e+00 : f32
    %355 = vector.broadcast %cst_91 : f32 to vector<16x128xf32>
    %356 = arith.addf %355, %354 : vector<16x128xf32>
    %357 = arith.divf %355, %356 : vector<16x128xf32>
    %358 = vector.extract_strided_slice %345 {offsets = [0, 256], sizes = [16, 128], strides = [1, 1]} : vector<16x512xf32> to vector<16x128xf32>
    %359 = math.tanh %358 : vector<16x128xf32>
    %360 = vector.extract_strided_slice %345 {offsets = [0, 384], sizes = [16, 128], strides = [1, 1]} : vector<16x512xf32> to vector<16x128xf32>
    %361 = arith.negf %360 : vector<16x128xf32>
    %362 = math.exp %361 : vector<16x128xf32>
    %cst_92 = arith.constant 1.000000e+00 : f32
    %363 = vector.broadcast %cst_92 : f32 to vector<16x128xf32>
    %364 = arith.addf %363, %362 : vector<16x128xf32>
    %365 = arith.divf %363, %364 : vector<16x128xf32>
    %366 = arith.mulf %357, %333 : vector<16x128xf32>
    %367 = arith.mulf %351, %359 : vector<16x128xf32>
    %368 = arith.addf %366, %367 : vector<16x128xf32>
    %369 = math.tanh %368 : vector<16x128xf32>
    %370 = arith.mulf %365, %369 : vector<16x128xf32>
    %371 = vector.broadcast %339 : i32 to vector<16x1xi32>
    %372 = arith.cmpi slt, %371, %3 : vector<16x1xi32>
    %cst_93 = arith.constant 0.000000e+00 : f32
    %373 = vector.shape_cast %372 : vector<16x1xi1> to vector<16x1xi1>
    %374 = vector.broadcast %373 : vector<16x1xi1> to vector<16x128xi1>
    %375 = vector.broadcast %cst_93 : f32 to vector<16x128xf32>
    %376 = arith.select %374, %370, %375 : vector<16x128xi1>, vector<16x128xf32>
    %377 = arith.index_cast %338 : i32 to index
    %c0_94 = arith.constant 0 : index
    %c0_95 = arith.constant 0 : index
    %378 = vector.load %arg5[%377, %c0_94, %c0_95] : memref<8x16x128xf32, #tpu.memory_space<vmem>>, vector<1x16x128xf32>
    %379 = vector.shape_cast %378 : vector<1x16x128xf32> to vector<16x128xf32>
    %380 = vector.shape_cast %376 : vector<16x128xf32> to vector<1x16x128xf32>
    tpu.vector_store %arg5[%377, %c0_94, %c0_95], %380 {strides = array<i32>} : memref<8x16x128xf32, #tpu.memory_space<vmem>>, vector<1x16x128xf32>,
    %381 = vector.shape_cast %372 : vector<16x1xi1> to vector<16x1xi1>
    %382 = vector.broadcast %381 : vector<16x1xi1> to vector<16x128xi1>
    %383 = arith.select %382, %370, %330 : vector<16x128xi1>, vector<16x128xf32>
    %384 = vector.shape_cast %372 : vector<16x1xi1> to vector<16x1xi1>
    %385 = vector.broadcast %384 : vector<16x1xi1> to vector<16x128xi1>
    %386 = arith.select %385, %368, %333 : vector<16x128xi1>, vector<16x128xf32>
    %c7_i32_96 = arith.constant 7 : i32
    %c1_i32_97 = arith.constant 1 : i32
    %387 = arith.subi %c1_i32_97, %arg0 : i32
    %388 = arith.muli %387, %c7_i32_96 : i32
    %c7_i32_98 = arith.constant 7 : i32
    %389 = arith.subi %c7_i32_98, %c7_i32_96 : i32
    %390 = arith.muli %arg0, %389 : i32
    %391 = arith.addi %388, %390 : i32
    %392 = arith.addi %11, %391 : i32
    %c0_99 = arith.constant 0 : index
    %393 = arith.index_cast %391 : i32 to index
    %c0_100 = arith.constant 0 : index
    %c0_101 = arith.constant 0 : index
    %394 = vector.load %arg3[%c0_99, %393, %c0_100, %c0_101] : memref<1x8x16x512xf32, #tpu.memory_space<vmem>>, vector<1x1x16x512xf32>
    %395 = vector.shape_cast %394 : vector<1x1x16x512xf32> to vector<16x512xf32>
    %396 = arith.truncf %383 : vector<16x128xf32> to vector<16x128xbf16>
    %cst_102 = arith.constant dense<0.000000e+00> : vector<16x512xf32>
    %397 = tpu.matmul %396, %5, %cst_102 {dimension_numbers = #tpu.dot_dimension_numbers<[1], [0], [0], [1], [0, 0, 1, 1], [], []>} : vector<16x128xbf16>, vector<128x512xbf16>, vector<16x512xf32> -> vector<16x512xf32>
    %398 = arith.addf %395, %397 : vector<16x512xf32>
    %399 = vector.extract_strided_slice %398 {offsets = [0, 0], sizes = [16, 128], strides = [1, 1]} : vector<16x512xf32> to vector<16x128xf32>
    %400 = arith.negf %399 : vector<16x128xf32>
    %401 = math.exp %400 : vector<16x128xf32>
    %cst_103 = arith.constant 1.000000e+00 : f32
    %402 = vector.broadcast %cst_103 : f32 to vector<16x128xf32>
    %403 = arith.addf %402, %401 : vector<16x128xf32>
    %404 = arith.divf %402, %403 : vector<16x128xf32>
    %405 = vector.extract_strided_slice %398 {offsets = [0, 128], sizes = [16, 128], strides = [1, 1]} : vector<16x512xf32> to vector<16x128xf32>
    %406 = arith.negf %405 : vector<16x128xf32>
    %407 = math.exp %406 : vector<16x128xf32>
    %cst_104 = arith.constant 1.000000e+00 : f32
    %408 = vector.broadcast %cst_104 : f32 to vector<16x128xf32>
    %409 = arith.addf %408, %407 : vector<16x128xf32>
    %410 = arith.divf %408, %409 : vector<16x128xf32>
    %411 = vector.extract_strided_slice %398 {offsets = [0, 256], sizes = [16, 128], strides = [1, 1]} : vector<16x512xf32> to vector<16x128xf32>
    %412 = math.tanh %411 : vector<16x128xf32>
    %413 = vector.extract_strided_slice %398 {offsets = [0, 384], sizes = [16, 128], strides = [1, 1]} : vector<16x512xf32> to vector<16x128xf32>
    %414 = arith.negf %413 : vector<16x128xf32>
    %415 = math.exp %414 : vector<16x128xf32>
    %cst_105 = arith.constant 1.000000e+00 : f32
    %416 = vector.broadcast %cst_105 : f32 to vector<16x128xf32>
    %417 = arith.addf %416, %415 : vector<16x128xf32>
    %418 = arith.divf %416, %417 : vector<16x128xf32>
    %419 = arith.mulf %410, %386 : vector<16x128xf32>
    %420 = arith.mulf %404, %412 : vector<16x128xf32>
    %421 = arith.addf %419, %420 : vector<16x128xf32>
    %422 = math.tanh %421 : vector<16x128xf32>
    %423 = arith.mulf %418, %422 : vector<16x128xf32>
    %424 = vector.broadcast %392 : i32 to vector<16x1xi32>
    %425 = arith.cmpi slt, %424, %3 : vector<16x1xi32>
    %cst_106 = arith.constant 0.000000e+00 : f32
    %426 = vector.shape_cast %425 : vector<16x1xi1> to vector<16x1xi1>
    %427 = vector.broadcast %426 : vector<16x1xi1> to vector<16x128xi1>
    %428 = vector.broadcast %cst_106 : f32 to vector<16x128xf32>
    %429 = arith.select %427, %423, %428 : vector<16x128xi1>, vector<16x128xf32>
    %430 = arith.index_cast %391 : i32 to index
    %c0_107 = arith.constant 0 : index
    %c0_108 = arith.constant 0 : index
    %431 = vector.load %arg5[%430, %c0_107, %c0_108] : memref<8x16x128xf32, #tpu.memory_space<vmem>>, vector<1x16x128xf32>
    %432 = vector.shape_cast %431 : vector<1x16x128xf32> to vector<16x128xf32>
    %433 = vector.shape_cast %429 : vector<16x128xf32> to vector<1x16x128xf32>
    tpu.vector_store %arg5[%430, %c0_107, %c0_108], %433 {strides = array<i32>} : memref<8x16x128xf32, #tpu.memory_space<vmem>>, vector<1x16x128xf32>,
    %434 = vector.shape_cast %425 : vector<16x1xi1> to vector<16x1xi1>
    %435 = vector.broadcast %434 : vector<16x1xi1> to vector<16x128xi1>
    %436 = arith.select %435, %423, %383 : vector<16x128xi1>, vector<16x128xf32>
    %437 = vector.shape_cast %425 : vector<16x1xi1> to vector<16x1xi1>
    %438 = vector.broadcast %437 : vector<16x1xi1> to vector<16x128xi1>
    %439 = arith.select %438, %421, %386 : vector<16x128xi1>, vector<16x128xf32>
    %c8_i32_109 = arith.constant 8 : i32
    %c0_110 = arith.constant 0 : index
    %c0_111 = arith.constant 0 : index
    %c0_112 = arith.constant 0 : index
    %440 = vector.load %arg6[%c0_110, %c0_111, %c0_112] : memref<1x16x128xf32, #tpu.memory_space<vmem>>, vector<1x16x128xf32>
    %441 = vector.shape_cast %440 : vector<1x16x128xf32> to vector<16x128xf32>
    %442 = vector.shape_cast %436 : vector<16x128xf32> to vector<1x16x128xf32>
    tpu.vector_store %arg6[%c0_110, %c0_111, %c0_112], %442 {strides = array<i32>} : memref<1x16x128xf32, #tpu.memory_space<vmem>>, vector<1x16x128xf32>,
    %c0_113 = arith.constant 0 : index
    %c0_114 = arith.constant 0 : index
    %c0_115 = arith.constant 0 : index
    %443 = vector.load %arg7[%c0_113, %c0_114, %c0_115] : memref<1x16x128xf32, #tpu.memory_space<vmem>>, vector<1x16x128xf32>
    %444 = vector.shape_cast %443 : vector<1x16x128xf32> to vector<16x128xf32>
    %445 = vector.shape_cast %439 : vector<16x128xf32> to vector<1x16x128xf32>
    tpu.vector_store %arg7[%c0_113, %c0_114, %c0_115], %445 {strides = array<i32>} : memref<1x16x128xf32, #tpu.memory_space<vmem>>, vector<1x16x128xf32>,
    return
  }
  func.func @transform_0(%arg0: i32, %arg1: i32) -> (i32, i32) {
    %c0_i32 = arith.constant 0 : i32
    %c0_i32_0 = arith.constant 0 : i32
    %c0_i32_1 = arith.constant 0 : i32
    return %c0_i32, %c0_i32_0 : i32, i32
  }
  func.func @transform_1(%arg0: i32, %arg1: i32) -> (i32, i32, i32, i32) {
    %c1_i32 = arith.constant 1 : i32
    %0 = arith.subi %c1_i32, %arg0 : i32
    %1 = arith.muli %0, %arg1 : i32
    %c0_i32 = arith.constant 0 : i32
    %2 = arith.subi %c0_i32, %arg1 : i32
    %3 = arith.muli %arg0, %2 : i32
    %4 = arith.addi %1, %3 : i32
    %c0_i32_0 = arith.constant 0 : i32
    %c0_i32_1 = arith.constant 0 : i32
    %c0_i32_2 = arith.constant 0 : i32
    return %arg0, %4, %c0_i32_0, %c0_i32_1 : i32, i32, i32, i32
  }
  func.func @transform_2(%arg0: i32, %arg1: i32) -> (i32, i32, i32) {
    %c0_i32 = arith.constant 0 : i32
    %c0_i32_0 = arith.constant 0 : i32
    %c0_i32_1 = arith.constant 0 : i32
    return %arg0, %c0_i32, %c0_i32_0 : i32, i32, i32
  }
  func.func @transform_3(%arg0: i32, %arg1: i32) -> (i32, i32, i32) {
    %c1_i32 = arith.constant 1 : i32
    %0 = arith.subi %c1_i32, %arg0 : i32
    %1 = arith.muli %0, %arg1 : i32
    %c0_i32 = arith.constant 0 : i32
    %2 = arith.subi %c0_i32, %arg1 : i32
    %3 = arith.muli %arg0, %2 : i32
    %4 = arith.addi %1, %3 : i32
    %c0_i32_0 = arith.constant 0 : i32
    %c0_i32_1 = arith.constant 0 : i32
    return %4, %c0_i32_0, %arg0 : i32, i32, i32
  }
  func.func @transform_4(%arg0: i32, %arg1: i32) -> (i32, i32, i32) {
    %c0_i32 = arith.constant 0 : i32
    %c0_i32_0 = arith.constant 0 : i32
    %c0_i32_1 = arith.constant 0 : i32
    return %arg0, %c0_i32, %c0_i32_0 : i32, i32, i32
  }
  func.func @transform_5(%arg0: i32, %arg1: i32) -> (i32, i32, i32) {
    %c0_i32 = arith.constant 0 : i32
    %c0_i32_0 = arith.constant 0 : i32
    %c0_i32_1 = arith.constant 0 : i32
    return %arg0, %c0_i32, %c0_i32_0 : i32, i32, i32
  }
}

</mosaic_0001>

<llo_original>
// kernel: encoder_forward.2
$region0: #{encoder_forward.2}
  #allocation0 [shape = 'u32[]', space=smem, size = 0x4, offset = 0x4, fixed_abs, tag = 'smem constant byte address 0x4 - core index']
  #allocation1 [shape = 'u32[72,128]{1,0:T(1,128)}', space=vmem, size = 0x9000, scoped, tag = 'internal scratch']
  %s0 = inlined_call_operand.vmem [shape: bf16[8,16,256], index: 0, kind: input, shape index: {}]
  %s1 = inlined_call_operand.vmem [shape: bf16[256,1024], index: 1, kind: input, shape index: {}]
  %s2 = inlined_call_operand.vmem [shape: f32[1,1024], index: 2, kind: input, shape index: {}]
  %s3 = inlined_call_operand.vmem [shape: f32[2,8,16,512], index: 3, kind: output, shape index: {}]
  %s4 = sld [smem:[#allocation0]]
  $region22: #{encoder_forward.2} parent=0
    _
  %s6 = ssub.s32 1, %s4
  %s7 = scalar_select 0, %s6, %s4
  // Predicated region
  $region2: #{encoder_forward.2} parent=0 // pred_check
    _
  $region3: #{encoder_forward.2} parent=0 // pred_check_branch
    %9 = sbr.rel (0) target = $region5
  $region4: #{encoder_forward.2} parent=0 // pred_region
    _
  $region5: #{encoder_forward.2} parent=0 // pred_fallthru
    _
  // Predicated region
  $region6: #{encoder_forward.2} parent=0 // pred_check
    _
  $region7: #{encoder_forward.2} parent=0 // pred_check_branch
    %11 = sbr.rel (0) target = $region9
  $region8: #{encoder_forward.2} parent=0 // pred_region
    _
  $region9: #{encoder_forward.2} parent=0 // pred_fallthru
    _
  // Predicated region
  $region10: #{encoder_forward.2} parent=0 // pred_check
    _
  $region11: #{encoder_forward.2} parent=0 // pred_check_branch
    %13 = sbr.rel (0) target = $region13
  $region12: #{encoder_forward.2} parent=0 // pred_region
    _
  $region13: #{encoder_forward.2} parent=0 // pred_fallthru
    _
  %v14 = vld [vmem:[%s0] sm:$0xff]
  %v15 = vld [vmem:[%s0 + $0x8] sm:$0xff]
  %v16 = vld [vmem:[%s0 + $0x10] sm:$0xff]
  %v17 = vld [vmem:[%s0 + $0x18] sm:$0xff]
  %v18 = vld [vmem:[%s0 + $0x20] sm:$0xff]
  %v19 = vld [vmem:[%s0 + $0x28] sm:$0xff]
  %v20 = vld [vmem:[%s0 + $0x30] sm:$0xff]
  %v21 = vld [vmem:[%s0 + $0x38] sm:$0xff]
  %v22 = vld [vmem:[%s0 + $0x40] sm:$0xff]
  %v23 = vld [vmem:[%s0 + $0x48] sm:$0xff]
  %v24 = vld [vmem:[%s0 + $0x50] sm:$0xff]
  %v25 = vld [vmem:[%s0 + $0x58] sm:$0xff]
  %v26 = vld [vmem:[%s0 + $0x60] sm:$0xff]
  %v27 = vld [vmem:[%s0 + $0x68] sm:$0xff]
  %v28 = vld [vmem:[%s0 + $0x70] sm:$0xff]
  %v29 = vld [vmem:[%s0 + $0x78] sm:$0xff]
  %v30 = vld [vmem:[%s1] sm:$0xff]
  %v31 = vld [vmem:[%s1 + $0x8] sm:$0xff]
  %v32 = vld [vmem:[%s1 + $0x10] sm:$0xff]
  %v33 = vld [vmem:[%s1 + $0x18] sm:$0xff]
  %v34 = vld [vmem:[%s1 + $0x20] sm:$0xff]
  %v35 = vld [vmem:[%s1 + $0x28] sm:$0xff]
  %v36 = vld [vmem:[%s1 + $0x30] sm:$0xff]
  %v37 = vld [vmem:[%s1 + $0x38] sm:$0xff]
  %v38 = vld [vmem:[%s1 + $0x40] sm:$0xff]
  %v39 = vld [vmem:[%s1 + $0x48] sm:$0xff]
  %v40 = vld [vmem:[%s1 + $0x50] sm:$0xff]
  %v41 = vld [vmem:[%s1 + $0x58] sm:$0xff]
  %v42 = vld [vmem:[%s1 + $0x60] sm:$0xff]
  %v43 = vld [vmem:[%s1 + $0x68] sm:$0xff]
  %v44 = vld [vmem:[%s1 + $0x70] sm:$0xff]
  %v45 = vld [vmem:[%s1 + $0x78] sm:$0xff]
  %v46 = vld [vmem:[%s1 + $0x80] sm:$0xff]
  %v47 = vld [vmem:[%s1 + $0x88] sm:$0xff]
  %v48 = vld [vmem:[%s1 + $0x90] sm:$0xff]
  %v49 = vld [vmem:[%s1 + $0x98] sm:$0xff]
  %v50 = vld [vmem:[%s1 + $0xa0] sm:$0xff]
  %v51 = vld [vmem:[%s1 + $0xa8] sm:$0xff]
  %v52 = vld [vmem:[%s1 + $0xb0] sm:$0xff]
  %v53 = vld [vmem:[%s1 + $0xb8] sm:$0xff]
  %v54 = vld [vmem:[%s1 + $0xc0] sm:$0xff]
  %v55 = vld [vmem:[%s1 + $0xc8] sm:$0xff]
  %v56 = vld [vmem:[%s1 + $0xd0] sm:$0xff]
  %v57 = vld [vmem:[%s1 + $0xd8] sm:$0xff]
  %v58 = vld [vmem:[%s1 + $0xe0] sm:$0xff]
  %v59 = vld [vmem:[%s1 + $0xe8] sm:$0xff]
  %v60 = vld [vmem:[%s1 + $0xf0] sm:$0xff]
  %v61 = vld [vmem:[%s1 + $0xf8] sm:$0xff]
  %v62 = vld [vmem:[%s1 + $0x100] sm:$0xff]
  %v63 = vld [vmem:[%s1 + $0x108] sm:$0xff]
  %v64 = vld [vmem:[%s1 + $0x110] sm:$0xff]
  %v65 = vld [vmem:[%s1 + $0x118] sm:$0xff]
  %v66 = vld [vmem:[%s1 + $0x120] sm:$0xff]
  %v67 = vld [vmem:[%s1 + $0x128] sm:$0xff]
  %v68 = vld [vmem:[%s1 + $0x130] sm:$0xff]
  %v69 = vld [vmem:[%s1 + $0x138] sm:$0xff]
  %v70 = vld [vmem:[%s1 + $0x140] sm:$0xff]
  %v71 = vld [vmem:[%s1 + $0x148] sm:$0xff]
  %v72 = vld [vmem:[%s1 + $0x150] sm:$0xff]
  %v73 = vld [vmem:[%s1 + $0x158] sm:$0xff]
  %v74 = vld [vmem:[%s1 + $0x160] sm:$0xff]
  %v75 = vld [vmem:[%s1 + $0x168] sm:$0xff]
  %v76 = vld [vmem:[%s1 + $0x170] sm:$0xff]
  %v77 = vld [vmem:[%s1 + $0x178] sm:$0xff]
  %v78 = vld [vmem:[%s1 + $0x180] sm:$0xff]
  %v79 = vld [vmem:[%s1 + $0x188] sm:$0xff]
  %v80 = vld [vmem:[%s1 + $0x190] sm:$0xff]
  %v81 = vld [vmem:[%s1 + $0x198] sm:$0xff]
  %v82 = vld [vmem:[%s1 + $0x1a0] sm:$0xff]
  %v83 = vld [vmem:[%s1 + $0x1a8] sm:$0xff]
  %v84 = vld [vmem:[%s1 + $0x1b0] sm:$0xff]
  %v85 = vld [vmem:[%s1 + $0x1b8] sm:$0xff]
  %v86 = vld [vmem:[%s1 + $0x1c0] sm:$0xff]
  %v87 = vld [vmem:[%s1 + $0x1c8] sm:$0xff]
  %v88 = vld [vmem:[%s1 + $0x1d0] sm:$0xff]
  %v89 = vld [vmem:[%s1 + $0x1d8] sm:$0xff]
  %v90 = vld [vmem:[%s1 + $0x1e0] sm:$0xff]
  %v91 = vld [vmem:[%s1 + $0x1e8] sm:$0xff]
  %v92 = vld [vmem:[%s1 + $0x1f0] sm:$0xff]
  %v93 = vld [vmem:[%s1 + $0x1f8] sm:$0xff]
  %v94 = vld [vmem:[%s1 + $0x200] sm:$0xff]
  %v95 = vld [vmem:[%s1 + $0x208] sm:$0xff]
  %v96 = vld [vmem:[%s1 + $0x210] sm:$0xff]
  %v97 = vld [vmem:[%s1 + $0x218] sm:$0xff]
  %v98 = vld [vmem:[%s1 + $0x220] sm:$0xff]
  %v99 = vld [vmem:[%s1 + $0x228] sm:$0xff]
  %v100 = vld [vmem:[%s1 + $0x230] sm:$0xff]
  %v101 = vld [vmem:[%s1 + $0x238] sm:$0xff]
  %v102 = vld [vmem:[%s1 + $0x240] sm:$0xff]
  %v103 = vld [vmem:[%s1 + $0x248] sm:$0xff]
  %v104 = vld [vmem:[%s1 + $0x250] sm:$0xff]
  %v105 = vld [vmem:[%s1 + $0x258] sm:$0xff]
  %v106 = vld [vmem:[%s1 + $0x260] sm:$0xff]
  %v107 = vld [vmem:[%s1 + $0x268] sm:$0xff]
  %v108 = vld [vmem:[%s1 + $0x270] sm:$0xff]
  %v109 = vld [vmem:[%s1 + $0x278] sm:$0xff]
  %v110 = vld [vmem:[%s1 + $0x280] sm:$0xff]
  %v111 = vld [vmem:[%s1 + $0x288] sm:$0xff]
  %v112 = vld [vmem:[%s1 + $0x290] sm:$0xff]
  %v113 = vld [vmem:[%s1 + $0x298] sm:$0xff]
  %v114 = vld [vmem:[%s1 + $0x2a0] sm:$0xff]
  %v115 = vld [vmem:[%s1 + $0x2a8] sm:$0xff]
  %v116 = vld [vmem:[%s1 + $0x2b0] sm:$0xff]
  %v117 = vld [vmem:[%s1 + $0x2b8] sm:$0xff]
  %v118 = vld [vmem:[%s1 + $0x2c0] sm:$0xff]
  %v119 = vld [vmem:[%s1 + $0x2c8] sm:$0xff]
  %v120 = vld [vmem:[%s1 + $0x2d0] sm:$0xff]
  %v121 = vld [vmem:[%s1 + $0x2d8] sm:$0xff]
  %v122 = vld [vmem:[%s1 + $0x2e0] sm:$0xff]
  %v123 = vld [vmem:[%s1 + $0x2e8] sm:$0xff]
  %v124 = vld [vmem:[%s1 + $0x2f0] sm:$0xff]
  %v125 = vld [vmem:[%s1 + $0x2f8] sm:$0xff]
  %v126 = vld [vmem:[%s1 + $0x300] sm:$0xff]
  %v127 = vld [vmem:[%s1 + $0x308] sm:$0xff]
  %v128 = vld [vmem:[%s1 + $0x310] sm:$0xff]
  %v129 = vld [vmem:[%s1 + $0x318] sm:$0xff]
  %v130 = vld [vmem:[%s1 + $0x320] sm:$0xff]
  %v131 = vld [vmem:[%s1 + $0x328] sm:$0xff]
  %v132 = vld [vmem:[%s1 + $0x330] sm:$0xff]
  %v133 = vld [vmem:[%s1 + $0x338] sm:$0xff]
  %v134 = vld [vmem:[%s1 + $0x340] sm:$0xff]
  %v135 = vld [vmem:[%s1 + $0x348] sm:$0xff]
  %v136 = vld [vmem:[%s1 + $0x350] sm:$0xff]
  %v137 = vld [vmem:[%s1 + $0x358] sm:$0xff]
  %v138 = vld [vmem:[%s1 + $0x360] sm:$0xff]
  %v139 = vld [vmem:[%s1 + $0x368] sm:$0xff]
  %v140 = vld [vmem:[%s1 + $0x370] sm:$0xff]
  %v141 = vld [vmem:[%s1 + $0x378] sm:$0xff]
  %v142 = vld [vmem:[%s1 + $0x380] sm:$0xff]
  %v143 = vld [vmem:[%s1 + $0x388] sm:$0xff]
  %v144 = vld [vmem:[%s1 + $0x390] sm:$0xff]
  %v145 = vld [vmem:[%s1 + $0x398] sm:$0xff]
  %v146 = vld [vmem:[%s1 + $0x3a0] sm:$0xff]
  %v147 = vld [vmem:[%s1 + $0x3a8] sm:$0xff]
  %v148 = vld [vmem:[%s1 + $0x3b0] sm:$0xff]
  %v149 = vld [vmem:[%s1 + $0x3b8] sm:$0xff]
  %v150 = vld [vmem:[%s1 + $0x3c0] sm:$0xff]
  %v151 = vld [vmem:[%s1 + $0x3c8] sm:$0xff]
  %v152 = vld [vmem:[%s1 + $0x3d0] sm:$0xff]
  %v153 = vld [vmem:[%s1 + $0x3d8] sm:$0xff]
  %v154 = vld [vmem:[%s1 + $0x3e0] sm:$0xff]
  %v155 = vld [vmem:[%s1 + $0x3e8] sm:$0xff]
  %v156 = vld [vmem:[%s1 + $0x3f0] sm:$0xff]
  %v157 = vld [vmem:[%s1 + $0x3f8] sm:$0xff]
  %v158 = vld [vmem:[%s2] sm:$0xff]
  %v160 = vperm.slane %v158, 0
  %v161 = vperm.slane %v158, 1
  %v162 = vperm.slane %v158, 2
  %v163 = vperm.slane %v158, 3
  %v164 = vperm.slane %v158, 4
  %v165 = vperm.slane %v158, 5
  %v166 = vperm.slane %v158, 6
  %v167 = vperm.slane %v158, 7
  %v192 = vunpack.c.l.b16 %v14
  %v193 = vunpack.c.h.b16 %v14
  %v194 = vunpack.c.l.b16 %v15
  %v195 = vunpack.c.h.b16 %v15
  %v196 = vunpack.c.l.b16 %v16
  %v197 = vunpack.c.h.b16 %v16
  %v198 = vunpack.c.l.b16 %v17
  %v199 = vunpack.c.h.b16 %v17
  %v200 = vunpack.c.l.b16 %v18
  %v201 = vunpack.c.h.b16 %v18
  %v202 = vunpack.c.l.b16 %v19
  %v203 = vunpack.c.h.b16 %v19
  %v204 = vunpack.c.l.b16 %v20
  %v205 = vunpack.c.h.b16 %v20
  %v206 = vunpack.c.l.b16 %v21
  %v207 = vunpack.c.h.b16 %v21
  %v208 = vunpack.c.l.b16 %v22
  %v209 = vunpack.c.h.b16 %v22
  %v210 = vunpack.c.l.b16 %v23
  %v211 = vunpack.c.h.b16 %v23
  %v212 = vunpack.c.l.b16 %v24
  %v213 = vunpack.c.h.b16 %v24
  %v214 = vunpack.c.l.b16 %v25
  %v215 = vunpack.c.h.b16 %v25
  %v216 = vunpack.c.l.b16 %v26
  %v217 = vunpack.c.h.b16 %v26
  %v218 = vunpack.c.l.b16 %v27
  %v219 = vunpack.c.h.b16 %v27
  %v220 = vunpack.c.l.b16 %v28
  %v221 = vunpack.c.h.b16 %v28
  %v222 = vunpack.c.l.b16 %v29
  %v223 = vunpack.c.h.b16 %v29
  %v224 = vpack.c.b16 %v194, %v192
  %v225 = vpack.c.b16 %v195, %v193
  %v226 = vpack.c.b16 %v198, %v196
  %v227 = vpack.c.b16 %v199, %v197
  %v228 = vpack.c.b16 %v202, %v200
  %v229 = vpack.c.b16 %v203, %v201
  %v230 = vpack.c.b16 %v206, %v204
  %v231 = vpack.c.b16 %v207, %v205
  %v232 = vpack.c.b16 %v210, %v208
  %v233 = vpack.c.b16 %v211, %v209
  %v234 = vpack.c.b16 %v214, %v212
  %v235 = vpack.c.b16 %v215, %v213
  %v236 = vpack.c.b16 %v218, %v216
  %v237 = vpack.c.b16 %v219, %v217
  %v238 = vpack.c.b16 %v222, %v220
  %v239 = vpack.c.b16 %v223, %v221
  %v384 = vunpack.c.l.b16 %v30
  %v385 = vunpack.c.h.b16 %v30
  %v386 = vunpack.c.l.b16 %v31
  %v387 = vunpack.c.h.b16 %v31
  %v388 = vunpack.c.l.b16 %v32
  %v389 = vunpack.c.h.b16 %v32
  %v390 = vunpack.c.l.b16 %v33
  %v391 = vunpack.c.h.b16 %v33
  %v392 = vunpack.c.l.b16 %v34
  %v393 = vunpack.c.h.b16 %v34
  %v394 = vunpack.c.l.b16 %v35
  %v395 = vunpack.c.h.b16 %v35
  %v396 = vunpack.c.l.b16 %v36
  %v397 = vunpack.c.h.b16 %v36
  %v398 = vunpack.c.l.b16 %v37
  %v399 = vunpack.c.h.b16 %v37
  %v400 = vunpack.c.l.b16 %v38
  %v401 = vunpack.c.h.b16 %v38
  %v402 = vunpack.c.l.b16 %v39
  %v403 = vunpack.c.h.b16 %v39
  %v404 = vunpack.c.l.b16 %v40
  %v405 = vunpack.c.h.b16 %v40
  %v406 = vunpack.c.l.b16 %v41
  %v407 = vunpack.c.h.b16 %v41
  %v408 = vunpack.c.l.b16 %v42
  %v409 = vunpack.c.h.b16 %v42
  %v410 = vunpack.c.l.b16 %v43
  %v411 = vunpack.c.h.b16 %v43
  %v412 = vunpack.c.l.b16 %v44
  %v413 = vunpack.c.h.b16 %v44
  %v414 = vunpack.c.l.b16 %v45
  %v415 = vunpack.c.h.b16 %v45
  %v416 = vunpack.c.l.b16 %v46
  %v417 = vunpack.c.h.b16 %v46
  %v418 = vunpack.c.l.b16 %v47
  %v419 = vunpack.c.h.b16 %v47
  %v420 = vunpack.c.l.b16 %v48
  %v421 = vunpack.c.h.b16 %v48
  %v422 = vunpack.c.l.b16 %v49
  %v423 = vunpack.c.h.b16 %v49
  %v424 = vunpack.c.l.b16 %v50
  %v425 = vunpack.c.h.b16 %v50
  %v426 = vunpack.c.l.b16 %v51
  %v427 = vunpack.c.h.b16 %v51
  %v428 = vunpack.c.l.b16 %v52
  %v429 = vunpack.c.h.b16 %v52
  %v430 = vunpack.c.l.b16 %v53
  %v431 = vunpack.c.h.b16 %v53
  %v432 = vunpack.c.l.b16 %v54
  %v433 = vunpack.c.h.b16 %v54
  %v434 = vunpack.c.l.b16 %v55
  %v435 = vunpack.c.h.b16 %v55
  %v436 = vunpack.c.l.b16 %v56
  %v437 = vunpack.c.h.b16 %v56
  %v438 = vunpack.c.l.b16 %v57
  %v439 = vunpack.c.h.b16 %v57
  %v440 = vunpack.c.l.b16 %v58
  %v441 = vunpack.c.h.b16 %v58
  %v442 = vunpack.c.l.b16 %v59
  %v443 = vunpack.c.h.b16 %v59
  %v444 = vunpack.c.l.b16 %v60
  %v445 = vunpack.c.h.b16 %v60
  %v446 = vunpack.c.l.b16 %v61
  %v447 = vunpack.c.h.b16 %v61
  %v448 = vunpack.c.l.b16 %v62
  %v449 = vunpack.c.h.b16 %v62
  %v450 = vunpack.c.l.b16 %v63
  %v451 = vunpack.c.h.b16 %v63
  %v452 = vunpack.c.l.b16 %v64
  %v453 = vunpack.c.h.b16 %v64
  %v454 = vunpack.c.l.b16 %v65
  %v455 = vunpack.c.h.b16 %v65
  %v456 = vunpack.c.l.b16 %v66
  %v457 = vunpack.c.h.b16 %v66
  %v458 = vunpack.c.l.b16 %v67
  %v459 = vunpack.c.h.b16 %v67
  %v460 = vunpack.c.l.b16 %v68
  %v461 = vunpack.c.h.b16 %v68
  %v462 = vunpack.c.l.b16 %v69
  %v463 = vunpack.c.h.b16 %v69
  %v464 = vunpack.c.l.b16 %v70
  %v465 = vunpack.c.h.b16 %v70
  %v466 = vunpack.c.l.b16 %v71
  %v467 = vunpack.c.h.b16 %v71
  %v468 = vunpack.c.l.b16 %v72
  %v469 = vunpack.c.h.b16 %v72
  %v470 = vunpack.c.l.b16 %v73
  %v471 = vunpack.c.h.b16 %v73
  %v472 = vunpack.c.l.b16 %v74
  %v473 = vunpack.c.h.b16 %v74
  %v474 = vunpack.c.l.b16 %v75
  %v475 = vunpack.c.h.b16 %v75
  %v476 = vunpack.c.l.b16 %v76
  %v477 = vunpack.c.h.b16 %v76
  %v478 = vunpack.c.l.b16 %v77
  %v479 = vunpack.c.h.b16 %v77
  %v480 = vunpack.c.l.b16 %v78
  %v481 = vunpack.c.h.b16 %v78
  %v482 = vunpack.c.l.b16 %v79
  %v483 = vunpack.c.h.b16 %v79
  %v484 = vunpack.c.l.b16 %v80
  %v485 = vunpack.c.h.b16 %v80
  %v486 = vunpack.c.l.b16 %v81
  %v487 = vunpack.c.h.b16 %v81
  %v488 = vunpack.c.l.b16 %v82
  %v489 = vunpack.c.h.b16 %v82
  %v490 = vunpack.c.l.b16 %v83
  %v491 = vunpack.c.h.b16 %v83
  %v492 = vunpack.c.l.b16 %v84
  %v493 = vunpack.c.h.b16 %v84
  %v494 = vunpack.c.l.b16 %v85
  %v495 = vunpack.c.h.b16 %v85
  %v496 = vunpack.c.l.b16 %v86
  %v497 = vunpack.c.h.b16 %v86
  %v498 = vunpack.c.l.b16 %v87
  %v499 = vunpack.c.h.b16 %v87
  %v500 = vunpack.c.l.b16 %v88
  %v501 = vunpack.c.h.b16 %v88
  %v502 = vunpack.c.l.b16 %v89
  %v503 = vunpack.c.h.b16 %v89
  %v504 = vunpack.c.l.b16 %v90
  %v505 = vunpack.c.h.b16 %v90
  %v506 = vunpack.c.l.b16 %v91
  %v507 = vunpack.c.h.b16 %v91
  %v508 = vunpack.c.l.b16 %v92
  %v509 = vunpack.c.h.b16 %v92
  %v510 = vunpack.c.l.b16 %v93
  %v511 = vunpack.c.h.b16 %v93
  %v512 = vunpack.c.l.b16 %v94
  %v513 = vunpack.c.h.b16 %v94
  %v514 = vunpack.c.l.b16 %v95
  %v515 = vunpack.c.h.b16 %v95
  %v516 = vunpack.c.l.b16 %v96
  %v517 = vunpack.c.h.b16 %v96
  %v518 = vunpack.c.l.b16 %v97
  %v519 = vunpack.c.h.b16 %v97
  %v520 = vunpack.c.l.b16 %v98
  %v521 = vunpack.c.h.b16 %v98
  %v522 = vunpack.c.l.b16 %v99
  %v523 = vunpack.c.h.b16 %v99
  %v524 = vunpack.c.l.b16 %v100
  %v525 = vunpack.c.h.b16 %v100
  %v526 = vunpack.c.l.b16 %v101
  %v527 = vunpack.c.h.b16 %v101
  %v528 = vunpack.c.l.b16 %v102
  %v529 = vunpack.c.h.b16 %v102
  %v530 = vunpack.c.l.b16 %v103
  %v531 = vunpack.c.h.b16 %v103
  %v532 = vunpack.c.l.b16 %v104
  %v533 = vunpack.c.h.b16 %v104
  %v534 = vunpack.c.l.b16 %v105
  %v535 = vunpack.c.h.b16 %v105
  %v536 = vunpack.c.l.b16 %v106
  %v537 = vunpack.c.h.b16 %v106
  %v538 = vunpack.c.l.b16 %v107
  %v539 = vunpack.c.h.b16 %v107
  %v540 = vunpack.c.l.b16 %v108
  %v541 = vunpack.c.h.b16 %v108
  %v542 = vunpack.c.l.b16 %v109
  %v543 = vunpack.c.h.b16 %v109
  %v544 = vunpack.c.l.b16 %v110
  %v545 = vunpack.c.h.b16 %v110
  %v546 = vunpack.c.l.b16 %v111
  %v547 = vunpack.c.h.b16 %v111
  %v548 = vunpack.c.l.b16 %v112
  %v549 = vunpack.c.h.b16 %v112
  %v550 = vunpack.c.l.b16 %v113
  %v551 = vunpack.c.h.b16 %v113
  %v552 = vunpack.c.l.b16 %v114
  %v553 = vunpack.c.h.b16 %v114
  %v554 = vunpack.c.l.b16 %v115
  %v555 = vunpack.c.h.b16 %v115
  %v556 = vunpack.c.l.b16 %v116
  %v557 = vunpack.c.h.b16 %v116
  %v558 = vunpack.c.l.b16 %v117
  %v559 = vunpack.c.h.b16 %v117
  %v560 = vunpack.c.l.b16 %v118
  %v561 = vunpack.c.h.b16 %v118
  %v562 = vunpack.c.l.b16 %v119
  %v563 = vunpack.c.h.b16 %v119
  %v564 = vunpack.c.l.b16 %v120
  %v565 = vunpack.c.h.b16 %v120
  %v566 = vunpack.c.l.b16 %v121
  %v567 = vunpack.c.h.b16 %v121
  %v568 = vunpack.c.l.b16 %v122
  %v569 = vunpack.c.h.b16 %v122
  %v570 = vunpack.c.l.b16 %v123
  %v571 = vunpack.c.h.b16 %v123
  %v572 = vunpack.c.l.b16 %v124
  %v573 = vunpack.c.h.b16 %v124
  %v574 = vunpack.c.l.b16 %v125
  %v575 = vunpack.c.h.b16 %v125
  %v576 = vunpack.c.l.b16 %v126
  %v577 = vunpack.c.h.b16 %v126
  %v578 = vunpack.c.l.b16 %v127
  %v579 = vunpack.c.h.b16 %v127
  %v580 = vunpack.c.l.b16 %v128
  %v581 = vunpack.c.h.b16 %v128
  %v582 = vunpack.c.l.b16 %v129
  %v583 = vunpack.c.h.b16 %v129
  %v584 = vunpack.c.l.b16 %v130
  %v585 = vunpack.c.h.b16 %v130
  %v586 = vunpack.c.l.b16 %v131
  %v587 = vunpack.c.h.b16 %v131
  %v588 = vunpack.c.l.b16 %v132
  %v589 = vunpack.c.h.b16 %v132
  %v590 = vunpack.c.l.b16 %v133
  %v591 = vunpack.c.h.b16 %v133
  %v592 = vunpack.c.l.b16 %v134
  %v593 = vunpack.c.h.b16 %v134
  %v594 = vunpack.c.l.b16 %v135
  %v595 = vunpack.c.h.b16 %v135
  %v596 = vunpack.c.l.b16 %v136
  %v597 = vunpack.c.h.b16 %v136
  %v598 = vunpack.c.l.b16 %v137
  %v599 = vunpack.c.h.b16 %v137
  %v600 = vunpack.c.l.b16 %v138
  %v601 = vunpack.c.h.b16 %v138
  %v602 = vunpack.c.l.b16 %v139
  %v603 = vunpack.c.h.b16 %v139
  %v604 = vunpack.c.l.b16 %v140
  %v605 = vunpack.c.h.b16 %v140
  %v606 = vunpack.c.l.b16 %v141
  %v607 = vunpack.c.h.b16 %v141
  %v608 = vunpack.c.l.b16 %v142
  %v609 = vunpack.c.h.b16 %v142
  %v610 = vunpack.c.l.b16 %v143
  %v611 = vunpack.c.h.b16 %v143
  %v612 = vunpack.c.l.b16 %v144
  %v613 = vunpack.c.h.b16 %v144
  %v614 = vunpack.c.l.b16 %v145
  %v615 = vunpack.c.h.b16 %v145
  %v616 = vunpack.c.l.b16 %v146
  %v617 = vunpack.c.h.b16 %v146
  %v618 = vunpack.c.l.b16 %v147
  %v619 = vunpack.c.h.b16 %v147
  %v620 = vunpack.c.l.b16 %v148
  %v621 = vunpack.c.h.b16 %v148
  %v622 = vunpack.c.l.b16 %v149
  %v623 = vunpack.c.h.b16 %v149
  %v624 = vunpack.c.l.b16 %v150
  %v625 = vunpack.c.h.b16 %v150
  %v626 = vunpack.c.l.b16 %v151
  %v627 = vunpack.c.h.b16 %v151
  %v628 = vunpack.c.l.b16 %v152
  %v629 = vunpack.c.h.b16 %v152
  %v630 = vunpack.c.l.b16 %v153
  %v631 = vunpack.c.h.b16 %v153
  %v632 = vunpack.c.l.b16 %v154
  %v633 = vunpack.c.h.b16 %v154
  %v634 = vunpack.c.l.b16 %v155
  %v635 = vunpack.c.h.b16 %v155
  %v636 = vunpack.c.l.b16 %v156
  %v637 = vunpack.c.h.b16 %v156
  %v638 = vunpack.c.l.b16 %v157
  %v639 = vunpack.c.h.b16 %v157
  %v640 = vpack.c.b16 %v392, %v384
  %v641 = vpack.c.b16 %v393, %v385
  %v642 = vpack.c.b16 %v394, %v386
  %v643 = vpack.c.b16 %v395, %v387
  %v644 = vpack.c.b16 %v396, %v388
  %v645 = vpack.c.b16 %v397, %v389
  %v646 = vpack.c.b16 %v398, %v390
  %v647 = vpack.c.b16 %v399, %v391
  %v648 = vpack.c.b16 %v408, %v400
  %v649 = vpack.c.b16 %v409, %v401
  %v650 = vpack.c.b16 %v410, %v402
  %v651 = vpack.c.b16 %v411, %v403
  %v652 = vpack.c.b16 %v412, %v404
  %v653 = vpack.c.b16 %v413, %v405
  %v654 = vpack.c.b16 %v414, %v406
  %v655 = vpack.c.b16 %v415, %v407
  %v656 = vpack.c.b16 %v424, %v416
  %v657 = vpack.c.b16 %v425, %v417
  %v658 = vpack.c.b16 %v426, %v418
  %v659 = vpack.c.b16 %v427, %v419
  %v660 = vpack.c.b16 %v428, %v420
  %v661 = vpack.c.b16 %v429, %v421
  %v662 = vpack.c.b16 %v430, %v422
  %v663 = vpack.c.b16 %v431, %v423
  %v664 = vpack.c.b16 %v440, %v432
  %v665 = vpack.c.b16 %v441, %v433
  %v666 = vpack.c.b16 %v442, %v434
  %v667 = vpack.c.b16 %v443, %v435
  %v668 = vpack.c.b16 %v444, %v436
  %v669 = vpack.c.b16 %v445, %v437
  %v670 = vpack.c.b16 %v446, %v438
  %v671 = vpack.c.b16 %v447, %v439
  %v672 = vpack.c.b16 %v456, %v448
  %v673 = vpack.c.b16 %v457, %v449
  %v674 = vpack.c.b16 %v458, %v450
  %v675 = vpack.c.b16 %v459, %v451
  %v676 = vpack.c.b16 %v460, %v452
  %v677 = vpack.c.b16 %v461, %v453
  %v678 = vpack.c.b16 %v462, %v454
  %v679 = vpack.c.b16 %v463, %v455
  %v680 = vpack.c.b16 %v472, %v464
  %v681 = vpack.c.b16 %v473, %v465
  %v682 = vpack.c.b16 %v474, %v466
  %v683 = vpack.c.b16 %v475, %v467
  %v684 = vpack.c.b16 %v476, %v468
  %v685 = vpack.c.b16 %v477, %v469
  %v686 = vpack.c.b16 %v478, %v470
  %v687 = vpack.c.b16 %v479, %v471
  %v688 = vpack.c.b16 %v488, %v480
  %v689 = vpack.c.b16 %v489, %v481
  %v690 = vpack.c.b16 %v490, %v482
  %v691 = vpack.c.b16 %v491, %v483
  %v692 = vpack.c.b16 %v492, %v484
  %v693 = vpack.c.b16 %v493, %v485
  %v694 = vpack.c.b16 %v494, %v486
  %v695 = vpack.c.b16 %v495, %v487
  %v696 = vpack.c.b16 %v504, %v496
  %v697 = vpack.c.b16 %v505, %v497
  %v698 = vpack.c.b16 %v506, %v498
  %v699 = vpack.c.b16 %v507, %v499
  %v700 = vpack.c.b16 %v508, %v500
  %v701 = vpack.c.b16 %v509, %v501
  %v702 = vpack.c.b16 %v510, %v502
  %v703 = vpack.c.b16 %v511, %v503
  %v704 = vpack.c.b16 %v520, %v512
  %v705 = vpack.c.b16 %v521, %v513
  %v706 = vpack.c.b16 %v522, %v514
  %v707 = vpack.c.b16 %v523, %v515
  %v708 = vpack.c.b16 %v524, %v516
  %v709 = vpack.c.b16 %v525, %v517
  %v710 = vpack.c.b16 %v526, %v518
  %v711 = vpack.c.b16 %v527, %v519
  %v712 = vpack.c.b16 %v536, %v528
  %v713 = vpack.c.b16 %v537, %v529
  %v714 = vpack.c.b16 %v538, %v530
  %v715 = vpack.c.b16 %v539, %v531
  %v716 = vpack.c.b16 %v540, %v532
  %v717 = vpack.c.b16 %v541, %v533
  %v718 = vpack.c.b16 %v542, %v534
  %v719 = vpack.c.b16 %v543, %v535
  %v720 = vpack.c.b16 %v552, %v544
  %v721 = vpack.c.b16 %v553, %v545
  %v722 = vpack.c.b16 %v554, %v546
  %v723 = vpack.c.b16 %v555, %v547
  %v724 = vpack.c.b16 %v556, %v548
  %v725 = vpack.c.b16 %v557, %v549
  %v726 = vpack.c.b16 %v558, %v550
  %v727 = vpack.c.b16 %v559, %v551
  %v728 = vpack.c.b16 %v568, %v560
  %v729 = vpack.c.b16 %v569, %v561
  %v730 = vpack.c.b16 %v570, %v562
  %v731 = vpack.c.b16 %v571, %v563
  %v732 = vpack.c.b16 %v572, %v564
  %v733 = vpack.c.b16 %v573, %v565
  %v734 = vpack.c.b16 %v574, %v566
  %v735 = vpack.c.b16 %v575, %v567
  %v736 = vpack.c.b16 %v584, %v576
  %v737 = vpack.c.b16 %v585, %v577
  %v738 = vpack.c.b16 %v586, %v578
  %v739 = vpack.c.b16 %v587, %v579
  %v740 = vpack.c.b16 %v588, %v580
  %v741 = vpack.c.b16 %v589, %v581
  %v742 = vpack.c.b16 %v590, %v582
  %v743 = vpack.c.b16 %v591, %v583
  %v744 = vpack.c.b16 %v600, %v592
  %v745 = vpack.c.b16 %v601, %v593
  %v746 = vpack.c.b16 %v602, %v594
  %v747 = vpack.c.b16 %v603, %v595
  %v748 = vpack.c.b16 %v604, %v596
  %v749 = vpack.c.b16 %v605, %v597
  %v750 = vpack.c.b16 %v606, %v598
  %v751 = vpack.c.b16 %v607, %v599
  %v752 = vpack.c.b16 %v616, %v608
  %v753 = vpack.c.b16 %v617, %v609
  %v754 = vpack.c.b16 %v618, %v610
  %v755 = vpack.c.b16 %v619, %v611
  %v756 = vpack.c.b16 %v620, %v612
  %v757 = vpack.c.b16 %v621, %v613
  %v758 = vpack.c.b16 %v622, %v614
  %v759 = vpack.c.b16 %v623, %v615
  %v760 = vpack.c.b16 %v632, %v624
  %v761 = vpack.c.b16 %v633, %v625
  %v762 = vpack.c.b16 %v634, %v626
  %v763 = vpack.c.b16 %v635, %v627
  %v764 = vpack.c.b16 %v636, %v628
  %v765 = vpack.c.b16 %v637, %v629
  %v766 = vpack.c.b16 %v638, %v630
  %v767 = vpack.c.b16 %v639, %v631
  %896 = vmatpush.bf16.msra.mxu0 %v696
  %897 = vmatpush.bf16.msra.mxu0 %v688
  %898 = vmatpush.bf16.msra.mxu0 %v680
  %899 = vmatpush.bf16.msra.mxu0 %v672
  %900 = vmatpush.bf16.msra.mxu0 %v664
  %901 = vmatpush.bf16.msra.mxu0 %v656
  %902 = vmatpush.bf16.msra.mxu0 %v648
  %903 = vmatpush.bf16.msra.mxu0 %v640
  %904 = vmatmul.bf16.gmra.mxu0 %v224
  %v905 = vpop.f32.mrf.mxu0
  %v906 = vadd.f32 %v160, %v905
  %v907 = vpop.f32.mrf.mxu0
  %v908 = vadd.f32 %v160, %v907
  %909 = vmatmul.bf16.gmra.mxu0 %v226
  %v910 = vpop.f32.mrf.mxu0
  %v911 = vadd.f32 %v160, %v910
  %v912 = vpop.f32.mrf.mxu0
  %v913 = vadd.f32 %v160, %v912
  %914 = vmatmul.bf16.gmra.mxu0 %v228
  %v915 = vpop.f32.mrf.mxu0
  %v916 = vadd.f32 %v160, %v915
  %v917 = vpop.f32.mrf.mxu0
  %v918 = vadd.f32 %v160, %v917
  %919 = vmatmul.bf16.gmra.mxu0 %v230
  %v920 = vpop.f32.mrf.mxu0
  %v921 = vadd.f32 %v160, %v920
  %v922 = vpop.f32.mrf.mxu0
  %v923 = vadd.f32 %v160, %v922
  %924 = vmatmul.bf16.gmra.mxu0 %v232
  %v925 = vpop.f32.mrf.mxu0
  %v926 = vadd.f32 %v160, %v925
  %v927 = vpop.f32.mrf.mxu0
  %v928 = vadd.f32 %v160, %v927
  %929 = vmatmul.bf16.gmra.mxu0 %v234
  %v930 = vpop.f32.mrf.mxu0
  %v931 = vadd.f32 %v160, %v930
  %v932 = vpop.f32.mrf.mxu0
  %v933 = vadd.f32 %v160, %v932
  %934 = vmatmul.bf16.gmra.mxu0 %v236
  %v935 = vpop.f32.mrf.mxu0
  %v936 = vadd.f32 %v160, %v935
  %v937 = vpop.f32.mrf.mxu0
  %v938 = vadd.f32 %v160, %v937
  %939 = vmatmul.bf16.gmra.mxu0 %v238
  %v940 = vpop.f32.mrf.mxu0
  %v941 = vadd.f32 %v160, %v940
  %v942 = vpop.f32.mrf.mxu0
  %v943 = vadd.f32 %v160, %v942
  %944 = vdwg.mxu0
  %945 = vmatpush.bf16.msra.mxu0 %v760
  %946 = vmatpush.bf16.msra.mxu0 %v752
  %947 = vmatpush.bf16.msra.mxu0 %v744
  %948 = vmatpush.bf16.msra.mxu0 %v736
  %949 = vmatpush.bf16.msra.mxu0 %v728
  %950 = vmatpush.bf16.msra.mxu0 %v720
  %951 = vmatpush.bf16.msra.mxu0 %v712
  %952 = vmatpush.bf16.msra.mxu0 %v704
  %953 = vmatmul.bf16.gmra.mxu0 %v225
  %v954 = vpop.f32.mrf.mxu0
  %v955 = vadd.f32 %v906, %v954
  %v956 = vpop.f32.mrf.mxu0
  %v957 = vadd.f32 %v908, %v956
  %958 = vmatmul.bf16.gmra.mxu0 %v227
  %v959 = vpop.f32.mrf.mxu0
  %v960 = vadd.f32 %v911, %v959
  %v961 = vpop.f32.mrf.mxu0
  %v962 = vadd.f32 %v913, %v961
  %963 = vmatmul.bf16.gmra.mxu0 %v229
  %v964 = vpop.f32.mrf.mxu0
  %v965 = vadd.f32 %v916, %v964
  %v966 = vpop.f32.mrf.mxu0
  %v967 = vadd.f32 %v918, %v966
  %968 = vmatmul.bf16.gmra.mxu0 %v231
  %v969 = vpop.f32.mrf.mxu0
  %v970 = vadd.f32 %v921, %v969
  %v971 = vpop.f32.mrf.mxu0
  %v972 = vadd.f32 %v923, %v971
  %973 = vmatmul.bf16.gmra.mxu0 %v233
  %v974 = vpop.f32.mrf.mxu0
  %v975 = vadd.f32 %v926, %v974
  %v976 = vpop.f32.mrf.mxu0
  %v977 = vadd.f32 %v928, %v976
  %978 = vmatmul.bf16.gmra.mxu0 %v235
  %v979 = vpop.f32.mrf.mxu0
  %v980 = vadd.f32 %v931, %v979
  %v981 = vpop.f32.mrf.mxu0
  %v982 = vadd.f32 %v933, %v981
  %983 = vmatmul.bf16.gmra.mxu0 %v237
  %v984 = vpop.f32.mrf.mxu0
  %v985 = vadd.f32 %v936, %v984
  %v986 = vpop.f32.mrf.mxu0
  %v987 = vadd.f32 %v938, %v986
  %988 = vmatmul.bf16.gmra.mxu0 %v239
  %v989 = vpop.f32.mrf.mxu0
  %v990 = vadd.f32 %v941, %v989
  %v991 = vpop.f32.mrf.mxu0
  %v992 = vadd.f32 %v943, %v991
  %993 = vdwg.mxu0
  %994 = vmatpush.bf16.msra.mxu0 %v697
  %995 = vmatpush.bf16.msra.mxu0 %v689
  %996 = vmatpush.bf16.msra.mxu0 %v681
  %997 = vmatpush.bf16.msra.mxu0 %v673
  %998 = vmatpush.bf16.msra.mxu0 %v665
  %999 = vmatpush.bf16.msra.mxu0 %v657
  %1000 = vmatpush.bf16.msra.mxu0 %v649
  %1001 = vmatpush.bf16.msra.mxu0 %v641
  %1002 = vmatmul.bf16.gmra.mxu0 %v224
  %v1003 = vpop.f32.mrf.mxu0
  %v1004 = vadd.f32 %v161, %v1003
  %v1005 = vpop.f32.mrf.mxu0
  %v1006 = vadd.f32 %v161, %v1005
  %1007 = vmatmul.bf16.gmra.mxu0 %v226
  %v1008 = vpop.f32.mrf.mxu0
  %v1009 = vadd.f32 %v161, %v1008
  %v1010 = vpop.f32.mrf.mxu0
  %v1011 = vadd.f32 %v161, %v1010
  %1012 = vmatmul.bf16.gmra.mxu0 %v228
  %v1013 = vpop.f32.mrf.mxu0
  %v1014 = vadd.f32 %v161, %v1013
  %v1015 = vpop.f32.mrf.mxu0
  %v1016 = vadd.f32 %v161, %v1015
  %1017 = vmatmul.bf16.gmra.mxu0 %v230
  %v1018 = vpop.f32.mrf.mxu0
  %v1019 = vadd.f32 %v161, %v1018
  %v1020 = vpop.f32.mrf.mxu0
  %v1021 = vadd.f32 %v161, %v1020
  %1022 = vmatmul.bf16.gmra.mxu0 %v232
  %v1023 = vpop.f32.mrf.mxu0
  %v1024 = vadd.f32 %v161, %v1023
  %v1025 = vpop.f32.mrf.mxu0
  %v1026 = vadd.f32 %v161, %v1025
  %1027 = vmatmul.bf16.gmra.mxu0 %v234
  %v1028 = vpop.f32.mrf.mxu0
  %v1029 = vadd.f32 %v161, %v1028
  %v1030 = vpop.f32.mrf.mxu0
  %v1031 = vadd.f32 %v161, %v1030
  %1032 = vmatmul.bf16.gmra.mxu0 %v236
  %v1033 = vpop.f32.mrf.mxu0
  %v1034 = vadd.f32 %v161, %v1033
  %v1035 = vpop.f32.mrf.mxu0
  %v1036 = vadd.f32 %v161, %v1035
  %1037 = vmatmul.bf16.gmra.mxu0 %v238
  %v1038 = vpop.f32.mrf.mxu0
  %v1039 = vadd.f32 %v161, %v1038
  %v1040 = vpop.f32.mrf.mxu0
  %v1041 = vadd.f32 %v161, %v1040
  %1042 = vdwg.mxu0
  %1043 = vmatpush.bf16.msra.mxu0 %v761
  %1044 = vmatpush.bf16.msra.mxu0 %v753
  %1045 = vmatpush.bf16.msra.mxu0 %v745
  %1046 = vmatpush.bf16.msra.mxu0 %v737
  %1047 = vmatpush.bf16.msra.mxu0 %v729
  %1048 = vmatpush.bf16.msra.mxu0 %v721
  %1049 = vmatpush.bf16.msra.mxu0 %v713
  %1050 = vmatpush.bf16.msra.mxu0 %v705
  %1051 = vmatmul.bf16.gmra.mxu0 %v225
  %v1052 = vpop.f32.mrf.mxu0
  %v1053 = vadd.f32 %v1004, %v1052
  %v1054 = vpop.f32.mrf.mxu0
  %v1055 = vadd.f32 %v1006, %v1054
  %1056 = vmatmul.bf16.gmra.mxu0 %v227
  %v1057 = vpop.f32.mrf.mxu0
  %v1058 = vadd.f32 %v1009, %v1057
  %v1059 = vpop.f32.mrf.mxu0
  %v1060 = vadd.f32 %v1011, %v1059
  %1061 = vmatmul.bf16.gmra.mxu0 %v229
  %v1062 = vpop.f32.mrf.mxu0
  %v1063 = vadd.f32 %v1014, %v1062
  %v1064 = vpop.f32.mrf.mxu0
  %v1065 = vadd.f32 %v1016, %v1064
  %1066 = vmatmul.bf16.gmra.mxu0 %v231
  %v1067 = vpop.f32.mrf.mxu0
  %v1068 = vadd.f32 %v1019, %v1067
  %v1069 = vpop.f32.mrf.mxu0
  %v1070 = vadd.f32 %v1021, %v1069
  %1071 = vmatmul.bf16.gmra.mxu0 %v233
  %v1072 = vpop.f32.mrf.mxu0
  %v1073 = vadd.f32 %v1024, %v1072
  %v1074 = vpop.f32.mrf.mxu0
  %v1075 = vadd.f32 %v1026, %v1074
  %1076 = vmatmul.bf16.gmra.mxu0 %v235
  %v1077 = vpop.f32.mrf.mxu0
  %v1078 = vadd.f32 %v1029, %v1077
  %v1079 = vpop.f32.mrf.mxu0
  %v1080 = vadd.f32 %v1031, %v1079
  %1081 = vmatmul.bf16.gmra.mxu0 %v237
  %v1082 = vpop.f32.mrf.mxu0
  %v1083 = vadd.f32 %v1034, %v1082
  %v1084 = vpop.f32.mrf.mxu0
  %v1085 = vadd.f32 %v1036, %v1084
  %1086 = vmatmul.bf16.gmra.mxu0 %v239
  %v1087 = vpop.f32.mrf.mxu0
  %v1088 = vadd.f32 %v1039, %v1087
  %v1089 = vpop.f32.mrf.mxu0
  %v1090 = vadd.f32 %v1041, %v1089
  %1091 = vdwg.mxu0
  %1092 = vmatpush.bf16.msra.mxu0 %v698
  %1093 = vmatpush.bf16.msra.mxu0 %v690
  %1094 = vmatpush.bf16.msra.mxu0 %v682
  %1095 = vmatpush.bf16.msra.mxu0 %v674
  %1096 = vmatpush.bf16.msra.mxu0 %v666
  %1097 = vmatpush.bf16.msra.mxu0 %v658
  %1098 = vmatpush.bf16.msra.mxu0 %v650
  %1099 = vmatpush.bf16.msra.mxu0 %v642
  %1100 = vmatmul.bf16.gmra.mxu0 %v224
  %v1101 = vpop.f32.mrf.mxu0
  %v1102 = vadd.f32 %v162, %v1101
  %v1103 = vpop.f32.mrf.mxu0
  %v1104 = vadd.f32 %v162, %v1103
  %1105 = vmatmul.bf16.gmra.mxu0 %v226
  %v1106 = vpop.f32.mrf.mxu0
  %v1107 = vadd.f32 %v162, %v1106
  %v1108 = vpop.f32.mrf.mxu0
  %v1109 = vadd.f32 %v162, %v1108
  %1110 = vmatmul.bf16.gmra.mxu0 %v228
  %v1111 = vpop.f32.mrf.mxu0
  %v1112 = vadd.f32 %v162, %v1111
  %v1113 = vpop.f32.mrf.mxu0
  %v1114 = vadd.f32 %v162, %v1113
  %1115 = vmatmul.bf16.gmra.mxu0 %v230
  %v1116 = vpop.f32.mrf.mxu0
  %v1117 = vadd.f32 %v162, %v1116
  %v1118 = vpop.f32.mrf.mxu0
  %v1119 = vadd.f32 %v162, %v1118
  %1120 = vmatmul.bf16.gmra.mxu0 %v232
  %v1121 = vpop.f32.mrf.mxu0
  %v1122 = vadd.f32 %v162, %v1121
  %v1123 = vpop.f32.mrf.mxu0
  %v1124 = vadd.f32 %v162, %v1123
  %1125 = vmatmul.bf16.gmra.mxu0 %v234
  %v1126 = vpop.f32.mrf.mxu0
  %v1127 = vadd.f32 %v162, %v1126
  %v1128 = vpop.f32.mrf.mxu0
  %v1129 = vadd.f32 %v162, %v1128
  %1130 = vmatmul.bf16.gmra.mxu0 %v236
  %v1131 = vpop.f32.mrf.mxu0
  %v1132 = vadd.f32 %v162, %v1131
  %v1133 = vpop.f32.mrf.mxu0
  %v1134 = vadd.f32 %v162, %v1133
  %1135 = vmatmul.bf16.gmra.mxu0 %v238
  %v1136 = vpop.f32.mrf.mxu0
  %v1137 = vadd.f32 %v162, %v1136
  %v1138 = vpop.f32.mrf.mxu0
  %v1139 = vadd.f32 %v162, %v1138
  %1140 = vdwg.mxu0
  %1141 = vmatpush.bf16.msra.mxu0 %v762
  %1142 = vmatpush.bf16.msra.mxu0 %v754
  %1143 = vmatpush.bf16.msra.mxu0 %v746
  %1144 = vmatpush.bf16.msra.mxu0 %v738
  %1145 = vmatpush.bf16.msra.mxu0 %v730
  %1146 = vmatpush.bf16.msra.mxu0 %v722
  %1147 = vmatpush.bf16.msra.mxu0 %v714
  %1148 = vmatpush.bf16.msra.mxu0 %v706
  %1149 = vmatmul.bf16.gmra.mxu0 %v225
  %v1150 = vpop.f32.mrf.mxu0
  %v1151 = vadd.f32 %v1102, %v1150
  %v1152 = vpop.f32.mrf.mxu0
  %v1153 = vadd.f32 %v1104, %v1152
  %1154 = vmatmul.bf16.gmra.mxu0 %v227
  %v1155 = vpop.f32.mrf.mxu0
  %v1156 = vadd.f32 %v1107, %v1155
  %v1157 = vpop.f32.mrf.mxu0
  %v1158 = vadd.f32 %v1109, %v1157
  %1159 = vmatmul.bf16.gmra.mxu0 %v229
  %v1160 = vpop.f32.mrf.mxu0
  %v1161 = vadd.f32 %v1112, %v1160
  %v1162 = vpop.f32.mrf.mxu0
  %v1163 = vadd.f32 %v1114, %v1162
  %1164 = vmatmul.bf16.gmra.mxu0 %v231
  %v1165 = vpop.f32.mrf.mxu0
  %v1166 = vadd.f32 %v1117, %v1165
  %v1167 = vpop.f32.mrf.mxu0
  %v1168 = vadd.f32 %v1119, %v1167
  %1169 = vmatmul.bf16.gmra.mxu0 %v233
  %v1170 = vpop.f32.mrf.mxu0
  %v1171 = vadd.f32 %v1122, %v1170
  %v1172 = vpop.f32.mrf.mxu0
  %v1173 = vadd.f32 %v1124, %v1172
  %1174 = vmatmul.bf16.gmra.mxu0 %v235
  %v1175 = vpop.f32.mrf.mxu0
  %v1176 = vadd.f32 %v1127, %v1175
  %v1177 = vpop.f32.mrf.mxu0
  %v1178 = vadd.f32 %v1129, %v1177
  %1179 = vmatmul.bf16.gmra.mxu0 %v237
  %v1180 = vpop.f32.mrf.mxu0
  %v1181 = vadd.f32 %v1132, %v1180
  %v1182 = vpop.f32.mrf.mxu0
  %v1183 = vadd.f32 %v1134, %v1182
  %1184 = vmatmul.bf16.gmra.mxu0 %v239
  %v1185 = vpop.f32.mrf.mxu0
  %v1186 = vadd.f32 %v1137, %v1185
  %v1187 = vpop.f32.mrf.mxu0
  %v1188 = vadd.f32 %v1139, %v1187
  %1189 = vdwg.mxu0
  %1190 = vmatpush.bf16.msra.mxu0 %v699
  %1191 = vmatpush.bf16.msra.mxu0 %v691
  %1192 = vmatpush.bf16.msra.mxu0 %v683
  %1193 = vmatpush.bf16.msra.mxu0 %v675
  %1194 = vmatpush.bf16.msra.mxu0 %v667
  %1195 = vmatpush.bf16.msra.mxu0 %v659
  %1196 = vmatpush.bf16.msra.mxu0 %v651
  %1197 = vmatpush.bf16.msra.mxu0 %v643
  %1198 = vmatmul.bf16.gmra.mxu0 %v224
  %v1199 = vpop.f32.mrf.mxu0
  %v1200 = vadd.f32 %v163, %v1199
  %v1201 = vpop.f32.mrf.mxu0
  %v1202 = vadd.f32 %v163, %v1201
  %1203 = vmatmul.bf16.gmra.mxu0 %v226
  %v1204 = vpop.f32.mrf.mxu0
  %v1205 = vadd.f32 %v163, %v1204
  %v1206 = vpop.f32.mrf.mxu0
  %v1207 = vadd.f32 %v163, %v1206
  %1208 = vmatmul.bf16.gmra.mxu0 %v228
  %v1209 = vpop.f32.mrf.mxu0
  %v1210 = vadd.f32 %v163, %v1209
  %v1211 = vpop.f32.mrf.mxu0
  %v1212 = vadd.f32 %v163, %v1211
  %1213 = vmatmul.bf16.gmra.mxu0 %v230
  %v1214 = vpop.f32.mrf.mxu0
  %v1215 = vadd.f32 %v163, %v1214
  %v1216 = vpop.f32.mrf.mxu0
  %v1217 = vadd.f32 %v163, %v1216
  %1218 = vmatmul.bf16.gmra.mxu0 %v232
  %v1219 = vpop.f32.mrf.mxu0
  %v1220 = vadd.f32 %v163, %v1219
  %v1221 = vpop.f32.mrf.mxu0
  %v1222 = vadd.f32 %v163, %v1221
  %1223 = vmatmul.bf16.gmra.mxu0 %v234
  %v1224 = vpop.f32.mrf.mxu0
  %v1225 = vadd.f32 %v163, %v1224
  %v1226 = vpop.f32.mrf.mxu0
  %v1227 = vadd.f32 %v163, %v1226
  %1228 = vmatmul.bf16.gmra.mxu0 %v236
  %v1229 = vpop.f32.mrf.mxu0
  %v1230 = vadd.f32 %v163, %v1229
  %v1231 = vpop.f32.mrf.mxu0
  %v1232 = vadd.f32 %v163, %v1231
  %1233 = vmatmul.bf16.gmra.mxu0 %v238
  %v1234 = vpop.f32.mrf.mxu0
  %v1235 = vadd.f32 %v163, %v1234
  %v1236 = vpop.f32.mrf.mxu0
  %v1237 = vadd.f32 %v163, %v1236
  %1238 = vdwg.mxu0
  %1239 = vmatpush.bf16.msra.mxu0 %v763
  %1240 = vmatpush.bf16.msra.mxu0 %v755
  %1241 = vmatpush.bf16.msra.mxu0 %v747
  %1242 = vmatpush.bf16.msra.mxu0 %v739
  %1243 = vmatpush.bf16.msra.mxu0 %v731
  %1244 = vmatpush.bf16.msra.mxu0 %v723
  %1245 = vmatpush.bf16.msra.mxu0 %v715
  %1246 = vmatpush.bf16.msra.mxu0 %v707
  %1247 = vmatmul.bf16.gmra.mxu0 %v225
  %v1248 = vpop.f32.mrf.mxu0
  %v1249 = vadd.f32 %v1200, %v1248
  %v1250 = vpop.f32.mrf.mxu0
  %v1251 = vadd.f32 %v1202, %v1250
  %1252 = vmatmul.bf16.gmra.mxu0 %v227
  %v1253 = vpop.f32.mrf.mxu0
  %v1254 = vadd.f32 %v1205, %v1253
  %v1255 = vpop.f32.mrf.mxu0
  %v1256 = vadd.f32 %v1207, %v1255
  %1257 = vmatmul.bf16.gmra.mxu0 %v229
  %v1258 = vpop.f32.mrf.mxu0
  %v1259 = vadd.f32 %v1210, %v1258
  %v1260 = vpop.f32.mrf.mxu0
  %v1261 = vadd.f32 %v1212, %v1260
  %1262 = vmatmul.bf16.gmra.mxu0 %v231
  %v1263 = vpop.f32.mrf.mxu0
  %v1264 = vadd.f32 %v1215, %v1263
  %v1265 = vpop.f32.mrf.mxu0
  %v1266 = vadd.f32 %v1217, %v1265
  %1267 = vmatmul.bf16.gmra.mxu0 %v233
  %v1268 = vpop.f32.mrf.mxu0
  %v1269 = vadd.f32 %v1220, %v1268
  %v1270 = vpop.f32.mrf.mxu0
  %v1271 = vadd.f32 %v1222, %v1270
  %1272 = vmatmul.bf16.gmra.mxu0 %v235
  %v1273 = vpop.f32.mrf.mxu0
  %v1274 = vadd.f32 %v1225, %v1273
  %v1275 = vpop.f32.mrf.mxu0
  %v1276 = vadd.f32 %v1227, %v1275
  %1277 = vmatmul.bf16.gmra.mxu0 %v237
  %v1278 = vpop.f32.mrf.mxu0
  %v1279 = vadd.f32 %v1230, %v1278
  %v1280 = vpop.f32.mrf.mxu0
  %v1281 = vadd.f32 %v1232, %v1280
  %1282 = vmatmul.bf16.gmra.mxu0 %v239
  %v1283 = vpop.f32.mrf.mxu0
  %v1284 = vadd.f32 %v1235, %v1283
  %v1285 = vpop.f32.mrf.mxu0
  %v1286 = vadd.f32 %v1237, %v1285
  %1287 = vdwg.mxu0
  %1288 = vmatpush.bf16.msra.mxu0 %v700
  %1289 = vmatpush.bf16.msra.mxu0 %v692
  %1290 = vmatpush.bf16.msra.mxu0 %v684
  %1291 = vmatpush.bf16.msra.mxu0 %v676
  %1292 = vmatpush.bf16.msra.mxu0 %v668
  %1293 = vmatpush.bf16.msra.mxu0 %v660
  %1294 = vmatpush.bf16.msra.mxu0 %v652
  %1295 = vmatpush.bf16.msra.mxu0 %v644
  %1296 = vmatmul.bf16.gmra.mxu0 %v224
  %v1297 = vpop.f32.mrf.mxu0
  %v1298 = vadd.f32 %v164, %v1297
  %v1299 = vpop.f32.mrf.mxu0
  %v1300 = vadd.f32 %v164, %v1299
  %1301 = vmatmul.bf16.gmra.mxu0 %v226
  %v1302 = vpop.f32.mrf.mxu0
  %v1303 = vadd.f32 %v164, %v1302
  %v1304 = vpop.f32.mrf.mxu0
  %v1305 = vadd.f32 %v164, %v1304
  %1306 = vmatmul.bf16.gmra.mxu0 %v228
  %v1307 = vpop.f32.mrf.mxu0
  %v1308 = vadd.f32 %v164, %v1307
  %v1309 = vpop.f32.mrf.mxu0
  %v1310 = vadd.f32 %v164, %v1309
  %1311 = vmatmul.bf16.gmra.mxu0 %v230
  %v1312 = vpop.f32.mrf.mxu0
  %v1313 = vadd.f32 %v164, %v1312
  %v1314 = vpop.f32.mrf.mxu0
  %v1315 = vadd.f32 %v164, %v1314
  %1316 = vmatmul.bf16.gmra.mxu0 %v232
  %v1317 = vpop.f32.mrf.mxu0
  %v1318 = vadd.f32 %v164, %v1317
  %v1319 = vpop.f32.mrf.mxu0
  %v1320 = vadd.f32 %v164, %v1319
  %1321 = vmatmul.bf16.gmra.mxu0 %v234
  %v1322 = vpop.f32.mrf.mxu0
  %v1323 = vadd.f32 %v164, %v1322
  %v1324 = vpop.f32.mrf.mxu0
  %v1325 = vadd.f32 %v164, %v1324
  %1326 = vmatmul.bf16.gmra.mxu0 %v236
  %v1327 = vpop.f32.mrf.mxu0
  %v1328 = vadd.f32 %v164, %v1327
  %v1329 = vpop.f32.mrf.mxu0
  %v1330 = vadd.f32 %v164, %v1329
  %1331 = vmatmul.bf16.gmra.mxu0 %v238
  %v1332 = vpop.f32.mrf.mxu0
  %v1333 = vadd.f32 %v164, %v1332
  %v1334 = vpop.f32.mrf.mxu0
  %v1335 = vadd.f32 %v164, %v1334
  %1336 = vdwg.mxu0
  %1337 = vmatpush.bf16.msra.mxu0 %v764
  %1338 = vmatpush.bf16.msra.mxu0 %v756
  %1339 = vmatpush.bf16.msra.mxu0 %v748
  %1340 = vmatpush.bf16.msra.mxu0 %v740
  %1341 = vmatpush.bf16.msra.mxu0 %v732
  %1342 = vmatpush.bf16.msra.mxu0 %v724
  %1343 = vmatpush.bf16.msra.mxu0 %v716
  %1344 = vmatpush.bf16.msra.mxu0 %v708
  %1345 = vmatmul.bf16.gmra.mxu0 %v225
  %v1346 = vpop.f32.mrf.mxu0
  %v1347 = vadd.f32 %v1298, %v1346
  %v1348 = vpop.f32.mrf.mxu0
  %v1349 = vadd.f32 %v1300, %v1348
  %1350 = vmatmul.bf16.gmra.mxu0 %v227
  %v1351 = vpop.f32.mrf.mxu0
  %v1352 = vadd.f32 %v1303, %v1351
  %v1353 = vpop.f32.mrf.mxu0
  %v1354 = vadd.f32 %v1305, %v1353
  %1355 = vmatmul.bf16.gmra.mxu0 %v229
  %v1356 = vpop.f32.mrf.mxu0
  %v1357 = vadd.f32 %v1308, %v1356
  %v1358 = vpop.f32.mrf.mxu0
  %v1359 = vadd.f32 %v1310, %v1358
  %1360 = vmatmul.bf16.gmra.mxu0 %v231
  %v1361 = vpop.f32.mrf.mxu0
  %v1362 = vadd.f32 %v1313, %v1361
  %v1363 = vpop.f32.mrf.mxu0
  %v1364 = vadd.f32 %v1315, %v1363
  %1365 = vmatmul.bf16.gmra.mxu0 %v233
  %v1366 = vpop.f32.mrf.mxu0
  %v1367 = vadd.f32 %v1318, %v1366
  %v1368 = vpop.f32.mrf.mxu0
  %v1369 = vadd.f32 %v1320, %v1368
  %1370 = vmatmul.bf16.gmra.mxu0 %v235
  %v1371 = vpop.f32.mrf.mxu0
  %v1372 = vadd.f32 %v1323, %v1371
  %v1373 = vpop.f32.mrf.mxu0
  %v1374 = vadd.f32 %v1325, %v1373
  %1375 = vmatmul.bf16.gmra.mxu0 %v237
  %v1376 = vpop.f32.mrf.mxu0
  %v1377 = vadd.f32 %v1328, %v1376
  %v1378 = vpop.f32.mrf.mxu0
  %v1379 = vadd.f32 %v1330, %v1378
  %1380 = vmatmul.bf16.gmra.mxu0 %v239
  %v1381 = vpop.f32.mrf.mxu0
  %v1382 = vadd.f32 %v1333, %v1381
  %v1383 = vpop.f32.mrf.mxu0
  %v1384 = vadd.f32 %v1335, %v1383
  %1385 = vdwg.mxu0
  %1386 = vmatpush.bf16.msra.mxu0 %v701
  %1387 = vmatpush.bf16.msra.mxu0 %v693
  %1388 = vmatpush.bf16.msra.mxu0 %v685
  %1389 = vmatpush.bf16.msra.mxu0 %v677
  %1390 = vmatpush.bf16.msra.mxu0 %v669
  %1391 = vmatpush.bf16.msra.mxu0 %v661
  %1392 = vmatpush.bf16.msra.mxu0 %v653
  %1393 = vmatpush.bf16.msra.mxu0 %v645
  %1394 = vmatmul.bf16.gmra.mxu0 %v224
  %v1395 = vpop.f32.mrf.mxu0
  %v1396 = vadd.f32 %v165, %v1395
  %v1397 = vpop.f32.mrf.mxu0
  %v1398 = vadd.f32 %v165, %v1397
  %1399 = vmatmul.bf16.gmra.mxu0 %v226
  %v1400 = vpop.f32.mrf.mxu0
  %v1401 = vadd.f32 %v165, %v1400
  %v1402 = vpop.f32.mrf.mxu0
  %v1403 = vadd.f32 %v165, %v1402
  %1404 = vmatmul.bf16.gmra.mxu0 %v228
  %v1405 = vpop.f32.mrf.mxu0
  %v1406 = vadd.f32 %v165, %v1405
  %v1407 = vpop.f32.mrf.mxu0
  %v1408 = vadd.f32 %v165, %v1407
  %1409 = vmatmul.bf16.gmra.mxu0 %v230
  %v1410 = vpop.f32.mrf.mxu0
  %v1411 = vadd.f32 %v165, %v1410
  %v1412 = vpop.f32.mrf.mxu0
  %v1413 = vadd.f32 %v165, %v1412
  %1414 = vmatmul.bf16.gmra.mxu0 %v232
  %v1415 = vpop.f32.mrf.mxu0
  %v1416 = vadd.f32 %v165, %v1415
  %v1417 = vpop.f32.mrf.mxu0
  %v1418 = vadd.f32 %v165, %v1417
  %1419 = vmatmul.bf16.gmra.mxu0 %v234
  %v1420 = vpop.f32.mrf.mxu0
  %v1421 = vadd.f32 %v165, %v1420
  %v1422 = vpop.f32.mrf.mxu0
  %v1423 = vadd.f32 %v165, %v1422
  %1424 = vmatmul.bf16.gmra.mxu0 %v236
  %v1425 = vpop.f32.mrf.mxu0
  %v1426 = vadd.f32 %v165, %v1425
  %v1427 = vpop.f32.mrf.mxu0
  %v1428 = vadd.f32 %v165, %v1427
  %1429 = vmatmul.bf16.gmra.mxu0 %v238
  %v1430 = vpop.f32.mrf.mxu0
  %v1431 = vadd.f32 %v165, %v1430
  %v1432 = vpop.f32.mrf.mxu0
  %v1433 = vadd.f32 %v165, %v1432
  %1434 = vdwg.mxu0
  %1435 = vmatpush.bf16.msra.mxu0 %v765
  %1436 = vmatpush.bf16.msra.mxu0 %v757
  %1437 = vmatpush.bf16.msra.mxu0 %v749
  %1438 = vmatpush.bf16.msra.mxu0 %v741
  %1439 = vmatpush.bf16.msra.mxu0 %v733
  %1440 = vmatpush.bf16.msra.mxu0 %v725
  %1441 = vmatpush.bf16.msra.mxu0 %v717
  %1442 = vmatpush.bf16.msra.mxu0 %v709
  %1443 = vmatmul.bf16.gmra.mxu0 %v225
  %v1444 = vpop.f32.mrf.mxu0
  %v1445 = vadd.f32 %v1396, %v1444
  %v1446 = vpop.f32.mrf.mxu0
  %v1447 = vadd.f32 %v1398, %v1446
  %1448 = vmatmul.bf16.gmra.mxu0 %v227
  %v1449 = vpop.f32.mrf.mxu0
  %v1450 = vadd.f32 %v1401, %v1449
  %v1451 = vpop.f32.mrf.mxu0
  %v1452 = vadd.f32 %v1403, %v1451
  %1453 = vmatmul.bf16.gmra.mxu0 %v229
  %v1454 = vpop.f32.mrf.mxu0
  %v1455 = vadd.f32 %v1406, %v1454
  %v1456 = vpop.f32.mrf.mxu0
  %v1457 = vadd.f32 %v1408, %v1456
  %1458 = vmatmul.bf16.gmra.mxu0 %v231
  %v1459 = vpop.f32.mrf.mxu0
  %v1460 = vadd.f32 %v1411, %v1459
  %v1461 = vpop.f32.mrf.mxu0
  %v1462 = vadd.f32 %v1413, %v1461
  %1463 = vmatmul.bf16.gmra.mxu0 %v233
  %v1464 = vpop.f32.mrf.mxu0
  %v1465 = vadd.f32 %v1416, %v1464
  %v1466 = vpop.f32.mrf.mxu0
  %v1467 = vadd.f32 %v1418, %v1466
  %1468 = vmatmul.bf16.gmra.mxu0 %v235
  %v1469 = vpop.f32.mrf.mxu0
  %v1470 = vadd.f32 %v1421, %v1469
  %v1471 = vpop.f32.mrf.mxu0
  %v1472 = vadd.f32 %v1423, %v1471
  %1473 = vmatmul.bf16.gmra.mxu0 %v237
  %v1474 = vpop.f32.mrf.mxu0
  %v1475 = vadd.f32 %v1426, %v1474
  %v1476 = vpop.f32.mrf.mxu0
  %v1477 = vadd.f32 %v1428, %v1476
  %1478 = vmatmul.bf16.gmra.mxu0 %v239
  %v1479 = vpop.f32.mrf.mxu0
  %v1480 = vadd.f32 %v1431, %v1479
  %v1481 = vpop.f32.mrf.mxu0
  %v1482 = vadd.f32 %v1433, %v1481
  %1483 = vdwg.mxu0
  %1484 = vmatpush.bf16.msra.mxu0 %v702
  %1485 = vmatpush.bf16.msra.mxu0 %v694
  %1486 = vmatpush.bf16.msra.mxu0 %v686
  %1487 = vmatpush.bf16.msra.mxu0 %v678
  %1488 = vmatpush.bf16.msra.mxu0 %v670
  %1489 = vmatpush.bf16.msra.mxu0 %v662
  %1490 = vmatpush.bf16.msra.mxu0 %v654
  %1491 = vmatpush.bf16.msra.mxu0 %v646
  %1492 = vmatmul.bf16.gmra.mxu0 %v224
  %v1493 = vpop.f32.mrf.mxu0
  %v1494 = vadd.f32 %v166, %v1493
  %v1495 = vpop.f32.mrf.mxu0
  %v1496 = vadd.f32 %v166, %v1495
  %1497 = vmatmul.bf16.gmra.mxu0 %v226
  %v1498 = vpop.f32.mrf.mxu0
  %v1499 = vadd.f32 %v166, %v1498
  %v1500 = vpop.f32.mrf.mxu0
  %v1501 = vadd.f32 %v166, %v1500
  %1502 = vmatmul.bf16.gmra.mxu0 %v228
  %v1503 = vpop.f32.mrf.mxu0
  %v1504 = vadd.f32 %v166, %v1503
  %v1505 = vpop.f32.mrf.mxu0
  %v1506 = vadd.f32 %v166, %v1505
  %1507 = vmatmul.bf16.gmra.mxu0 %v230
  %v1508 = vpop.f32.mrf.mxu0
  %v1509 = vadd.f32 %v166, %v1508
  %v1510 = vpop.f32.mrf.mxu0
  %v1511 = vadd.f32 %v166, %v1510
  %1512 = vmatmul.bf16.gmra.mxu0 %v232
  %v1513 = vpop.f32.mrf.mxu0
  %v1514 = vadd.f32 %v166, %v1513
  %v1515 = vpop.f32.mrf.mxu0
  %v1516 = vadd.f32 %v166, %v1515
  %1517 = vmatmul.bf16.gmra.mxu0 %v234
  %v1518 = vpop.f32.mrf.mxu0
  %v1519 = vadd.f32 %v166, %v1518
  %v1520 = vpop.f32.mrf.mxu0
  %v1521 = vadd.f32 %v166, %v1520
  %1522 = vmatmul.bf16.gmra.mxu0 %v236
  %v1523 = vpop.f32.mrf.mxu0
  %v1524 = vadd.f32 %v166, %v1523
  %v1525 = vpop.f32.mrf.mxu0
  %v1526 = vadd.f32 %v166, %v1525
  %1527 = vmatmul.bf16.gmra.mxu0 %v238
  %v1528 = vpop.f32.mrf.mxu0
  %v1529 = vadd.f32 %v166, %v1528
  %v1530 = vpop.f32.mrf.mxu0
  %v1531 = vadd.f32 %v166, %v1530
  %1532 = vdwg.mxu0
  %1533 = vmatpush.bf16.msra.mxu0 %v766
  %1534 = vmatpush.bf16.msra.mxu0 %v758
  %1535 = vmatpush.bf16.msra.mxu0 %v750
  %1536 = vmatpush.bf16.msra.mxu0 %v742
  %1537 = vmatpush.bf16.msra.mxu0 %v734
  %1538 = vmatpush.bf16.msra.mxu0 %v726
  %1539 = vmatpush.bf16.msra.mxu0 %v718
  %1540 = vmatpush.bf16.msra.mxu0 %v710
  %1541 = vmatmul.bf16.gmra.mxu0 %v225
  %v1542 = vpop.f32.mrf.mxu0
  %v1543 = vadd.f32 %v1494, %v1542
  %v1544 = vpop.f32.mrf.mxu0
  %v1545 = vadd.f32 %v1496, %v1544
  %1546 = vmatmul.bf16.gmra.mxu0 %v227
  %v1547 = vpop.f32.mrf.mxu0
  %v1548 = vadd.f32 %v1499, %v1547
  %v1549 = vpop.f32.mrf.mxu0
  %v1550 = vadd.f32 %v1501, %v1549
  %1551 = vmatmul.bf16.gmra.mxu0 %v229
  %v1552 = vpop.f32.mrf.mxu0
  %v1553 = vadd.f32 %v1504, %v1552
  %v1554 = vpop.f32.mrf.mxu0
  %v1555 = vadd.f32 %v1506, %v1554
  %1556 = vmatmul.bf16.gmra.mxu0 %v231
  %v1557 = vpop.f32.mrf.mxu0
  %v1558 = vadd.f32 %v1509, %v1557
  %v1559 = vpop.f32.mrf.mxu0
  %v1560 = vadd.f32 %v1511, %v1559
  %1561 = vmatmul.bf16.gmra.mxu0 %v233
  %v1562 = vpop.f32.mrf.mxu0
  %v1563 = vadd.f32 %v1514, %v1562
  %v1564 = vpop.f32.mrf.mxu0
  %v1565 = vadd.f32 %v1516, %v1564
  %1566 = vmatmul.bf16.gmra.mxu0 %v235
  %v1567 = vpop.f32.mrf.mxu0
  %v1568 = vadd.f32 %v1519, %v1567
  %v1569 = vpop.f32.mrf.mxu0
  %v1570 = vadd.f32 %v1521, %v1569
  %1571 = vmatmul.bf16.gmra.mxu0 %v237
  %v1572 = vpop.f32.mrf.mxu0
  %v1573 = vadd.f32 %v1524, %v1572
  %v1574 = vpop.f32.mrf.mxu0
  %v1575 = vadd.f32 %v1526, %v1574
  %1576 = vmatmul.bf16.gmra.mxu0 %v239
  %v1577 = vpop.f32.mrf.mxu0
  %v1578 = vadd.f32 %v1529, %v1577
  %v1579 = vpop.f32.mrf.mxu0
  %v1580 = vadd.f32 %v1531, %v1579
  %1581 = vdwg.mxu0
  %1582 = vmatpush.bf16.msra.mxu0 %v703
  %1583 = vmatpush.bf16.msra.mxu0 %v695
  %1584 = vmatpush.bf16.msra.mxu0 %v687
  %1585 = vmatpush.bf16.msra.mxu0 %v679
  %1586 = vmatpush.bf16.msra.mxu0 %v671
  %1587 = vmatpush.bf16.msra.mxu0 %v663
  %1588 = vmatpush.bf16.msra.mxu0 %v655
  %1589 = vmatpush.bf16.msra.mxu0 %v647
  %1590 = vmatmul.bf16.gmra.mxu0 %v224
  %v1591 = vpop.f32.mrf.mxu0
  %v1592 = vadd.f32 %v167, %v1591
  %v1593 = vpop.f32.mrf.mxu0
  %v1594 = vadd.f32 %v167, %v1593
  %1595 = vmatmul.bf16.gmra.mxu0 %v226
  %v1596 = vpop.f32.mrf.mxu0
  %v1597 = vadd.f32 %v167, %v1596
  %v1598 = vpop.f32.mrf.mxu0
  %v1599 = vadd.f32 %v167, %v1598
  %1600 = vmatmul.bf16.gmra.mxu0 %v228
  %v1601 = vpop.f32.mrf.mxu0
  %v1602 = vadd.f32 %v167, %v1601
  %v1603 = vpop.f32.mrf.mxu0
  %v1604 = vadd.f32 %v167, %v1603
  %1605 = vmatmul.bf16.gmra.mxu0 %v230
  %v1606 = vpop.f32.mrf.mxu0
  %v1607 = vadd.f32 %v167, %v1606
  %v1608 = vpop.f32.mrf.mxu0
  %v1609 = vadd.f32 %v167, %v1608
  %1610 = vmatmul.bf16.gmra.mxu0 %v232
  %v1611 = vpop.f32.mrf.mxu0
  %v1612 = vadd.f32 %v167, %v1611
  %v1613 = vpop.f32.mrf.mxu0
  %v1614 = vadd.f32 %v167, %v1613
  %1615 = vmatmul.bf16.gmra.mxu0 %v234
  %v1616 = vpop.f32.mrf.mxu0
  %v1617 = vadd.f32 %v167, %v1616
  %v1618 = vpop.f32.mrf.mxu0
  %v1619 = vadd.f32 %v167, %v1618
  %1620 = vmatmul.bf16.gmra.mxu0 %v236
  %v1621 = vpop.f32.mrf.mxu0
  %v1622 = vadd.f32 %v167, %v1621
  %v1623 = vpop.f32.mrf.mxu0
  %v1624 = vadd.f32 %v167, %v1623
  %1625 = vmatmul.bf16.gmra.mxu0 %v238
  %v1626 = vpop.f32.mrf.mxu0
  %v1627 = vadd.f32 %v167, %v1626
  %v1628 = vpop.f32.mrf.mxu0
  %v1629 = vadd.f32 %v167, %v1628
  %1630 = vdwg.mxu0
  %1631 = vmatpush.bf16.msra.mxu0 %v767
  %1632 = vmatpush.bf16.msra.mxu0 %v759
  %1633 = vmatpush.bf16.msra.mxu0 %v751
  %1634 = vmatpush.bf16.msra.mxu0 %v743
  %1635 = vmatpush.bf16.msra.mxu0 %v735
  %1636 = vmatpush.bf16.msra.mxu0 %v727
  %1637 = vmatpush.bf16.msra.mxu0 %v719
  %1638 = vmatpush.bf16.msra.mxu0 %v711
  %1639 = vmatmul.bf16.gmra.mxu0 %v225
  %v1640 = vpop.f32.mrf.mxu0
  %v1641 = vadd.f32 %v1592, %v1640
  %v1642 = vpop.f32.mrf.mxu0
  %v1643 = vadd.f32 %v1594, %v1642
  %1644 = vmatmul.bf16.gmra.mxu0 %v227
  %v1645 = vpop.f32.mrf.mxu0
  %v1646 = vadd.f32 %v1597, %v1645
  %v1647 = vpop.f32.mrf.mxu0
  %v1648 = vadd.f32 %v1599, %v1647
  %1649 = vmatmul.bf16.gmra.mxu0 %v229
  %v1650 = vpop.f32.mrf.mxu0
  %v1651 = vadd.f32 %v1602, %v1650
  %v1652 = vpop.f32.mrf.mxu0
  %v1653 = vadd.f32 %v1604, %v1652
  %1654 = vmatmul.bf16.gmra.mxu0 %v231
  %v1655 = vpop.f32.mrf.mxu0
  %v1656 = vadd.f32 %v1607, %v1655
  %v1657 = vpop.f32.mrf.mxu0
  %v1658 = vadd.f32 %v1609, %v1657
  %1659 = vmatmul.bf16.gmra.mxu0 %v233
  %v1660 = vpop.f32.mrf.mxu0
  %v1661 = vadd.f32 %v1612, %v1660
  %v1662 = vpop.f32.mrf.mxu0
  %v1663 = vadd.f32 %v1614, %v1662
  %1664 = vmatmul.bf16.gmra.mxu0 %v235
  %v1665 = vpop.f32.mrf.mxu0
  %v1666 = vadd.f32 %v1617, %v1665
  %v1667 = vpop.f32.mrf.mxu0
  %v1668 = vadd.f32 %v1619, %v1667
  %1669 = vmatmul.bf16.gmra.mxu0 %v237
  %v1670 = vpop.f32.mrf.mxu0
  %v1671 = vadd.f32 %v1622, %v1670
  %v1672 = vpop.f32.mrf.mxu0
  %v1673 = vadd.f32 %v1624, %v1672
  %1674 = vmatmul.bf16.gmra.mxu0 %v239
  %v1675 = vpop.f32.mrf.mxu0
  %v1676 = vadd.f32 %v1627, %v1675
  %v1677 = vpop.f32.mrf.mxu0
  %v1678 = vadd.f32 %v1629, %v1677
  %1679 = vdwg.mxu0
  %1680 = vst [vmem:[%s3] sm:$0xff] %v955
  %1681 = vst [vmem:[%s3 + $0x8] sm:$0xff] %v1053
  %1682 = vst [vmem:[%s3 + $0x10] sm:$0xff] %v1151
  %1683 = vst [vmem:[%s3 + $0x18] sm:$0xff] %v1249
  %1684 = vst [vmem:[%s3 + $0x20] sm:$0xff] %v957
  %1685 = vst [vmem:[%s3 + $0x28] sm:$0xff] %v1055
  %1686 = vst [vmem:[%s3 + $0x30] sm:$0xff] %v1153
  %1687 = vst [vmem:[%s3 + $0x38] sm:$0xff] %v1251
  %1688 = vst [vmem:[%s3 + $0x40] sm:$0xff] %v960
  %1689 = vst [vmem:[%s3 + $0x48] sm:$0xff] %v1058
  %1690 = vst [vmem:[%s3 + $0x50] sm:$0xff] %v1156
  %1691 = vst [vmem:[%s3 + $0x58] sm:$0xff] %v1254
  %1692 = vst [vmem:[%s3 + $0x60] sm:$0xff] %v962
  %1693 = vst [vmem:[%s3 + $0x68] sm:$0xff] %v1060
  %1694 = vst [vmem:[%s3 + $0x70] sm:$0xff] %v1158
  %1695 = vst [vmem:[%s3 + $0x78] sm:$0xff] %v1256
  %1696 = vst [vmem:[%s3 + $0x80] sm:$0xff] %v965
  %1697 = vst [vmem:[%s3 + $0x88] sm:$0xff] %v1063
  %1698 = vst [vmem:[%s3 + $0x90] sm:$0xff] %v1161
  %1699 = vst [vmem:[%s3 + $0x98] sm:$0xff] %v1259
  %1700 = vst [vmem:[%s3 + $0xa0] sm:$0xff] %v967
  %1701 = vst [vmem:[%s3 + $0xa8] sm:$0xff] %v1065
  %1702 = vst [vmem:[%s3 + $0xb0] sm:$0xff] %v1163
  %1703 = vst [vmem:[%s3 + $0xb8] sm:$0xff] %v1261
  %1704 = vst [vmem:[%s3 + $0xc0] sm:$0xff] %v970
  %1705 = vst [vmem:[%s3 + $0xc8] sm:$0xff] %v1068
  %1706 = vst [vmem:[%s3 + $0xd0] sm:$0xff] %v1166
  %1707 = vst [vmem:[%s3 + $0xd8] sm:$0xff] %v1264
  %1708 = vst [vmem:[%s3 + $0xe0] sm:$0xff] %v972
  %1709 = vst [vmem:[%s3 + $0xe8] sm:$0xff] %v1070
  %1710 = vst [vmem:[%s3 + $0xf0] sm:$0xff] %v1168
  %1711 = vst [vmem:[%s3 + $0xf8] sm:$0xff] %v1266
  %1712 = vst [vmem:[%s3 + $0x100] sm:$0xff] %v975
  %1713 = vst [vmem:[%s3 + $0x108] sm:$0xff] %v1073
  %1714 = vst [vmem:[%s3 + $0x110] sm:$0xff] %v1171
  %1715 = vst [vmem:[%s3 + $0x118] sm:$0xff] %v1269
  %1716 = vst [vmem:[%s3 + $0x120] sm:$0xff] %v977
  %1717 = vst [vmem:[%s3 + $0x128] sm:$0xff] %v1075
  %1718 = vst [vmem:[%s3 + $0x130] sm:$0xff] %v1173
  %1719 = vst [vmem:[%s3 + $0x138] sm:$0xff] %v1271
  %1720 = vst [vmem:[%s3 + $0x140] sm:$0xff] %v980
  %1721 = vst [vmem:[%s3 + $0x148] sm:$0xff] %v1078
  %1722 = vst [vmem:[%s3 + $0x150] sm:$0xff] %v1176
  %1723 = vst [vmem:[%s3 + $0x158] sm:$0xff] %v1274
  %1724 = vst [vmem:[%s3 + $0x160] sm:$0xff] %v982
  %1725 = vst [vmem:[%s3 + $0x168] sm:$0xff] %v1080
  %1726 = vst [vmem:[%s3 + $0x170] sm:$0xff] %v1178
  %1727 = vst [vmem:[%s3 + $0x178] sm:$0xff] %v1276
  %1728 = vst [vmem:[%s3 + $0x180] sm:$0xff] %v985
  %1729 = vst [vmem:[%s3 + $0x188] sm:$0xff] %v1083
  %1730 = vst [vmem:[%s3 + $0x190] sm:$0xff] %v1181
  %1731 = vst [vmem:[%s3 + $0x198] sm:$0xff] %v1279
  %1732 = vst [vmem:[%s3 + $0x1a0] sm:$0xff] %v987
  %1733 = vst [vmem:[%s3 + $0x1a8] sm:$0xff] %v1085
  %1734 = vst [vmem:[%s3 + $0x1b0] sm:$0xff] %v1183
  %1735 = vst [vmem:[%s3 + $0x1b8] sm:$0xff] %v1281
  %1736 = vst [vmem:[%s3 + $0x1c0] sm:$0xff] %v990
  %1737 = vst [vmem:[%s3 + $0x1c8] sm:$0xff] %v1088
  %1738 = vst [vmem:[%s3 + $0x1d0] sm:$0xff] %v1186
  %1739 = vst [vmem:[%s3 + $0x1d8] sm:$0xff] %v1284
  %1740 = vst [vmem:[%s3 + $0x1e0] sm:$0xff] %v992
  %1741 = vst [vmem:[%s3 + $0x1e8] sm:$0xff] %v1090
  %1742 = vst [vmem:[%s3 + $0x1f0] sm:$0xff] %v1188
  %1743 = vst [vmem:[%s3 + $0x1f8] sm:$0xff] %v1286
  %s1744 = scalar_lea.vmem %s3, 512
  %1745 = vst [vmem:[%s1744] sm:$0xff] %v1347
  %1746 = vst [vmem:[%s1744 + $0x8] sm:$0xff] %v1445
  %1747 = vst [vmem:[%s1744 + $0x10] sm:$0xff] %v1543
  %1748 = vst [vmem:[%s1744 + $0x18] sm:$0xff] %v1641
  %1749 = vst [vmem:[%s1744 + $0x20] sm:$0xff] %v1349
  %1750 = vst [vmem:[%s1744 + $0x28] sm:$0xff] %v1447
  %1751 = vst [vmem:[%s1744 + $0x30] sm:$0xff] %v1545
  %1752 = vst [vmem:[%s1744 + $0x38] sm:$0xff] %v1643
  %1753 = vst [vmem:[%s1744 + $0x40] sm:$0xff] %v1352
  %1754 = vst [vmem:[%s1744 + $0x48] sm:$0xff] %v1450
  %1755 = vst [vmem:[%s1744 + $0x50] sm:$0xff] %v1548
  %1756 = vst [vmem:[%s1744 + $0x58] sm:$0xff] %v1646
  %1757 = vst [vmem:[%s1744 + $0x60] sm:$0xff] %v1354
  %1758 = vst [vmem:[%s1744 + $0x68] sm:$0xff] %v1452
  %1759 = vst [vmem:[%s1744 + $0x70] sm:$0xff] %v1550
  %1760 = vst [vmem:[%s1744 + $0x78] sm:$0xff] %v1648
  %1761 = vst [vmem:[%s1744 + $0x80] sm:$0xff] %v1357
  %1762 = vst [vmem:[%s1744 + $0x88] sm:$0xff] %v1455
  %1763 = vst [vmem:[%s1744 + $0x90] sm:$0xff] %v1553
  %1764 = vst [vmem:[%s1744 + $0x98] sm:$0xff] %v1651
  %1765 = vst [vmem:[%s1744 + $0xa0] sm:$0xff] %v1359
  %1766 = vst [vmem:[%s1744 + $0xa8] sm:$0xff] %v1457
  %1767 = vst [vmem:[%s1744 + $0xb0] sm:$0xff] %v1555
  %1768 = vst [vmem:[%s1744 + $0xb8] sm:$0xff] %v1653
  %1769 = vst [vmem:[%s1744 + $0xc0] sm:$0xff] %v1362
  %1770 = vst [vmem:[%s1744 + $0xc8] sm:$0xff] %v1460
  %1771 = vst [vmem:[%s1744 + $0xd0] sm:$0xff] %v1558
  %1772 = vst [vmem:[%s1744 + $0xd8] sm:$0xff] %v1656
  %1773 = vst [vmem:[%s1744 + $0xe0] sm:$0xff] %v1364
  %1774 = vst [vmem:[%s1744 + $0xe8] sm:$0xff] %v1462
  %1775 = vst [vmem:[%s1744 + $0xf0] sm:$0xff] %v1560
  %1776 = vst [vmem:[%s1744 + $0xf8] sm:$0xff] %v1658
  %1777 = vst [vmem:[%s1744 + $0x100] sm:$0xff] %v1367
  %1778 = vst [vmem:[%s1744 + $0x108] sm:$0xff] %v1465
  %1779 = vst [vmem:[%s1744 + $0x110] sm:$0xff] %v1563
  %1780 = vst [vmem:[%s1744 + $0x118] sm:$0xff] %v1661
  %1781 = vst [vmem:[%s1744 + $0x120] sm:$0xff] %v1369
  %1782 = vst [vmem:[%s1744 + $0x128] sm:$0xff] %v1467
  %1783 = vst [vmem:[%s1744 + $0x130] sm:$0xff] %v1565
  %1784 = vst [vmem:[%s1744 + $0x138] sm:$0xff] %v1663
  %1785 = vst [vmem:[%s1744 + $0x140] sm:$0xff] %v1372
  %1786 = vst [vmem:[%s1744 + $0x148] sm:$0xff] %v1470
  %1787 = vst [vmem:[%s1744 + $0x150] sm:$0xff] %v1568
  %1788 = vst [vmem:[%s1744 + $0x158] sm:$0xff] %v1666
  %1789 = vst [vmem:[%s1744 + $0x160] sm:$0xff] %v1374
  %1790 = vst [vmem:[%s1744 + $0x168] sm:$0xff] %v1472
  %1791 = vst [vmem:[%s1744 + $0x170] sm:$0xff] %v1570
  %1792 = vst [vmem:[%s1744 + $0x178] sm:$0xff] %v1668
  %1793 = vst [vmem:[%s1744 + $0x180] sm:$0xff] %v1377
  %1794 = vst [vmem:[%s1744 + $0x188] sm:$0xff] %v1475
  %1795 = vst [vmem:[%s1744 + $0x190] sm:$0xff] %v1573
  %1796 = vst [vmem:[%s1744 + $0x198] sm:$0xff] %v1671
  %1797 = vst [vmem:[%s1744 + $0x1a0] sm:$0xff] %v1379
  %1798 = vst [vmem:[%s1744 + $0x1a8] sm:$0xff] %v1477
  %1799 = vst [vmem:[%s1744 + $0x1b0] sm:$0xff] %v1575
  %1800 = vst [vmem:[%s1744 + $0x1b8] sm:$0xff] %v1673
  %1801 = vst [vmem:[%s1744 + $0x1c0] sm:$0xff] %v1382
  %1802 = vst [vmem:[%s1744 + $0x1c8] sm:$0xff] %v1480
  %1803 = vst [vmem:[%s1744 + $0x1d0] sm:$0xff] %v1578
  %1804 = vst [vmem:[%s1744 + $0x1d8] sm:$0xff] %v1676
  %1805 = vst [vmem:[%s1744 + $0x1e0] sm:$0xff] %v1384
  %1806 = vst [vmem:[%s1744 + $0x1e8] sm:$0xff] %v1482
  %1807 = vst [vmem:[%s1744 + $0x1f0] sm:$0xff] %v1580
  %1808 = vst [vmem:[%s1744 + $0x1f8] sm:$0xff] %v1678
  // Predicated region
  $region14: #{encoder_forward.2} parent=0 // pred_check
    _
  $region15: #{encoder_forward.2} parent=0 // pred_check_branch
    %1810 = sbr.rel (0) target = $region17
  $region16: #{encoder_forward.2} parent=0 // pred_region
    _
  $region17: #{encoder_forward.2} parent=0 // pred_fallthru
    _
  // Predicated region
  $region18: #{encoder_forward.2} parent=0 // pred_check
    _
  $region19: #{encoder_forward.2} parent=0 // pred_check_branch
    %1812 = sbr.rel (0) target = $region21
  $region20: #{encoder_forward.2} parent=0 // pred_region
    _
  $region21: #{encoder_forward.2} parent=0 // pred_fallthru
    _

// kernel: encoder_forward.3
$region0: #{encoder_forward.3}
  #allocation0 [shape = 'u32[]', space=smem, size = 0x4, offset = 0x4, fixed_abs, tag = 'smem constant byte address 0x4 - core index']
  #allocation1 [shape = 'u32[72,128]{1,0:T(1,128)}', space=vmem, size = 0x9000, scoped, tag = 'internal scratch']
  %s0 = inlined_call_operand.vmem [shape: s32[16,1], index: 0, kind: input, shape index: {}]
  %s1 = inlined_call_operand.vmem [shape: f32[2,8,16,512], index: 1, kind: input, shape index: {}]
  %s2 = inlined_call_operand.vmem [shape: bf16[2,128,512], index: 2, kind: input, shape index: {}]
  %s3 = inlined_call_operand.vmem [shape: f32[8,16,256], index: 3, kind: output, shape index: {0}]
  %s4 = inlined_call_operand.vmem [shape: f32[2,16,128], index: 4, kind: output, shape index: {1}]
  %s5 = inlined_call_operand.vmem [shape: f32[2,16,128], index: 5, kind: output, shape index: {2}]
  %6 = xla_tuple %s3, %s4, %s5
  %s7 = sld [smem:[#allocation0]]
  $region99: #{encoder_forward.3} parent=0
    _
  %s9 = ssub.s32 1, %s7
  %s10 = scalar_select 0, %s9, %s7
  $region1: #{encoder_forward.3} parent=0
    #allocation2 [shape = 'u8[131072]{0}', space=vmem, size = 0x20000, scoped, tag = 'output window, operand 0']
    loop: start=0, step=1, limit=4
    $region2: #{encoder_forward.3} parent=1 // loop_pre_header
      _
    $region3: #{encoder_forward.3} parent=1 // loop_header
      %s12 = sphi 0, %s16
      %p13 = scmp.ge.s32.totalorder %s12, 4
      %s19 = sphi 0, %s31
      %s20 = sphi 0, %s27
      %s21 = sphi 0, %s19
      %s22 = sphi 0, %s20
      %s23 = sphi 0, %s21
      %s24 = sphi 0, %s22
      %s32 = sphi 0, %s32
      %s34 = sphi 0, %s32
      %s35 = sphi 0, %s34
      %s49 = sphi 0, %s35
      %s67 = sphi 0, %s69
      %s70 = sphi 0, %s67
      %s71 = sphi 0, %s70
      %s87 = sphi 0, %s71
      %s93 = sphi 0, %s95
      %s96 = sphi 0, %s93
      %s97 = sphi 0, %s96
      %s113 = sphi 0, %s97
      %s131 = sphi 0, %s133
      %s134 = sphi 0, %s131
      %s135 = sphi 0, %s134
      %s151 = sphi 0, %s135
      %s157 = sphi 0, %s159
      %s160 = sphi 0, %s157
      %s161 = sphi 0, %s160
      %s177 = sphi 0, %s161
      %s183 = sphi 0, %s185
      %s186 = sphi 0, %s183
      %s187 = sphi 0, %s186
      %s203 = sphi 0, %s187
    $region4: #{encoder_forward.3} parent=1 // loop_header_branch
      %15 = sbr.rel (%p13) target = $region8
    $region5: #{encoder_forward.3} parent=1 // loop_body
      %s17 = ssub.s32 %s12, 1
      %s18 = ssub.s32 %s12, 2
      %s25 = sadd.s32 1, %s20
      %p26 = scmp.ge.s32.totalorder %s25, 1
      %s27 = scalar_select %p26, 0, %s25
      %s28 = sadd.s32 1, %s19
      %s29 = scalar_select %p26, %s28, %s19
      %p30 = scmp.ge.s32.totalorder %s29, 2
      %s31 = scalar_select %p30, 0, %s29
      %s33 = sadd.s32 %s32, 1
      %p36 = scmp.eq.s32.totalorder %s12, 1
      %p37 = scmp.ne.s32.totalorder %s32, %s34
      %p38 = scmp.eq.s32.totalorder %s12, 0
      %p39 = por %p37, %p38
      %p40 = scmp.ne.s32.totalorder %s32, %s34
      %p41 = scmp.eq.s32.totalorder %s17, 1
      %p42 = por %p40, %p41
      %p43 = scmp.ne.s32.totalorder %s34, %s35
      %p44 = scmp.eq.s32.totalorder %s17, 0
      %p45 = por %p43, %p44
      %p46 = scmp.ne.s32.totalorder %s34, %s35
      %p47 = scmp.eq.s32.totalorder %s18, 1
      %p48 = por %p46, %p47
      %p50 = scmp.ne.s32.totalorder %s35, %s49
      %p51 = scmp.eq.s32.totalorder %s18, 0
      %p52 = por %p50, %p51
      %s53 = ssub.s32 1, %s19
      %s54 = smul.u32 %s53, %s20
      %s55 = ssub.s32 0, %s20
      %s56 = smul.u32 %s19, %s55
      %s57 = sadd.s32 %s54, %s56
      %s58 = ssub.s32 1, %s31
      %s59 = smul.u32 %s58, %s27
      %s60 = ssub.s32 0, %s27
      %s61 = smul.u32 %s31, %s60
      %s62 = sadd.s32 %s59, %s61
      %s63 = ssub.s32 %s19, %s31
      %s64 = ssub.s32 %s57, %s62
      %s65 = sor.u32 %s63, %s64
      %p66 = scmp.eq.s32.totalorder %s65, 0
      %s68 = sadd.s32 %s67, 1
      %s69 = scalar_select %p66, %s67, %s68
      %p72 = pneg %p66
      %p73 = scmp.eq.s32.totalorder %s12, 1
      %p74 = por %p72, %p73
      %p75 = scmp.ne.s32.totalorder %s67, %s70
      %p76 = scmp.eq.s32.totalorder %s12, 0
      %p77 = por %p75, %p76
      %p78 = scmp.ne.s32.totalorder %s67, %s70
      %p79 = scmp.eq.s32.totalorder %s17, 1
      %p80 = por %p78, %p79
      %p81 = scmp.ne.s32.totalorder %s70, %s71
      %p82 = scmp.eq.s32.totalorder %s17, 0
      %p83 = por %p81, %p82
      %p84 = scmp.ne.s32.totalorder %s70, %s71
      %p85 = scmp.eq.s32.totalorder %s18, 1
      %p86 = por %p84, %p85
      %p88 = scmp.ne.s32.totalorder %s71, %s87
      %p89 = scmp.eq.s32.totalorder %s18, 0
      %p90 = por %p88, %p89
      %s91 = ssub.s32 %s19, %s31
      %p92 = scmp.eq.s32.totalorder %s91, 0
      %s94 = sadd.s32 %s93, 1
      %s95 = scalar_select %p92, %s93, %s94
      %p98 = pneg %p92
      %p99 = scmp.eq.s32.totalorder %s12, 1
      %p100 = por %p98, %p99
      %p101 = scmp.ne.s32.totalorder %s93, %s96
      %p102 = scmp.eq.s32.totalorder %s12, 0
      %p103 = por %p101, %p102
      %p104 = scmp.ne.s32.totalorder %s93, %s96
      %p105 = scmp.eq.s32.totalorder %s17, 1
      %p106 = por %p104, %p105
      %p107 = scmp.ne.s32.totalorder %s96, %s97
      %p108 = scmp.eq.s32.totalorder %s17, 0
      %p109 = por %p107, %p108
      %p110 = scmp.ne.s32.totalorder %s96, %s97
      %p111 = scmp.eq.s32.totalorder %s18, 1
      %p112 = por %p110, %p111
      %p114 = scmp.ne.s32.totalorder %s97, %s113
      %p115 = scmp.eq.s32.totalorder %s18, 0
      %p116 = por %p114, %p115
      %s117 = ssub.s32 1, %s19
      %s118 = smul.u32 %s117, %s20
      %s119 = ssub.s32 0, %s20
      %s120 = smul.u32 %s19, %s119
      %s121 = sadd.s32 %s118, %s120
      %s122 = ssub.s32 1, %s31
      %s123 = smul.u32 %s122, %s27
      %s124 = ssub.s32 0, %s27
      %s125 = smul.u32 %s31, %s124
      %s126 = sadd.s32 %s123, %s125
      %s127 = ssub.s32 %s121, %s126
      %s128 = ssub.s32 %s19, %s31
      %s129 = sor.u32 %s127, %s128
      %p130 = scmp.eq.s32.totalorder %s129, 0
      %s132 = sadd.s32 %s131, 1
      %s133 = scalar_select %p130, %s131, %s132
      %p136 = pneg %p130
      %p137 = scmp.eq.s32.totalorder %s12, 1
      %p138 = por %p136, %p137
      %p139 = scmp.ne.s32.totalorder %s131, %s134
      %p140 = scmp.eq.s32.totalorder %s12, 0
      %p141 = por %p139, %p140
      %p142 = scmp.ne.s32.totalorder %s131, %s134
      %p143 = scmp.eq.s32.totalorder %s17, 1
      %p144 = por %p142, %p143
      %p145 = scmp.ne.s32.totalorder %s134, %s135
      %p146 = scmp.eq.s32.totalorder %s17, 0
      %p147 = por %p145, %p146
      %p148 = scmp.ne.s32.totalorder %s134, %s135
      %p149 = scmp.eq.s32.totalorder %s18, 1
      %p150 = por %p148, %p149
      %p152 = scmp.ne.s32.totalorder %s135, %s151
      %p153 = scmp.eq.s32.totalorder %s18, 0
      %p154 = por %p152, %p153
      %s155 = ssub.s32 %s19, %s31
      %p156 = scmp.eq.s32.totalorder %s155, 0
      %s158 = sadd.s32 %s157, 1
      %s159 = scalar_select %p156, %s157, %s158
      %p162 = pneg %p156
      %p163 = scmp.eq.s32.totalorder %s12, 1
      %p164 = por %p162, %p163
      %p165 = scmp.ne.s32.totalorder %s157, %s160
      %p166 = scmp.eq.s32.totalorder %s12, 0
      %p167 = por %p165, %p166
      %p168 = scmp.ne.s32.totalorder %s157, %s160
      %p169 = scmp.eq.s32.totalorder %s17, 1
      %p170 = por %p168, %p169
      %p171 = scmp.ne.s32.totalorder %s160, %s161
      %p172 = scmp.eq.s32.totalorder %s17, 0
      %p173 = por %p171, %p172
      %p174 = scmp.ne.s32.totalorder %s160, %s161
      %p175 = scmp.eq.s32.totalorder %s18, 1
      %p176 = por %p174, %p175
      %p178 = scmp.ne.s32.totalorder %s161, %s177
      %p179 = scmp.eq.s32.totalorder %s18, 0
      %p180 = por %p178, %p179
      %s181 = ssub.s32 %s19, %s31
      %p182 = scmp.eq.s32.totalorder %s181, 0
      %s184 = sadd.s32 %s183, 1
      %s185 = scalar_select %p182, %s183, %s184
      %p188 = pneg %p182
      %p189 = scmp.eq.s32.totalorder %s12, 1
      %p190 = por %p188, %p189
      %p191 = scmp.ne.s32.totalorder %s183, %s186
      %p192 = scmp.eq.s32.totalorder %s12, 0
      %p193 = por %p191, %p192
      %p194 = scmp.ne.s32.totalorder %s183, %s186
      %p195 = scmp.eq.s32.totalorder %s17, 1
      %p196 = por %p194, %p195
      %p197 = scmp.ne.s32.totalorder %s186, %s187
      %p198 = scmp.eq.s32.totalorder %s17, 0
      %p199 = por %p197, %p198
      %p200 = scmp.ne.s32.totalorder %s186, %s187
      %p201 = scmp.eq.s32.totalorder %s18, 1
      %p202 = por %p200, %p201
      %p204 = scmp.ne.s32.totalorder %s187, %s203
      %p205 = scmp.eq.s32.totalorder %s18, 0
      %p206 = por %p204, %p205
      %p207 = scmp.le.s32.totalorder 1, %s12
      %p208 = scmp.lt.s32.totalorder %s12, 3
      %p209 = pnand %p207, %p208
      %p210 = pneg %p209
      // Predicated region
      $region9: #{encoder_forward.3} parent=5 // pred_check
        _
      $region10: #{encoder_forward.3} parent=5 // pred_check_branch
        %212 = sbr.rel (%p209) target = $region12
      $region11: #{encoder_forward.3} parent=5 // pred_region
        %s213 = ssub.s32 %s12, 1
        // Predicated region
        $region13: #{encoder_forward.3} parent=11 // pred_check
          %p214 = pneg %p45
        $region14: #{encoder_forward.3} parent=11 // pred_check_branch
          %216 = sbr.rel (%p214) target = $region16
        $region15: #{encoder_forward.3} parent=11 // pred_region
          _
        $region16: #{encoder_forward.3} parent=11 // pred_fallthru
          _
      $region12: #{encoder_forward.3} parent=5 // pred_fallthru
        _
      %p217 = scmp.lt.s32.totalorder %s12, 2
      // Predicated region
      $region17: #{encoder_forward.3} parent=5 // pred_check
        %p218 = pneg %p217
      $region18: #{encoder_forward.3} parent=5 // pred_check_branch
        %220 = sbr.rel (%p218) target = $region20
      $region19: #{encoder_forward.3} parent=5 // pred_region
        // Predicated region
        $region21: #{encoder_forward.3} parent=19 // pred_check
          %p221 = pneg %p77
        $region22: #{encoder_forward.3} parent=19 // pred_check_branch
          %223 = sbr.rel (%p221) target = $region24
        $region23: #{encoder_forward.3} parent=19 // pred_region
          %s224 = ssub.s32 1, %s19
          %s225 = smul.u32 %s224, %s20
          %s226 = ssub.s32 0, %s20
          %s227 = smul.u32 %s19, %s226
          %s228 = sadd.s32 %s225, %s227
          %s229 = smul.u32 8, %s228
          %p230 = scmp.lt.s32.totalorder %s19, 1
          %s231 = scalar_select %p230, %s19, 1
          %p232 = scmp.lt.s32.totalorder %s229, 7
          %s233 = scalar_select %p232, %s229, 7
          %s234 = smul.addr %s233, 8
          %s235 = smul.addr %s231, 64
          %s236 = sadd.s32 %s234, %s235
          %s237 = smul.addr %s236, 8
          %s238 = scalar_lea.vmem %s1, %s237
          %s239 = ssub.s32 1, %s19
          %s240 = smul.u32 %s239, %s20
          %s241 = ssub.s32 0, %s20
          %s242 = smul.u32 %s19, %s241
          %s243 = sadd.s32 %s240, %s242
          %s244 = smul.u32 8, %s243
        $region24: #{encoder_forward.3} parent=19 // pred_fallthru
          _
        // Predicated region
        $region25: #{encoder_forward.3} parent=19 // pred_check
          %p245 = pneg %p103
        $region26: #{encoder_forward.3} parent=19 // pred_check_branch
          %247 = sbr.rel (%p245) target = $region28
        $region27: #{encoder_forward.3} parent=19 // pred_region
          %p248 = scmp.lt.s32.totalorder %s19, 1
          %s249 = scalar_select %p248, %s19, 1
          %s250 = smul.addr %s249, 64
          %s251 = smul.addr %s250, 4
          %s252 = scalar_lea.vmem %s2, %s251
        $region28: #{encoder_forward.3} parent=19 // pred_fallthru
          _
      $region20: #{encoder_forward.3} parent=5 // pred_fallthru
        _
      %p253 = scmp.le.s32.totalorder 1, %s12
      %p254 = scmp.lt.s32.totalorder %s12, 3
      %p255 = pnand %p253, %p254
      %p256 = pneg %p255
      // Predicated region
      $region29: #{encoder_forward.3} parent=5 // pred_check
        _
      $region30: #{encoder_forward.3} parent=5 // pred_check_branch
        %258 = sbr.rel (%p255) target = $region32
      $region31: #{encoder_forward.3} parent=5 // pred_region
        %s259 = ssub.s32 %s12, 1
        %p260 = pneg %p45
        %p261 = pneg %p42
        %s262 = ssub.s32 1, %s21
        %s263 = smul.u32 %s262, %s22
        %s264 = ssub.s32 0, %s22
        %s265 = smul.u32 %s21, %s264
        %s266 = sadd.s32 %s263, %s265
        %s267 = smul.u32 8, %s266
        %p268 = scmp.lt.s32.totalorder %s21, 1
        %s269 = scalar_select %p268, %s21, 1
        %p270 = scmp.lt.s32.totalorder %s267, 7
        %s271 = scalar_select %p270, %s267, 7
        %s272 = smul.addr %s271, 8
        %s273 = smul.addr %s269, 64
        %s274 = sadd.s32 %s272, %s273
        %s275 = smul.addr %s274, 8
        %s276 = scalar_lea.vmem %s1, %s275
        %p277 = pneg %p83
        %p278 = pneg %p80
        %p279 = scmp.lt.s32.totalorder %s21, 1
        %s280 = scalar_select %p279, %s21, 1
        %s281 = smul.addr %s280, 64
        %s282 = smul.addr %s281, 4
        %s283 = scalar_lea.vmem %s2, %s282
        %p284 = pneg %p109
        %p285 = pneg %p106
        %p286 = pneg %p147
        %p287 = pneg %p144
        %s288 = sand.u32 %s134, 1
        %s289 = sand.u32 %s134, 1
        %s290 = smul.addr %s289, 128
        %s291 = scalar_lea.vmem [#allocation2], %s290
        %p292 = pneg %p173
        %p293 = pneg %p170
        %p294 = scmp.lt.s32.totalorder %s21, 1
        %s295 = scalar_select %p294, %s21, 1
        %s296 = smul.addr %s295, 2
        %s297 = smul.addr %s296, 8
        %s298 = scalar_lea.vmem %s4, %s297
        %p299 = pneg %p199
        %p300 = pneg %p196
        %p301 = scmp.lt.s32.totalorder %s21, 1
        %s302 = scalar_select %p301, %s21, 1
        %s303 = smul.addr %s302, 2
        %s304 = smul.addr %s303, 8
        %s305 = scalar_lea.vmem %s5, %s304
        %s306 = ssub.s32 1, %s21
        %s307 = smul.u32 %s306, %s22
        %s308 = ssub.s32 0, %s22
        %s309 = smul.u32 %s21, %s308
        %s310 = sadd.s32 %s307, %s309
        %s311 = smul.u32 8, %s310
        %p312 = scmp.lt.s32.totalorder %s21, 1
        %s313 = scalar_select %p312, %s21, 1
        %p314 = scmp.lt.s32.totalorder %s311, 7
        %s315 = scalar_select %p314, %s311, 7
        %s316 = smul.addr %s315, 8
        %s317 = smul.addr %s313, 64
        %s318 = sadd.s32 %s316, %s317
        %s319 = smul.addr %s318, 8
        %s320 = scalar_lea.vmem %s1, %s319
        %s321 = ssub.s32 1, %s21
        %s322 = smul.u32 %s321, %s22
        %s323 = ssub.s32 0, %s22
        %s324 = smul.u32 %s21, %s323
        %s325 = sadd.s32 %s322, %s324
        %s326 = smul.u32 8, %s325
        %p327 = scmp.lt.s32.totalorder %s21, 1
        %s328 = scalar_select %p327, %s21, 1
        %s329 = smul.addr %s328, 64
        %s330 = smul.addr %s329, 4
        %s331 = scalar_lea.vmem %s2, %s330
        %s332 = ssub.s32 1, %s21
        %s333 = smul.u32 %s332, %s22
        %s334 = ssub.s32 0, %s22
        %s335 = smul.u32 %s21, %s334
        %s336 = sadd.s32 %s333, %s335
        %s337 = smul.u32 8, %s336
        %p338 = scmp.lt.s32.totalorder %s21, 1
        %s339 = scalar_select %p338, %s21, 1
        %s340 = smul.addr %s339, 2
        %s341 = smul.addr %s340, 8
        %s342 = scalar_lea.vmem %s4, %s341
        %p343 = scmp.lt.s32.totalorder %s21, 1
        %s344 = scalar_select %p343, %s21, 1
        %s345 = smul.addr %s344, 2
        %s346 = smul.addr %s345, 8
        %s347 = scalar_lea.vmem %s5, %s346
        %p348 = scmp.eq.s32.totalorder %s22, 0
        // Predicated region
        $region33: #{encoder_forward.3} parent=31 // pred_check
          %p349 = pneg %p348
        $region34: #{encoder_forward.3} parent=31 // pred_check_branch
          %351 = sbr.rel (%p349) target = $region36
        $region35: #{encoder_forward.3} parent=31 // pred_region
          %352 = vst [vmem:[%s342] sm:$0xff] 0.0
          %353 = vst [vmem:[%s342 + $0x8] sm:$0xff] 0.0
          %354 = vst [vmem:[%s347] sm:$0xff] 0.0
          %355 = vst [vmem:[%s347 + $0x8] sm:$0xff] 0.0
        $region36: #{encoder_forward.3} parent=31 // pred_fallthru
          _
        %v356 = vld [vmem:[%s0] sm:$0xff]
        %v357 = vld [vmem:[%s0 + $0x8] sm:$0xff]
        %v358 = vld [vmem:[%s331] sm:$0xff]
        %v359 = vld [vmem:[%s331 + $0x8] sm:$0xff]
        %v360 = vld [vmem:[%s331 + $0x10] sm:$0xff]
        %v361 = vld [vmem:[%s331 + $0x18] sm:$0xff]
        %v362 = vld [vmem:[%s331 + $0x20] sm:$0xff]
        %v363 = vld [vmem:[%s331 + $0x28] sm:$0xff]
        %v364 = vld [vmem:[%s331 + $0x30] sm:$0xff]
        %v365 = vld [vmem:[%s331 + $0x38] sm:$0xff]
        %v366 = vld [vmem:[%s331 + $0x40] sm:$0xff]
        %v367 = vld [vmem:[%s331 + $0x48] sm:$0xff]
        %v368 = vld [vmem:[%s331 + $0x50] sm:$0xff]
        %v369 = vld [vmem:[%s331 + $0x58] sm:$0xff]
        %v370 = vld [vmem:[%s331 + $0x60] sm:$0xff]
        %v371 = vld [vmem:[%s331 + $0x68] sm:$0xff]
        %v372 = vld [vmem:[%s331 + $0x70] sm:$0xff]
        %v373 = vld [vmem:[%s331 + $0x78] sm:$0xff]
        %v374 = vld [vmem:[%s331 + $0x80] sm:$0xff]
        %v375 = vld [vmem:[%s331 + $0x88] sm:$0xff]
        %v376 = vld [vmem:[%s331 + $0x90] sm:$0xff]
        %v377 = vld [vmem:[%s331 + $0x98] sm:$0xff]
        %v378 = vld [vmem:[%s331 + $0xa0] sm:$0xff]
        %v379 = vld [vmem:[%s331 + $0xa8] sm:$0xff]
        %v380 = vld [vmem:[%s331 + $0xb0] sm:$0xff]
        %v381 = vld [vmem:[%s331 + $0xb8] sm:$0xff]
        %v382 = vld [vmem:[%s331 + $0xc0] sm:$0xff]
        %v383 = vld [vmem:[%s331 + $0xc8] sm:$0xff]
        %v384 = vld [vmem:[%s331 + $0xd0] sm:$0xff]
        %v385 = vld [vmem:[%s331 + $0xd8] sm:$0xff]
        %v386 = vld [vmem:[%s331 + $0xe0] sm:$0xff]
        %v387 = vld [vmem:[%s331 + $0xe8] sm:$0xff]
        %v388 = vld [vmem:[%s331 + $0xf0] sm:$0xff]
        %v389 = vld [vmem:[%s331 + $0xf8] sm:$0xff]
        %s390 = ssub.s32 1, %s21
        %s391 = smul.u32 %s390, %s22
        %s392 = ssub.s32 0, %s22
        %s393 = smul.u32 %s21, %s392
        %s394 = sadd.s32 %s391, %s393
        %s395 = smul.u32 %s394, 8
        %v396 = vld [vmem:[%s342] sm:$0xff]
        %v397 = vld [vmem:[%s342 + $0x8] sm:$0xff]
        %v398 = vld [vmem:[%s347] sm:$0xff]
        %v399 = vld [vmem:[%s347 + $0x8] sm:$0xff]
        %s400 = smul.u32 %s21, 7
        %s401 = sadd.s32 %s395, %s400
        %s402 = smul.u32 %s400, 8
        %s403 = smul.addr %s402, 8
        %s404 = scalar_lea.vmem %s320, %s403
        %v405 = vld [vmem:[%s404] sm:$0xff]
        %v406 = vld [vmem:[%s404 + $0x8] sm:$0xff]
        %v407 = vld [vmem:[%s404 + $0x10] sm:$0xff]
        %v408 = vld [vmem:[%s404 + $0x18] sm:$0xff]
        %v409 = vld [vmem:[%s404 + $0x20] sm:$0xff]
        %v410 = vld [vmem:[%s404 + $0x28] sm:$0xff]
        %v411 = vld [vmem:[%s404 + $0x30] sm:$0xff]
        %v412 = vld [vmem:[%s404 + $0x38] sm:$0xff]
        %v413 = vpack.c.bf16 %v397, %v396
        %v446 = vunpack.c.l.b16 %v358
        %v447 = vunpack.c.h.b16 %v358
        %v448 = vunpack.c.l.b16 %v359
        %v449 = vunpack.c.h.b16 %v359
        %v450 = vunpack.c.l.b16 %v360
        %v451 = vunpack.c.h.b16 %v360
        %v452 = vunpack.c.l.b16 %v361
        %v453 = vunpack.c.h.b16 %v361
        %v454 = vunpack.c.l.b16 %v362
        %v455 = vunpack.c.h.b16 %v362
        %v456 = vunpack.c.l.b16 %v363
        %v457 = vunpack.c.h.b16 %v363
        %v458 = vunpack.c.l.b16 %v364
        %v459 = vunpack.c.h.b16 %v364
        %v460 = vunpack.c.l.b16 %v365
        %v461 = vunpack.c.h.b16 %v365
        %v462 = vunpack.c.l.b16 %v366
        %v463 = vunpack.c.h.b16 %v366
        %v464 = vunpack.c.l.b16 %v367
        %v465 = vunpack.c.h.b16 %v367
        %v466 = vunpack.c.l.b16 %v368
        %v467 = vunpack.c.h.b16 %v368
        %v468 = vunpack.c.l.b16 %v369
        %v469 = vunpack.c.h.b16 %v369
        %v470 = vunpack.c.l.b16 %v370
        %v471 = vunpack.c.h.b16 %v370
        %v472 = vunpack.c.l.b16 %v371
        %v473 = vunpack.c.h.b16 %v371
        %v474 = vunpack.c.l.b16 %v372
        %v475 = vunpack.c.h.b16 %v372
        %v476 = vunpack.c.l.b16 %v373
        %v477 = vunpack.c.h.b16 %v373
        %v478 = vunpack.c.l.b16 %v374
        %v479 = vunpack.c.h.b16 %v374
        %v480 = vunpack.c.l.b16 %v375
        %v481 = vunpack.c.h.b16 %v375
        %v482 = vunpack.c.l.b16 %v376
        %v483 = vunpack.c.h.b16 %v376
        %v484 = vunpack.c.l.b16 %v377
        %v485 = vunpack.c.h.b16 %v377
        %v486 = vunpack.c.l.b16 %v378
        %v487 = vunpack.c.h.b16 %v378
        %v488 = vunpack.c.l.b16 %v379
        %v489 = vunpack.c.h.b16 %v379
        %v490 = vunpack.c.l.b16 %v380
        %v491 = vunpack.c.h.b16 %v380
        %v492 = vunpack.c.l.b16 %v381
        %v493 = vunpack.c.h.b16 %v381
        %v494 = vunpack.c.l.b16 %v382
        %v495 = vunpack.c.h.b16 %v382
        %v496 = vunpack.c.l.b16 %v383
        %v497 = vunpack.c.h.b16 %v383
        %v498 = vunpack.c.l.b16 %v384
        %v499 = vunpack.c.h.b16 %v384
        %v500 = vunpack.c.l.b16 %v385
        %v501 = vunpack.c.h.b16 %v385
        %v502 = vunpack.c.l.b16 %v386
        %v503 = vunpack.c.h.b16 %v386
        %v504 = vunpack.c.l.b16 %v387
        %v505 = vunpack.c.h.b16 %v387
        %v506 = vunpack.c.l.b16 %v388
        %v507 = vunpack.c.h.b16 %v388
        %v508 = vunpack.c.l.b16 %v389
        %v509 = vunpack.c.h.b16 %v389
        %v510 = vpack.c.b16 %v450, %v446
        %v511 = vpack.c.b16 %v451, %v447
        %v512 = vpack.c.b16 %v452, %v448
        %v513 = vpack.c.b16 %v453, %v449
        %v514 = vpack.c.b16 %v458, %v454
        %v515 = vpack.c.b16 %v459, %v455
        %v516 = vpack.c.b16 %v460, %v456
        %v517 = vpack.c.b16 %v461, %v457
        %v518 = vpack.c.b16 %v466, %v462
        %v519 = vpack.c.b16 %v467, %v463
        %v520 = vpack.c.b16 %v468, %v464
        %v521 = vpack.c.b16 %v469, %v465
        %v522 = vpack.c.b16 %v474, %v470
        %v523 = vpack.c.b16 %v475, %v471
        %v524 = vpack.c.b16 %v476, %v472
        %v525 = vpack.c.b16 %v477, %v473
        %v526 = vpack.c.b16 %v482, %v478
        %v527 = vpack.c.b16 %v483, %v479
        %v528 = vpack.c.b16 %v484, %v480
        %v529 = vpack.c.b16 %v485, %v481
        %v530 = vpack.c.b16 %v490, %v486
        %v531 = vpack.c.b16 %v491, %v487
        %v532 = vpack.c.b16 %v492, %v488
        %v533 = vpack.c.b16 %v493, %v489
        %v534 = vpack.c.b16 %v498, %v494
        %v535 = vpack.c.b16 %v499, %v495
        %v536 = vpack.c.b16 %v500, %v496
        %v537 = vpack.c.b16 %v501, %v497
        %v538 = vpack.c.b16 %v506, %v502
        %v539 = vpack.c.b16 %v507, %v503
        %v540 = vpack.c.b16 %v508, %v504
        %v541 = vpack.c.b16 %v509, %v505
        %574 = vmatpush.bf16.msra.mxu0 %v538
        %575 = vmatpush.bf16.msra.mxu0 %v534
        %576 = vmatpush.bf16.msra.mxu0 %v530
        %577 = vmatpush.bf16.msra.mxu0 %v526
        %578 = vmatpush.bf16.msra.mxu0 %v522
        %579 = vmatpush.bf16.msra.mxu0 %v518
        %580 = vmatpush.bf16.msra.mxu0 %v514
        %581 = vmatpush.bf16.msra.mxu0 %v510
        %582 = vmatmul.bf16.gmra.mxu0 %v413
        %v583 = vpop.f32.mrf.mxu0
        %v584 = vadd.f32 0.0, %v583
        %v585 = vpop.f32.mrf.mxu0
        %v586 = vadd.f32 0.0, %v585
        %587 = vdwg.mxu0
        %588 = vmatpush.bf16.msra.mxu0 %v539
        %589 = vmatpush.bf16.msra.mxu0 %v535
        %590 = vmatpush.bf16.msra.mxu0 %v531
        %591 = vmatpush.bf16.msra.mxu0 %v527
        %592 = vmatpush.bf16.msra.mxu0 %v523
        %593 = vmatpush.bf16.msra.mxu0 %v519
        %594 = vmatpush.bf16.msra.mxu0 %v515
        %595 = vmatpush.bf16.msra.mxu0 %v511
        %596 = vmatmul.bf16.gmra.mxu0 %v413
        %v597 = vpop.f32.mrf.mxu0
        %v598 = vadd.f32 0.0, %v597
        %v599 = vpop.f32.mrf.mxu0
        %v600 = vadd.f32 0.0, %v599
        %601 = vdwg.mxu0
        %602 = vmatpush.bf16.msra.mxu0 %v540
        %603 = vmatpush.bf16.msra.mxu0 %v536
        %604 = vmatpush.bf16.msra.mxu0 %v532
        %605 = vmatpush.bf16.msra.mxu0 %v528
        %606 = vmatpush.bf16.msra.mxu0 %v524
        %607 = vmatpush.bf16.msra.mxu0 %v520
        %608 = vmatpush.bf16.msra.mxu0 %v516
        %609 = vmatpush.bf16.msra.mxu0 %v512
        %610 = vmatmul.bf16.gmra.mxu0 %v413
        %v611 = vpop.f32.mrf.mxu0
        %v612 = vadd.f32 0.0, %v611
        %v613 = vpop.f32.mrf.mxu0
        %v614 = vadd.f32 0.0, %v613
        %615 = vdwg.mxu0
        %616 = vmatpush.bf16.msra.mxu0 %v541
        %617 = vmatpush.bf16.msra.mxu0 %v537
        %618 = vmatpush.bf16.msra.mxu0 %v533
        %619 = vmatpush.bf16.msra.mxu0 %v529
        %620 = vmatpush.bf16.msra.mxu0 %v525
        %621 = vmatpush.bf16.msra.mxu0 %v521
        %622 = vmatpush.bf16.msra.mxu0 %v517
        %623 = vmatpush.bf16.msra.mxu0 %v513
        %624 = vmatmul.bf16.gmra.mxu0 %v413
        %v625 = vpop.f32.mrf.mxu0
        %v626 = vadd.f32 0.0, %v625
        %v627 = vpop.f32.mrf.mxu0
        %v628 = vadd.f32 0.0, %v627
        %629 = vdwg.mxu0
        %v630 = vadd.f32 %v405, %v584
        %v631 = vadd.f32 %v406, %v598
        %v632 = vadd.f32 %v407, %v612
        %v633 = vadd.f32 %v408, %v626
        %v634 = vadd.f32 %v409, %v586
        %v635 = vadd.f32 %v410, %v600
        %v636 = vadd.f32 %v411, %v614
        %v637 = vadd.f32 %v412, %v628
        %v638 = vxor.u32 %v630, 2147483648
        %v639 = vxor.u32 %v634, 2147483648
        %v640 = vmul.f32 %v638, 1.442695
        %v641 = vpow.pop %v640
        %v642 = vmul.f32 %v639, 1.442695
        %v643 = vpow.pop %v642
        %v644 = vadd.f32 %v641, 1.0
        %v645 = vadd.f32 %v643, 1.0
        %v646 = vrcp.pop %v644
        %v647 = vmul.f32 %v644, %v646
        %v648 = vsub.f32 1.0, %v647
        %v649 = vmul.f32 %v646, %v648
        %v650 = vadd.f32 %v646, %v649
        %vm651 = vweird.f32 %v644
        %vm652 = vweird.f32 %v646
        %vm653 = vmor %vm651, %vm652
        %v654 = vsel %vm653, %v646, %v650
        %v655 = vand.u32 2147483647, %v644
        %vm656 = vcmp.eq.f32.partialorder %v655, 8.507059e+37
        %v657 = vand.u32 %v644, 2147483648
        %v658 = vor.u32 1.1754944e-38, %v657
        %v659 = vsel %vm656, %v658, %v654
        %v660 = vmul.f32 1.0, %v659
        %v661 = vrcp.pop %v645
        %v662 = vmul.f32 %v645, %v661
        %v663 = vsub.f32 1.0, %v662
        %v664 = vmul.f32 %v661, %v663
        %v665 = vadd.f32 %v661, %v664
        %vm666 = vweird.f32 %v645
        %vm667 = vweird.f32 %v661
        %vm668 = vmor %vm666, %vm667
        %v669 = vsel %vm668, %v661, %v665
        %v670 = vand.u32 2147483647, %v645
        %vm671 = vcmp.eq.f32.partialorder %v670, 8.507059e+37
        %v672 = vand.u32 %v645, 2147483648
        %v673 = vor.u32 1.1754944e-38, %v672
        %v674 = vsel %vm671, %v673, %v669
        %v675 = vmul.f32 1.0, %v674
        %v676 = vxor.u32 %v631, 2147483648
        %v677 = vxor.u32 %v635, 2147483648
        %v678 = vmul.f32 %v676, 1.442695
        %v679 = vpow.pop %v678
        %v680 = vmul.f32 %v677, 1.442695
        %v681 = vpow.pop %v680
        %v682 = vadd.f32 %v679, 1.0
        %v683 = vadd.f32 %v681, 1.0
        %v684 = vrcp.pop %v682
        %v685 = vmul.f32 %v682, %v684
        %v686 = vsub.f32 1.0, %v685
        %v687 = vmul.f32 %v684, %v686
        %v688 = vadd.f32 %v684, %v687
        %vm689 = vweird.f32 %v682
        %vm690 = vweird.f32 %v684
        %vm691 = vmor %vm689, %vm690
        %v692 = vsel %vm691, %v684, %v688
        %v693 = vand.u32 2147483647, %v682
        %vm694 = vcmp.eq.f32.partialorder %v693, 8.507059e+37
        %v695 = vand.u32 %v682, 2147483648
        %v696 = vor.u32 1.1754944e-38, %v695
        %v697 = vsel %vm694, %v696, %v692
        %v698 = vmul.f32 1.0, %v697
        %v699 = vrcp.pop %v683
        %v700 = vmul.f32 %v683, %v699
        %v701 = vsub.f32 1.0, %v700
        %v702 = vmul.f32 %v699, %v701
        %v703 = vadd.f32 %v699, %v702
        %vm704 = vweird.f32 %v683
        %vm705 = vweird.f32 %v699
        %vm706 = vmor %vm704, %vm705
        %v707 = vsel %vm706, %v699, %v703
        %v708 = vand.u32 2147483647, %v683
        %vm709 = vcmp.eq.f32.partialorder %v708, 8.507059e+37
        %v710 = vand.u32 %v683, 2147483648
        %v711 = vor.u32 1.1754944e-38, %v710
        %v712 = vsel %vm709, %v711, %v707
        %v713 = vmul.f32 1.0, %v712
        %v714 = vtanh.pop %v632
        %v715 = vtanh.pop %v636
        %v716 = vxor.u32 %v633, 2147483648
        %v717 = vxor.u32 %v637, 2147483648
        %v718 = vmul.f32 %v716, 1.442695
        %v719 = vpow.pop %v718
        %v720 = vmul.f32 %v717, 1.442695
        %v721 = vpow.pop %v720
        %v722 = vadd.f32 %v719, 1.0
        %v723 = vadd.f32 %v721, 1.0
        %v724 = vrcp.pop %v722
        %v725 = vmul.f32 %v722, %v724
        %v726 = vsub.f32 1.0, %v725
        %v727 = vmul.f32 %v724, %v726
        %v728 = vadd.f32 %v724, %v727
        %vm729 = vweird.f32 %v722
        %vm730 = vweird.f32 %v724
        %vm731 = vmor %vm729, %vm730
        %v732 = vsel %vm731, %v724, %v728
        %v733 = vand.u32 2147483647, %v722
        %vm734 = vcmp.eq.f32.partialorder %v733, 8.507059e+37
        %v735 = vand.u32 %v722, 2147483648
        %v736 = vor.u32 1.1754944e-38, %v735
        %v737 = vsel %vm734, %v736, %v732
        %v738 = vmul.f32 1.0, %v737
        %v739 = vrcp.pop %v723
        %v740 = vmul.f32 %v723, %v739
        %v741 = vsub.f32 1.0, %v740
        %v742 = vmul.f32 %v739, %v741
        %v743 = vadd.f32 %v739, %v742
        %vm744 = vweird.f32 %v723
        %vm745 = vweird.f32 %v739
        %vm746 = vmor %vm744, %vm745
        %v747 = vsel %vm746, %v739, %v743
        %v748 = vand.u32 2147483647, %v723
        %vm749 = vcmp.eq.f32.partialorder %v748, 8.507059e+37
        %v750 = vand.u32 %v723, 2147483648
        %v751 = vor.u32 1.1754944e-38, %v750
        %v752 = vsel %vm749, %v751, %v747
        %v753 = vmul.f32 1.0, %v752
        %v754 = vmul.f32 %v698, %v398
        %v755 = vmul.f32 %v713, %v399
        %v756 = vmul.f32 %v660, %v714
        %v757 = vmul.f32 %v675, %v715
        %v758 = vadd.f32 %v754, %v756
        %v759 = vadd.f32 %v755, %v757
        %v760 = vtanh.pop %v758
        %v761 = vtanh.pop %v759
        %v762 = vmul.f32 %v738, %v760
        %v763 = vmul.f32 %v753, %v761
        %v764 = vstv %s401
        %vm765 = vcmp.lt.s32.totalorder %v764, %v356
        %vm766 = vcmp.lt.s32.totalorder %v764, %v357
        %v767 = vsel %vm765, 1, 0
        %v768 = vsel %vm766, 1, 0
        %769 = vset.pattern.permute.xlu0 0
        %770 = vperm.xlu0 %769, %v767
        %v771 = vpop.permute.xlu0 %770
        %772 = vset.pattern.permute.xlu0 0
        %773 = vperm.xlu0 %772, %v768
        %v774 = vpop.permute.xlu0 %773
        %vm775 = vcmp.eq.s32.totalorder %v771, 1
        %vm776 = vcmp.eq.s32.totalorder %v774, 1
        %v777 = vsel %vm775, %v762, 0.0
        %v778 = vsel %vm776, %v763, 0.0
        %s779 = smul.u32 %s400, 16
        %s780 = scalar_lea.vmem %s291, %s779 [#allocation2]
        %781 = vst [vmem:[%s780] sm:$0xff] %v777
        %782 = vst [vmem:[%s780 + $0x8] sm:$0xff] %v778
        %v783 = vsel %vm775, %v762, %v396
        %v784 = vsel %vm776, %v763, %v397
        %v785 = vsel %vm775, %v758, %v398
        %v786 = vsel %vm776, %v759, %v399
        %s787 = smul.u32 %s21, 6
        %s788 = sadd.s32 %s390, %s787
        %s789 = sadd.s32 %s395, %s788
        %s790 = smul.u32 %s788, 8
        %s791 = smul.addr %s790, 8
        %s792 = scalar_lea.vmem %s320, %s791
        %v793 = vld [vmem:[%s792] sm:$0xff]
        %v794 = vld [vmem:[%s792 + $0x8] sm:$0xff]
        %v795 = vld [vmem:[%s792 + $0x10] sm:$0xff]
        %v796 = vld [vmem:[%s792 + $0x18] sm:$0xff]
        %v797 = vld [vmem:[%s792 + $0x20] sm:$0xff]
        %v798 = vld [vmem:[%s792 + $0x28] sm:$0xff]
        %v799 = vld [vmem:[%s792 + $0x30] sm:$0xff]
        %v800 = vld [vmem:[%s792 + $0x38] sm:$0xff]
        %v801 = vpack.c.bf16 %v784, %v783
        %802 = vmatpush.bf16.msra.mxu0 %v538
        %803 = vmatpush.bf16.msra.mxu0 %v534
        %804 = vmatpush.bf16.msra.mxu0 %v530
        %805 = vmatpush.bf16.msra.mxu0 %v526
        %806 = vmatpush.bf16.msra.mxu0 %v522
        %807 = vmatpush.bf16.msra.mxu0 %v518
        %808 = vmatpush.bf16.msra.mxu0 %v514
        %809 = vmatpush.bf16.msra.mxu0 %v510
        %810 = vmatmul.bf16.gmra.mxu0 %v801
        %v811 = vpop.f32.mrf.mxu0
        %v812 = vadd.f32 0.0, %v811
        %v813 = vpop.f32.mrf.mxu0
        %v814 = vadd.f32 0.0, %v813
        %815 = vdwg.mxu0
        %816 = vmatpush.bf16.msra.mxu0 %v539
        %817 = vmatpush.bf16.msra.mxu0 %v535
        %818 = vmatpush.bf16.msra.mxu0 %v531
        %819 = vmatpush.bf16.msra.mxu0 %v527
        %820 = vmatpush.bf16.msra.mxu0 %v523
        %821 = vmatpush.bf16.msra.mxu0 %v519
        %822 = vmatpush.bf16.msra.mxu0 %v515
        %823 = vmatpush.bf16.msra.mxu0 %v511
        %824 = vmatmul.bf16.gmra.mxu0 %v801
        %v825 = vpop.f32.mrf.mxu0
        %v826 = vadd.f32 0.0, %v825
        %v827 = vpop.f32.mrf.mxu0
        %v828 = vadd.f32 0.0, %v827
        %829 = vdwg.mxu0
        %830 = vmatpush.bf16.msra.mxu0 %v540
        %831 = vmatpush.bf16.msra.mxu0 %v536
        %832 = vmatpush.bf16.msra.mxu0 %v532
        %833 = vmatpush.bf16.msra.mxu0 %v528
        %834 = vmatpush.bf16.msra.mxu0 %v524
        %835 = vmatpush.bf16.msra.mxu0 %v520
        %836 = vmatpush.bf16.msra.mxu0 %v516
        %837 = vmatpush.bf16.msra.mxu0 %v512
        %838 = vmatmul.bf16.gmra.mxu0 %v801
        %v839 = vpop.f32.mrf.mxu0
        %v840 = vadd.f32 0.0, %v839
        %v841 = vpop.f32.mrf.mxu0
        %v842 = vadd.f32 0.0, %v841
        %843 = vdwg.mxu0
        %844 = vmatpush.bf16.msra.mxu0 %v541
        %845 = vmatpush.bf16.msra.mxu0 %v537
        %846 = vmatpush.bf16.msra.mxu0 %v533
        %847 = vmatpush.bf16.msra.mxu0 %v529
        %848 = vmatpush.bf16.msra.mxu0 %v525
        %849 = vmatpush.bf16.msra.mxu0 %v521
        %850 = vmatpush.bf16.msra.mxu0 %v517
        %851 = vmatpush.bf16.msra.mxu0 %v513
        %852 = vmatmul.bf16.gmra.mxu0 %v801
        %v853 = vpop.f32.mrf.mxu0
        %v854 = vadd.f32 0.0, %v853
        %v855 = vpop.f32.mrf.mxu0
        %v856 = vadd.f32 0.0, %v855
        %857 = vdwg.mxu0
        %v858 = vadd.f32 %v793, %v812
        %v859 = vadd.f32 %v794, %v826
        %v860 = vadd.f32 %v795, %v840
        %v861 = vadd.f32 %v796, %v854
        %v862 = vadd.f32 %v797, %v814
        %v863 = vadd.f32 %v798, %v828
        %v864 = vadd.f32 %v799, %v842
        %v865 = vadd.f32 %v800, %v856
        %v866 = vxor.u32 %v858, 2147483648
        %v867 = vxor.u32 %v862, 2147483648
        %v868 = vmul.f32 %v866, 1.442695
        %v869 = vpow.pop %v868
        %v870 = vmul.f32 %v867, 1.442695
        %v871 = vpow.pop %v870
        %v872 = vadd.f32 %v869, 1.0
        %v873 = vadd.f32 %v871, 1.0
        %v874 = vrcp.pop %v872
        %v875 = vmul.f32 %v872, %v874
        %v876 = vsub.f32 1.0, %v875
        %v877 = vmul.f32 %v874, %v876
        %v878 = vadd.f32 %v874, %v877
        %vm879 = vweird.f32 %v872
        %vm880 = vweird.f32 %v874
        %vm881 = vmor %vm879, %vm880
        %v882 = vsel %vm881, %v874, %v878
        %v883 = vand.u32 2147483647, %v872
        %vm884 = vcmp.eq.f32.partialorder %v883, 8.507059e+37
        %v885 = vand.u32 %v872, 2147483648
        %v886 = vor.u32 1.1754944e-38, %v885
        %v887 = vsel %vm884, %v886, %v882
        %v888 = vmul.f32 1.0, %v887
        %v889 = vrcp.pop %v873
        %v890 = vmul.f32 %v873, %v889
        %v891 = vsub.f32 1.0, %v890
        %v892 = vmul.f32 %v889, %v891
        %v893 = vadd.f32 %v889, %v892
        %vm894 = vweird.f32 %v873
        %vm895 = vweird.f32 %v889
        %vm896 = vmor %vm894, %vm895
        %v897 = vsel %vm896, %v889, %v893
        %v898 = vand.u32 2147483647, %v873
        %vm899 = vcmp.eq.f32.partialorder %v898, 8.507059e+37
        %v900 = vand.u32 %v873, 2147483648
        %v901 = vor.u32 1.1754944e-38, %v900
        %v902 = vsel %vm899, %v901, %v897
        %v903 = vmul.f32 1.0, %v902
        %v904 = vxor.u32 %v859, 2147483648
        %v905 = vxor.u32 %v863, 2147483648
        %v906 = vmul.f32 %v904, 1.442695
        %v907 = vpow.pop %v906
        %v908 = vmul.f32 %v905, 1.442695
        %v909 = vpow.pop %v908
        %v910 = vadd.f32 %v907, 1.0
        %v911 = vadd.f32 %v909, 1.0
        %v912 = vrcp.pop %v910
        %v913 = vmul.f32 %v910, %v912
        %v914 = vsub.f32 1.0, %v913
        %v915 = vmul.f32 %v912, %v914
        %v916 = vadd.f32 %v912, %v915
        %vm917 = vweird.f32 %v910
        %vm918 = vweird.f32 %v912
        %vm919 = vmor %vm917, %vm918
        %v920 = vsel %vm919, %v912, %v916
        %v921 = vand.u32 2147483647, %v910
        %vm922 = vcmp.eq.f32.partialorder %v921, 8.507059e+37
        %v923 = vand.u32 %v910, 2147483648
        %v924 = vor.u32 1.1754944e-38, %v923
        %v925 = vsel %vm922, %v924, %v920
        %v926 = vmul.f32 1.0, %v925
        %v927 = vrcp.pop %v911
        %v928 = vmul.f32 %v911, %v927
        %v929 = vsub.f32 1.0, %v928
        %v930 = vmul.f32 %v927, %v929
        %v931 = vadd.f32 %v927, %v930
        %vm932 = vweird.f32 %v911
        %vm933 = vweird.f32 %v927
        %vm934 = vmor %vm932, %vm933
        %v935 = vsel %vm934, %v927, %v931
        %v936 = vand.u32 2147483647, %v911
        %vm937 = vcmp.eq.f32.partialorder %v936, 8.507059e+37
        %v938 = vand.u32 %v911, 2147483648
        %v939 = vor.u32 1.1754944e-38, %v938
        %v940 = vsel %vm937, %v939, %v935
        %v941 = vmul.f32 1.0, %v940
        %v942 = vtanh.pop %v860
        %v943 = vtanh.pop %v864
        %v944 = vxor.u32 %v861, 2147483648
        %v945 = vxor.u32 %v865, 2147483648
        %v946 = vmul.f32 %v944, 1.442695
        %v947 = vpow.pop %v946
        %v948 = vmul.f32 %v945, 1.442695
        %v949 = vpow.pop %v948
        %v950 = vadd.f32 %v947, 1.0
        %v951 = vadd.f32 %v949, 1.0
        %v952 = vrcp.pop %v950
        %v953 = vmul.f32 %v950, %v952
        %v954 = vsub.f32 1.0, %v953
        %v955 = vmul.f32 %v952, %v954
        %v956 = vadd.f32 %v952, %v955
        %vm957 = vweird.f32 %v950
        %vm958 = vweird.f32 %v952
        %vm959 = vmor %vm957, %vm958
        %v960 = vsel %vm959, %v952, %v956
        %v961 = vand.u32 2147483647, %v950
        %vm962 = vcmp.eq.f32.partialorder %v961, 8.507059e+37
        %v963 = vand.u32 %v950, 2147483648
        %v964 = vor.u32 1.1754944e-38, %v963
        %v965 = vsel %vm962, %v964, %v960
        %v966 = vmul.f32 1.0, %v965
        %v967 = vrcp.pop %v951
        %v968 = vmul.f32 %v951, %v967
        %v969 = vsub.f32 1.0, %v968
        %v970 = vmul.f32 %v967, %v969
        %v971 = vadd.f32 %v967, %v970
        %vm972 = vweird.f32 %v951
        %vm973 = vweird.f32 %v967
        %vm974 = vmor %vm972, %vm973
        %v975 = vsel %vm974, %v967, %v971
        %v976 = vand.u32 2147483647, %v951
        %vm977 = vcmp.eq.f32.partialorder %v976, 8.507059e+37
        %v978 = vand.u32 %v951, 2147483648
        %v979 = vor.u32 1.1754944e-38, %v978
        %v980 = vsel %vm977, %v979, %v975
        %v981 = vmul.f32 1.0, %v980
        %v982 = vmul.f32 %v926, %v785
        %v983 = vmul.f32 %v941, %v786
        %v984 = vmul.f32 %v888, %v942
        %v985 = vmul.f32 %v903, %v943
        %v986 = vadd.f32 %v982, %v984
        %v987 = vadd.f32 %v983, %v985
        %v988 = vtanh.pop %v986
        %v989 = vtanh.pop %v987
        %v990 = vmul.f32 %v966, %v988
        %v991 = vmul.f32 %v981, %v989
        %v992 = vstv %s789
        %vm993 = vcmp.lt.s32.totalorder %v992, %v356
        %vm994 = vcmp.lt.s32.totalorder %v992, %v357
        %v995 = vsel %vm993, 1, 0
        %v996 = vsel %vm994, 1, 0
        %997 = vset.pattern.permute.xlu0 0
        %998 = vperm.xlu0 %997, %v995
        %v999 = vpop.permute.xlu0 %998
        %1000 = vset.pattern.permute.xlu0 0
        %1001 = vperm.xlu0 %1000, %v996
        %v1002 = vpop.permute.xlu0 %1001
        %vm1003 = vcmp.eq.s32.totalorder %v999, 1
        %vm1004 = vcmp.eq.s32.totalorder %v1002, 1
        %v1005 = vsel %vm1003, %v990, 0.0
        %v1006 = vsel %vm1004, %v991, 0.0
        %s1007 = smul.u32 %s788, 16
        %s1008 = scalar_lea.vmem %s291, %s1007 [#allocation2]
        %1009 = vst [vmem:[%s1008] sm:$0xff] %v1005
        %1010 = vst [vmem:[%s1008 + $0x8] sm:$0xff] %v1006
        %v1011 = vsel %vm1003, %v990, %v783
        %v1012 = vsel %vm1004, %v991, %v784
        %v1013 = vsel %vm1003, %v986, %v785
        %v1014 = vsel %vm1004, %v987, %v786
        %s1015 = smul.u32 %s390, 2
        %s1016 = smul.u32 %s21, 5
        %s1017 = sadd.s32 %s1015, %s1016
        %s1018 = sadd.s32 %s395, %s1017
        %s1019 = smul.u32 %s1017, 8
        %s1020 = smul.addr %s1019, 8
        %s1021 = scalar_lea.vmem %s320, %s1020
        %v1022 = vld [vmem:[%s1021] sm:$0xff]
        %v1023 = vld [vmem:[%s1021 + $0x8] sm:$0xff]
        %v1024 = vld [vmem:[%s1021 + $0x10] sm:$0xff]
        %v1025 = vld [vmem:[%s1021 + $0x18] sm:$0xff]
        %v1026 = vld [vmem:[%s1021 + $0x20] sm:$0xff]
        %v1027 = vld [vmem:[%s1021 + $0x28] sm:$0xff]
        %v1028 = vld [vmem:[%s1021 + $0x30] sm:$0xff]
        %v1029 = vld [vmem:[%s1021 + $0x38] sm:$0xff]
        %v1030 = vpack.c.bf16 %v1012, %v1011
        %1031 = vmatpush.bf16.msra.mxu0 %v538
        %1032 = vmatpush.bf16.msra.mxu0 %v534
        %1033 = vmatpush.bf16.msra.mxu0 %v530
        %1034 = vmatpush.bf16.msra.mxu0 %v526
        %1035 = vmatpush.bf16.msra.mxu0 %v522
        %1036 = vmatpush.bf16.msra.mxu0 %v518
        %1037 = vmatpush.bf16.msra.mxu0 %v514
        %1038 = vmatpush.bf16.msra.mxu0 %v510
        %1039 = vmatmul.bf16.gmra.mxu0 %v1030
        %v1040 = vpop.f32.mrf.mxu0
        %v1041 = vadd.f32 0.0, %v1040
        %v1042 = vpop.f32.mrf.mxu0
        %v1043 = vadd.f32 0.0, %v1042
        %1044 = vdwg.mxu0
        %1045 = vmatpush.bf16.msra.mxu0 %v539
        %1046 = vmatpush.bf16.msra.mxu0 %v535
        %1047 = vmatpush.bf16.msra.mxu0 %v531
        %1048 = vmatpush.bf16.msra.mxu0 %v527
        %1049 = vmatpush.bf16.msra.mxu0 %v523
        %1050 = vmatpush.bf16.msra.mxu0 %v519
        %1051 = vmatpush.bf16.msra.mxu0 %v515
        %1052 = vmatpush.bf16.msra.mxu0 %v511
        %1053 = vmatmul.bf16.gmra.mxu0 %v1030
        %v1054 = vpop.f32.mrf.mxu0
        %v1055 = vadd.f32 0.0, %v1054
        %v1056 = vpop.f32.mrf.mxu0
        %v1057 = vadd.f32 0.0, %v1056
        %1058 = vdwg.mxu0
        %1059 = vmatpush.bf16.msra.mxu0 %v540
        %1060 = vmatpush.bf16.msra.mxu0 %v536
        %1061 = vmatpush.bf16.msra.mxu0 %v532
        %1062 = vmatpush.bf16.msra.mxu0 %v528
        %1063 = vmatpush.bf16.msra.mxu0 %v524
        %1064 = vmatpush.bf16.msra.mxu0 %v520
        %1065 = vmatpush.bf16.msra.mxu0 %v516
        %1066 = vmatpush.bf16.msra.mxu0 %v512
        %1067 = vmatmul.bf16.gmra.mxu0 %v1030
        %v1068 = vpop.f32.mrf.mxu0
        %v1069 = vadd.f32 0.0, %v1068
        %v1070 = vpop.f32.mrf.mxu0
        %v1071 = vadd.f32 0.0, %v1070
        %1072 = vdwg.mxu0
        %1073 = vmatpush.bf16.msra.mxu0 %v541
        %1074 = vmatpush.bf16.msra.mxu0 %v537
        %1075 = vmatpush.bf16.msra.mxu0 %v533
        %1076 = vmatpush.bf16.msra.mxu0 %v529
        %1077 = vmatpush.bf16.msra.mxu0 %v525
        %1078 = vmatpush.bf16.msra.mxu0 %v521
        %1079 = vmatpush.bf16.msra.mxu0 %v517
        %1080 = vmatpush.bf16.msra.mxu0 %v513
        %1081 = vmatmul.bf16.gmra.mxu0 %v1030
        %v1082 = vpop.f32.mrf.mxu0
        %v1083 = vadd.f32 0.0, %v1082
        %v1084 = vpop.f32.mrf.mxu0
        %v1085 = vadd.f32 0.0, %v1084
        %1086 = vdwg.mxu0
        %v1087 = vadd.f32 %v1022, %v1041
        %v1088 = vadd.f32 %v1023, %v1055
        %v1089 = vadd.f32 %v1024, %v1069
        %v1090 = vadd.f32 %v1025, %v1083
        %v1091 = vadd.f32 %v1026, %v1043
        %v1092 = vadd.f32 %v1027, %v1057
        %v1093 = vadd.f32 %v1028, %v1071
        %v1094 = vadd.f32 %v1029, %v1085
        %v1095 = vxor.u32 %v1087, 2147483648
        %v1096 = vxor.u32 %v1091, 2147483648
        %v1097 = vmul.f32 %v1095, 1.442695
        %v1098 = vpow.pop %v1097
        %v1099 = vmul.f32 %v1096, 1.442695
        %v1100 = vpow.pop %v1099
        %v1101 = vadd.f32 %v1098, 1.0
        %v1102 = vadd.f32 %v1100, 1.0
        %v1103 = vrcp.pop %v1101
        %v1104 = vmul.f32 %v1101, %v1103
        %v1105 = vsub.f32 1.0, %v1104
        %v1106 = vmul.f32 %v1103, %v1105
        %v1107 = vadd.f32 %v1103, %v1106
        %vm1108 = vweird.f32 %v1101
        %vm1109 = vweird.f32 %v1103
        %vm1110 = vmor %vm1108, %vm1109
        %v1111 = vsel %vm1110, %v1103, %v1107
        %v1112 = vand.u32 2147483647, %v1101
        %vm1113 = vcmp.eq.f32.partialorder %v1112, 8.507059e+37
        %v1114 = vand.u32 %v1101, 2147483648
        %v1115 = vor.u32 1.1754944e-38, %v1114
        %v1116 = vsel %vm1113, %v1115, %v1111
        %v1117 = vmul.f32 1.0, %v1116
        %v1118 = vrcp.pop %v1102
        %v1119 = vmul.f32 %v1102, %v1118
        %v1120 = vsub.f32 1.0, %v1119
        %v1121 = vmul.f32 %v1118, %v1120
        %v1122 = vadd.f32 %v1118, %v1121
        %vm1123 = vweird.f32 %v1102
        %vm1124 = vweird.f32 %v1118
        %vm1125 = vmor %vm1123, %vm1124
        %v1126 = vsel %vm1125, %v1118, %v1122
        %v1127 = vand.u32 2147483647, %v1102
        %vm1128 = vcmp.eq.f32.partialorder %v1127, 8.507059e+37
        %v1129 = vand.u32 %v1102, 2147483648
        %v1130 = vor.u32 1.1754944e-38, %v1129
        %v1131 = vsel %vm1128, %v1130, %v1126
        %v1132 = vmul.f32 1.0, %v1131
        %v1133 = vxor.u32 %v1088, 2147483648
        %v1134 = vxor.u32 %v1092, 2147483648
        %v1135 = vmul.f32 %v1133, 1.442695
        %v1136 = vpow.pop %v1135
        %v1137 = vmul.f32 %v1134, 1.442695
        %v1138 = vpow.pop %v1137
        %v1139 = vadd.f32 %v1136, 1.0
        %v1140 = vadd.f32 %v1138, 1.0
        %v1141 = vrcp.pop %v1139
        %v1142 = vmul.f32 %v1139, %v1141
        %v1143 = vsub.f32 1.0, %v1142
        %v1144 = vmul.f32 %v1141, %v1143
        %v1145 = vadd.f32 %v1141, %v1144
        %vm1146 = vweird.f32 %v1139
        %vm1147 = vweird.f32 %v1141
        %vm1148 = vmor %vm1146, %vm1147
        %v1149 = vsel %vm1148, %v1141, %v1145
        %v1150 = vand.u32 2147483647, %v1139
        %vm1151 = vcmp.eq.f32.partialorder %v1150, 8.507059e+37
        %v1152 = vand.u32 %v1139, 2147483648
        %v1153 = vor.u32 1.1754944e-38, %v1152
        %v1154 = vsel %vm1151, %v1153, %v1149
        %v1155 = vmul.f32 1.0, %v1154
        %v1156 = vrcp.pop %v1140
        %v1157 = vmul.f32 %v1140, %v1156
        %v1158 = vsub.f32 1.0, %v1157
        %v1159 = vmul.f32 %v1156, %v1158
        %v1160 = vadd.f32 %v1156, %v1159
        %vm1161 = vweird.f32 %v1140
        %vm1162 = vweird.f32 %v1156
        %vm1163 = vmor %vm1161, %vm1162
        %v1164 = vsel %vm1163, %v1156, %v1160
        %v1165 = vand.u32 2147483647, %v1140
        %vm1166 = vcmp.eq.f32.partialorder %v1165, 8.507059e+37
        %v1167 = vand.u32 %v1140, 2147483648
        %v1168 = vor.u32 1.1754944e-38, %v1167
        %v1169 = vsel %vm1166, %v1168, %v1164
        %v1170 = vmul.f32 1.0, %v1169
        %v1171 = vtanh.pop %v1089
        %v1172 = vtanh.pop %v1093
        %v1173 = vxor.u32 %v1090, 2147483648
        %v1174 = vxor.u32 %v1094, 2147483648
        %v1175 = vmul.f32 %v1173, 1.442695
        %v1176 = vpow.pop %v1175
        %v1177 = vmul.f32 %v1174, 1.442695
        %v1178 = vpow.pop %v1177
        %v1179 = vadd.f32 %v1176, 1.0
        %v1180 = vadd.f32 %v1178, 1.0
        %v1181 = vrcp.pop %v1179
        %v1182 = vmul.f32 %v1179, %v1181
        %v1183 = vsub.f32 1.0, %v1182
        %v1184 = vmul.f32 %v1181, %v1183
        %v1185 = vadd.f32 %v1181, %v1184
        %vm1186 = vweird.f32 %v1179
        %vm1187 = vweird.f32 %v1181
        %vm1188 = vmor %vm1186, %vm1187
        %v1189 = vsel %vm1188, %v1181, %v1185
        %v1190 = vand.u32 2147483647, %v1179
        %vm1191 = vcmp.eq.f32.partialorder %v1190, 8.507059e+37
        %v1192 = vand.u32 %v1179, 2147483648
        %v1193 = vor.u32 1.1754944e-38, %v1192
        %v1194 = vsel %vm1191, %v1193, %v1189
        %v1195 = vmul.f32 1.0, %v1194
        %v1196 = vrcp.pop %v1180
        %v1197 = vmul.f32 %v1180, %v1196
        %v1198 = vsub.f32 1.0, %v1197
        %v1199 = vmul.f32 %v1196, %v1198
        %v1200 = vadd.f32 %v1196, %v1199
        %vm1201 = vweird.f32 %v1180
        %vm1202 = vweird.f32 %v1196
        %vm1203 = vmor %vm1201, %vm1202
        %v1204 = vsel %vm1203, %v1196, %v1200
        %v1205 = vand.u32 2147483647, %v1180
        %vm1206 = vcmp.eq.f32.partialorder %v1205, 8.507059e+37
        %v1207 = vand.u32 %v1180, 2147483648
        %v1208 = vor.u32 1.1754944e-38, %v1207
        %v1209 = vsel %vm1206, %v1208, %v1204
        %v1210 = vmul.f32 1.0, %v1209
        %v1211 = vmul.f32 %v1155, %v1013
        %v1212 = vmul.f32 %v1170, %v1014
        %v1213 = vmul.f32 %v1117, %v1171
        %v1214 = vmul.f32 %v1132, %v1172
        %v1215 = vadd.f32 %v1211, %v1213
        %v1216 = vadd.f32 %v1212, %v1214
        %v1217 = vtanh.pop %v1215
        %v1218 = vtanh.pop %v1216
        %v1219 = vmul.f32 %v1195, %v1217
        %v1220 = vmul.f32 %v1210, %v1218
        %v1221 = vstv %s1018
        %vm1222 = vcmp.lt.s32.totalorder %v1221, %v356
        %vm1223 = vcmp.lt.s32.totalorder %v1221, %v357
        %v1224 = vsel %vm1222, 1, 0
        %v1225 = vsel %vm1223, 1, 0
        %1226 = vset.pattern.permute.xlu0 0
        %1227 = vperm.xlu0 %1226, %v1224
        %v1228 = vpop.permute.xlu0 %1227
        %1229 = vset.pattern.permute.xlu0 0
        %1230 = vperm.xlu0 %1229, %v1225
        %v1231 = vpop.permute.xlu0 %1230
        %vm1232 = vcmp.eq.s32.totalorder %v1228, 1
        %vm1233 = vcmp.eq.s32.totalorder %v1231, 1
        %v1234 = vsel %vm1232, %v1219, 0.0
        %v1235 = vsel %vm1233, %v1220, 0.0
        %s1236 = smul.u32 %s1017, 16
        %s1237 = scalar_lea.vmem %s291, %s1236 [#allocation2]
        %1238 = vst [vmem:[%s1237] sm:$0xff] %v1234
        %1239 = vst [vmem:[%s1237 + $0x8] sm:$0xff] %v1235
        %v1240 = vsel %vm1232, %v1219, %v1011
        %v1241 = vsel %vm1233, %v1220, %v1012
        %v1242 = vsel %vm1232, %v1215, %v1013
        %v1243 = vsel %vm1233, %v1216, %v1014
        %s1244 = smul.u32 %s390, 3
        %s1245 = smul.u32 %s21, 4
        %s1246 = sadd.s32 %s1244, %s1245
        %s1247 = sadd.s32 %s395, %s1246
        %s1248 = smul.u32 %s1246, 8
        %s1249 = smul.addr %s1248, 8
        %s1250 = scalar_lea.vmem %s320, %s1249
        %v1251 = vld [vmem:[%s1250] sm:$0xff]
        %v1252 = vld [vmem:[%s1250 + $0x8] sm:$0xff]
        %v1253 = vld [vmem:[%s1250 + $0x10] sm:$0xff]
        %v1254 = vld [vmem:[%s1250 + $0x18] sm:$0xff]
        %v1255 = vld [vmem:[%s1250 + $0x20] sm:$0xff]
        %v1256 = vld [vmem:[%s1250 + $0x28] sm:$0xff]
        %v1257 = vld [vmem:[%s1250 + $0x30] sm:$0xff]
        %v1258 = vld [vmem:[%s1250 + $0x38] sm:$0xff]
        %v1259 = vpack.c.bf16 %v1241, %v1240
        %1260 = vmatpush.bf16.msra.mxu0 %v538
        %1261 = vmatpush.bf16.msra.mxu0 %v534
        %1262 = vmatpush.bf16.msra.mxu0 %v530
        %1263 = vmatpush.bf16.msra.mxu0 %v526
        %1264 = vmatpush.bf16.msra.mxu0 %v522
        %1265 = vmatpush.bf16.msra.mxu0 %v518
        %1266 = vmatpush.bf16.msra.mxu0 %v514
        %1267 = vmatpush.bf16.msra.mxu0 %v510
        %1268 = vmatmul.bf16.gmra.mxu0 %v1259
        %v1269 = vpop.f32.mrf.mxu0
        %v1270 = vadd.f32 0.0, %v1269
        %v1271 = vpop.f32.mrf.mxu0
        %v1272 = vadd.f32 0.0, %v1271
        %1273 = vdwg.mxu0
        %1274 = vmatpush.bf16.msra.mxu0 %v539
        %1275 = vmatpush.bf16.msra.mxu0 %v535
        %1276 = vmatpush.bf16.msra.mxu0 %v531
        %1277 = vmatpush.bf16.msra.mxu0 %v527
        %1278 = vmatpush.bf16.msra.mxu0 %v523
        %1279 = vmatpush.bf16.msra.mxu0 %v519
        %1280 = vmatpush.bf16.msra.mxu0 %v515
        %1281 = vmatpush.bf16.msra.mxu0 %v511
        %1282 = vmatmul.bf16.gmra.mxu0 %v1259
        %v1283 = vpop.f32.mrf.mxu0
        %v1284 = vadd.f32 0.0, %v1283
        %v1285 = vpop.f32.mrf.mxu0
        %v1286 = vadd.f32 0.0, %v1285
        %1287 = vdwg.mxu0
        %1288 = vmatpush.bf16.msra.mxu0 %v540
        %1289 = vmatpush.bf16.msra.mxu0 %v536
        %1290 = vmatpush.bf16.msra.mxu0 %v532
        %1291 = vmatpush.bf16.msra.mxu0 %v528
        %1292 = vmatpush.bf16.msra.mxu0 %v524
        %1293 = vmatpush.bf16.msra.mxu0 %v520
        %1294 = vmatpush.bf16.msra.mxu0 %v516
        %1295 = vmatpush.bf16.msra.mxu0 %v512
        %1296 = vmatmul.bf16.gmra.mxu0 %v1259
        %v1297 = vpop.f32.mrf.mxu0
        %v1298 = vadd.f32 0.0, %v1297
        %v1299 = vpop.f32.mrf.mxu0
        %v1300 = vadd.f32 0.0, %v1299
        %1301 = vdwg.mxu0
        %1302 = vmatpush.bf16.msra.mxu0 %v541
        %1303 = vmatpush.bf16.msra.mxu0 %v537
        %1304 = vmatpush.bf16.msra.mxu0 %v533
        %1305 = vmatpush.bf16.msra.mxu0 %v529
        %1306 = vmatpush.bf16.msra.mxu0 %v525
        %1307 = vmatpush.bf16.msra.mxu0 %v521
        %1308 = vmatpush.bf16.msra.mxu0 %v517
        %1309 = vmatpush.bf16.msra.mxu0 %v513
        %1310 = vmatmul.bf16.gmra.mxu0 %v1259
        %v1311 = vpop.f32.mrf.mxu0
        %v1312 = vadd.f32 0.0, %v1311
        %v1313 = vpop.f32.mrf.mxu0
        %v1314 = vadd.f32 0.0, %v1313
        %1315 = vdwg.mxu0
        %v1316 = vadd.f32 %v1251, %v1270
        %v1317 = vadd.f32 %v1252, %v1284
        %v1318 = vadd.f32 %v1253, %v1298
        %v1319 = vadd.f32 %v1254, %v1312
        %v1320 = vadd.f32 %v1255, %v1272
        %v1321 = vadd.f32 %v1256, %v1286
        %v1322 = vadd.f32 %v1257, %v1300
        %v1323 = vadd.f32 %v1258, %v1314
        %v1324 = vxor.u32 %v1316, 2147483648
        %v1325 = vxor.u32 %v1320, 2147483648
        %v1326 = vmul.f32 %v1324, 1.442695
        %v1327 = vpow.pop %v1326
        %v1328 = vmul.f32 %v1325, 1.442695
        %v1329 = vpow.pop %v1328
        %v1330 = vadd.f32 %v1327, 1.0
        %v1331 = vadd.f32 %v1329, 1.0
        %v1332 = vrcp.pop %v1330
        %v1333 = vmul.f32 %v1330, %v1332
        %v1334 = vsub.f32 1.0, %v1333
        %v1335 = vmul.f32 %v1332, %v1334
        %v1336 = vadd.f32 %v1332, %v1335
        %vm1337 = vweird.f32 %v1330
        %vm1338 = vweird.f32 %v1332
        %vm1339 = vmor %vm1337, %vm1338
        %v1340 = vsel %vm1339, %v1332, %v1336
        %v1341 = vand.u32 2147483647, %v1330
        %vm1342 = vcmp.eq.f32.partialorder %v1341, 8.507059e+37
        %v1343 = vand.u32 %v1330, 2147483648
        %v1344 = vor.u32 1.1754944e-38, %v1343
        %v1345 = vsel %vm1342, %v1344, %v1340
        %v1346 = vmul.f32 1.0, %v1345
        %v1347 = vrcp.pop %v1331
        %v1348 = vmul.f32 %v1331, %v1347
        %v1349 = vsub.f32 1.0, %v1348
        %v1350 = vmul.f32 %v1347, %v1349
        %v1351 = vadd.f32 %v1347, %v1350
        %vm1352 = vweird.f32 %v1331
        %vm1353 = vweird.f32 %v1347
        %vm1354 = vmor %vm1352, %vm1353
        %v1355 = vsel %vm1354, %v1347, %v1351
        %v1356 = vand.u32 2147483647, %v1331
        %vm1357 = vcmp.eq.f32.partialorder %v1356, 8.507059e+37
        %v1358 = vand.u32 %v1331, 2147483648
        %v1359 = vor.u32 1.1754944e-38, %v1358
        %v1360 = vsel %vm1357, %v1359, %v1355
        %v1361 = vmul.f32 1.0, %v1360
        %v1362 = vxor.u32 %v1317, 2147483648
        %v1363 = vxor.u32 %v1321, 2147483648
        %v1364 = vmul.f32 %v1362, 1.442695
        %v1365 = vpow.pop %v1364
        %v1366 = vmul.f32 %v1363, 1.442695
        %v1367 = vpow.pop %v1366
        %v1368 = vadd.f32 %v1365, 1.0
        %v1369 = vadd.f32 %v1367, 1.0
        %v1370 = vrcp.pop %v1368
        %v1371 = vmul.f32 %v1368, %v1370
        %v1372 = vsub.f32 1.0, %v1371
        %v1373 = vmul.f32 %v1370, %v1372
        %v1374 = vadd.f32 %v1370, %v1373
        %vm1375 = vweird.f32 %v1368
        %vm1376 = vweird.f32 %v1370
        %vm1377 = vmor %vm1375, %vm1376
        %v1378 = vsel %vm1377, %v1370, %v1374
        %v1379 = vand.u32 2147483647, %v1368
        %vm1380 = vcmp.eq.f32.partialorder %v1379, 8.507059e+37
        %v1381 = vand.u32 %v1368, 2147483648
        %v1382 = vor.u32 1.1754944e-38, %v1381
        %v1383 = vsel %vm1380, %v1382, %v1378
        %v1384 = vmul.f32 1.0, %v1383
        %v1385 = vrcp.pop %v1369
        %v1386 = vmul.f32 %v1369, %v1385
        %v1387 = vsub.f32 1.0, %v1386
        %v1388 = vmul.f32 %v1385, %v1387
        %v1389 = vadd.f32 %v1385, %v1388
        %vm1390 = vweird.f32 %v1369
        %vm1391 = vweird.f32 %v1385
        %vm1392 = vmor %vm1390, %vm1391
        %v1393 = vsel %vm1392, %v1385, %v1389
        %v1394 = vand.u32 2147483647, %v1369
        %vm1395 = vcmp.eq.f32.partialorder %v1394, 8.507059e+37
        %v1396 = vand.u32 %v1369, 2147483648
        %v1397 = vor.u32 1.1754944e-38, %v1396
        %v1398 = vsel %vm1395, %v1397, %v1393
        %v1399 = vmul.f32 1.0, %v1398
        %v1400 = vtanh.pop %v1318
        %v1401 = vtanh.pop %v1322
        %v1402 = vxor.u32 %v1319, 2147483648
        %v1403 = vxor.u32 %v1323, 2147483648
        %v1404 = vmul.f32 %v1402, 1.442695
        %v1405 = vpow.pop %v1404
        %v1406 = vmul.f32 %v1403, 1.442695
        %v1407 = vpow.pop %v1406
        %v1408 = vadd.f32 %v1405, 1.0
        %v1409 = vadd.f32 %v1407, 1.0
        %v1410 = vrcp.pop %v1408
        %v1411 = vmul.f32 %v1408, %v1410
        %v1412 = vsub.f32 1.0, %v1411
        %v1413 = vmul.f32 %v1410, %v1412
        %v1414 = vadd.f32 %v1410, %v1413
        %vm1415 = vweird.f32 %v1408
        %vm1416 = vweird.f32 %v1410
        %vm1417 = vmor %vm1415, %vm1416
        %v1418 = vsel %vm1417, %v1410, %v1414
        %v1419 = vand.u32 2147483647, %v1408
        %vm1420 = vcmp.eq.f32.partialorder %v1419, 8.507059e+37
        %v1421 = vand.u32 %v1408, 2147483648
        %v1422 = vor.u32 1.1754944e-38, %v1421
        %v1423 = vsel %vm1420, %v1422, %v1418
        %v1424 = vmul.f32 1.0, %v1423
        %v1425 = vrcp.pop %v1409
        %v1426 = vmul.f32 %v1409, %v1425
        %v1427 = vsub.f32 1.0, %v1426
        %v1428 = vmul.f32 %v1425, %v1427
        %v1429 = vadd.f32 %v1425, %v1428
        %vm1430 = vweird.f32 %v1409
        %vm1431 = vweird.f32 %v1425
        %vm1432 = vmor %vm1430, %vm1431
        %v1433 = vsel %vm1432, %v1425, %v1429
        %v1434 = vand.u32 2147483647, %v1409
        %vm1435 = vcmp.eq.f32.partialorder %v1434, 8.507059e+37
        %v1436 = vand.u32 %v1409, 2147483648
        %v1437 = vor.u32 1.1754944e-38, %v1436
        %v1438 = vsel %vm1435, %v1437, %v1433
        %v1439 = vmul.f32 1.0, %v1438
        %v1440 = vmul.f32 %v1384, %v1242
        %v1441 = vmul.f32 %v1399, %v1243
        %v1442 = vmul.f32 %v1346, %v1400
        %v1443 = vmul.f32 %v1361, %v1401
        %v1444 = vadd.f32 %v1440, %v1442
        %v1445 = vadd.f32 %v1441, %v1443
        %v1446 = vtanh.pop %v1444
        %v1447 = vtanh.pop %v1445
        %v1448 = vmul.f32 %v1424, %v1446
        %v1449 = vmul.f32 %v1439, %v1447
        %v1450 = vstv %s1247
        %vm1451 = vcmp.lt.s32.totalorder %v1450, %v356
        %vm1452 = vcmp.lt.s32.totalorder %v1450, %v357
        %v1453 = vsel %vm1451, 1, 0
        %v1454 = vsel %vm1452, 1, 0
        %1455 = vset.pattern.permute.xlu0 0
        %1456 = vperm.xlu0 %1455, %v1453
        %v1457 = vpop.permute.xlu0 %1456
        %1458 = vset.pattern.permute.xlu0 0
        %1459 = vperm.xlu0 %1458, %v1454
        %v1460 = vpop.permute.xlu0 %1459
        %vm1461 = vcmp.eq.s32.totalorder %v1457, 1
        %vm1462 = vcmp.eq.s32.totalorder %v1460, 1
        %v1463 = vsel %vm1461, %v1448, 0.0
        %v1464 = vsel %vm1462, %v1449, 0.0
        %s1465 = smul.u32 %s1246, 16
        %s1466 = scalar_lea.vmem %s291, %s1465 [#allocation2]
        %1467 = vst [vmem:[%s1466] sm:$0xff] %v1463
        %1468 = vst [vmem:[%s1466 + $0x8] sm:$0xff] %v1464
        %v1469 = vsel %vm1461, %v1448, %v1240
        %v1470 = vsel %vm1462, %v1449, %v1241
        %v1471 = vsel %vm1461, %v1444, %v1242
        %v1472 = vsel %vm1462, %v1445, %v1243
        %s1473 = smul.u32 %s390, 4
        %s1474 = smul.u32 %s21, 3
        %s1475 = sadd.s32 %s1473, %s1474
        %s1476 = sadd.s32 %s395, %s1475
        %s1477 = smul.u32 %s1475, 8
        %s1478 = smul.addr %s1477, 8
        %s1479 = scalar_lea.vmem %s320, %s1478
        %v1480 = vld [vmem:[%s1479] sm:$0xff]
        %v1481 = vld [vmem:[%s1479 + $0x8] sm:$0xff]
        %v1482 = vld [vmem:[%s1479 + $0x10] sm:$0xff]
        %v1483 = vld [vmem:[%s1479 + $0x18] sm:$0xff]
        %v1484 = vld [vmem:[%s1479 + $0x20] sm:$0xff]
        %v1485 = vld [vmem:[%s1479 + $0x28] sm:$0xff]
        %v1486 = vld [vmem:[%s1479 + $0x30] sm:$0xff]
        %v1487 = vld [vmem:[%s1479 + $0x38] sm:$0xff]
        %v1488 = vpack.c.bf16 %v1470, %v1469
        %1489 = vmatpush.bf16.msra.mxu0 %v538
        %1490 = vmatpush.bf16.msra.mxu0 %v534
        %1491 = vmatpush.bf16.msra.mxu0 %v530
        %1492 = vmatpush.bf16.msra.mxu0 %v526
        %1493 = vmatpush.bf16.msra.mxu0 %v522
        %1494 = vmatpush.bf16.msra.mxu0 %v518
        %1495 = vmatpush.bf16.msra.mxu0 %v514
        %1496 = vmatpush.bf16.msra.mxu0 %v510
        %1497 = vmatmul.bf16.gmra.mxu0 %v1488
        %v1498 = vpop.f32.mrf.mxu0
        %v1499 = vadd.f32 0.0, %v1498
        %v1500 = vpop.f32.mrf.mxu0
        %v1501 = vadd.f32 0.0, %v1500
        %1502 = vdwg.mxu0
        %1503 = vmatpush.bf16.msra.mxu0 %v539
        %1504 = vmatpush.bf16.msra.mxu0 %v535
        %1505 = vmatpush.bf16.msra.mxu0 %v531
        %1506 = vmatpush.bf16.msra.mxu0 %v527
        %1507 = vmatpush.bf16.msra.mxu0 %v523
        %1508 = vmatpush.bf16.msra.mxu0 %v519
        %1509 = vmatpush.bf16.msra.mxu0 %v515
        %1510 = vmatpush.bf16.msra.mxu0 %v511
        %1511 = vmatmul.bf16.gmra.mxu0 %v1488
        %v1512 = vpop.f32.mrf.mxu0
        %v1513 = vadd.f32 0.0, %v1512
        %v1514 = vpop.f32.mrf.mxu0
        %v1515 = vadd.f32 0.0, %v1514
        %1516 = vdwg.mxu0
        %1517 = vmatpush.bf16.msra.mxu0 %v540
        %1518 = vmatpush.bf16.msra.mxu0 %v536
        %1519 = vmatpush.bf16.msra.mxu0 %v532
        %1520 = vmatpush.bf16.msra.mxu0 %v528
        %1521 = vmatpush.bf16.msra.mxu0 %v524
        %1522 = vmatpush.bf16.msra.mxu0 %v520
        %1523 = vmatpush.bf16.msra.mxu0 %v516
        %1524 = vmatpush.bf16.msra.mxu0 %v512
        %1525 = vmatmul.bf16.gmra.mxu0 %v1488
        %v1526 = vpop.f32.mrf.mxu0
        %v1527 = vadd.f32 0.0, %v1526
        %v1528 = vpop.f32.mrf.mxu0
        %v1529 = vadd.f32 0.0, %v1528
        %1530 = vdwg.mxu0
        %1531 = vmatpush.bf16.msra.mxu0 %v541
        %1532 = vmatpush.bf16.msra.mxu0 %v537
        %1533 = vmatpush.bf16.msra.mxu0 %v533
        %1534 = vmatpush.bf16.msra.mxu0 %v529
        %1535 = vmatpush.bf16.msra.mxu0 %v525
        %1536 = vmatpush.bf16.msra.mxu0 %v521
        %1537 = vmatpush.bf16.msra.mxu0 %v517
        %1538 = vmatpush.bf16.msra.mxu0 %v513
        %1539 = vmatmul.bf16.gmra.mxu0 %v1488
        %v1540 = vpop.f32.mrf.mxu0
        %v1541 = vadd.f32 0.0, %v1540
        %v1542 = vpop.f32.mrf.mxu0
        %v1543 = vadd.f32 0.0, %v1542
        %1544 = vdwg.mxu0
        %v1545 = vadd.f32 %v1480, %v1499
        %v1546 = vadd.f32 %v1481, %v1513
        %v1547 = vadd.f32 %v1482, %v1527
        %v1548 = vadd.f32 %v1483, %v1541
        %v1549 = vadd.f32 %v1484, %v1501
        %v1550 = vadd.f32 %v1485, %v1515
        %v1551 = vadd.f32 %v1486, %v1529
        %v1552 = vadd.f32 %v1487, %v1543
        %v1553 = vxor.u32 %v1545, 2147483648
        %v1554 = vxor.u32 %v1549, 2147483648
        %v1555 = vmul.f32 %v1553, 1.442695
        %v1556 = vpow.pop %v1555
        %v1557 = vmul.f32 %v1554, 1.442695
        %v1558 = vpow.pop %v1557
        %v1559 = vadd.f32 %v1556, 1.0
        %v1560 = vadd.f32 %v1558, 1.0
        %v1561 = vrcp.pop %v1559
        %v1562 = vmul.f32 %v1559, %v1561
        %v1563 = vsub.f32 1.0, %v1562
        %v1564 = vmul.f32 %v1561, %v1563
        %v1565 = vadd.f32 %v1561, %v1564
        %vm1566 = vweird.f32 %v1559
        %vm1567 = vweird.f32 %v1561
        %vm1568 = vmor %vm1566, %vm1567
        %v1569 = vsel %vm1568, %v1561, %v1565
        %v1570 = vand.u32 2147483647, %v1559
        %vm1571 = vcmp.eq.f32.partialorder %v1570, 8.507059e+37
        %v1572 = vand.u32 %v1559, 2147483648
        %v1573 = vor.u32 1.1754944e-38, %v1572
        %v1574 = vsel %vm1571, %v1573, %v1569
        %v1575 = vmul.f32 1.0, %v1574
        %v1576 = vrcp.pop %v1560
        %v1577 = vmul.f32 %v1560, %v1576
        %v1578 = vsub.f32 1.0, %v1577
        %v1579 = vmul.f32 %v1576, %v1578
        %v1580 = vadd.f32 %v1576, %v1579
        %vm1581 = vweird.f32 %v1560
        %vm1582 = vweird.f32 %v1576
        %vm1583 = vmor %vm1581, %vm1582
        %v1584 = vsel %vm1583, %v1576, %v1580
        %v1585 = vand.u32 2147483647, %v1560
        %vm1586 = vcmp.eq.f32.partialorder %v1585, 8.507059e+37
        %v1587 = vand.u32 %v1560, 2147483648
        %v1588 = vor.u32 1.1754944e-38, %v1587
        %v1589 = vsel %vm1586, %v1588, %v1584
        %v1590 = vmul.f32 1.0, %v1589
        %v1591 = vxor.u32 %v1546, 2147483648
        %v1592 = vxor.u32 %v1550, 2147483648
        %v1593 = vmul.f32 %v1591, 1.442695
        %v1594 = vpow.pop %v1593
        %v1595 = vmul.f32 %v1592, 1.442695
        %v1596 = vpow.pop %v1595
        %v1597 = vadd.f32 %v1594, 1.0
        %v1598 = vadd.f32 %v1596, 1.0
        %v1599 = vrcp.pop %v1597
        %v1600 = vmul.f32 %v1597, %v1599
        %v1601 = vsub.f32 1.0, %v1600
        %v1602 = vmul.f32 %v1599, %v1601
        %v1603 = vadd.f32 %v1599, %v1602
        %vm1604 = vweird.f32 %v1597
        %vm1605 = vweird.f32 %v1599
        %vm1606 = vmor %vm1604, %vm1605
        %v1607 = vsel %vm1606, %v1599, %v1603
        %v1608 = vand.u32 2147483647, %v1597
        %vm1609 = vcmp.eq.f32.partialorder %v1608, 8.507059e+37
        %v1610 = vand.u32 %v1597, 2147483648
        %v1611 = vor.u32 1.1754944e-38, %v1610
        %v1612 = vsel %vm1609, %v1611, %v1607
        %v1613 = vmul.f32 1.0, %v1612
        %v1614 = vrcp.pop %v1598
        %v1615 = vmul.f32 %v1598, %v1614
        %v1616 = vsub.f32 1.0, %v1615
        %v1617 = vmul.f32 %v1614, %v1616
        %v1618 = vadd.f32 %v1614, %v1617
        %vm1619 = vweird.f32 %v1598
        %vm1620 = vweird.f32 %v1614
        %vm1621 = vmor %vm1619, %vm1620
        %v1622 = vsel %vm1621, %v1614, %v1618
        %v1623 = vand.u32 2147483647, %v1598
        %vm1624 = vcmp.eq.f32.partialorder %v1623, 8.507059e+37
        %v1625 = vand.u32 %v1598, 2147483648
        %v1626 = vor.u32 1.1754944e-38, %v1625
        %v1627 = vsel %vm1624, %v1626, %v1622
        %v1628 = vmul.f32 1.0, %v1627
        %v1629 = vtanh.pop %v1547
        %v1630 = vtanh.pop %v1551
        %v1631 = vxor.u32 %v1548, 2147483648
        %v1632 = vxor.u32 %v1552, 2147483648
        %v1633 = vmul.f32 %v1631, 1.442695
        %v1634 = vpow.pop %v1633
        %v1635 = vmul.f32 %v1632, 1.442695
        %v1636 = vpow.pop %v1635
        %v1637 = vadd.f32 %v1634, 1.0
        %v1638 = vadd.f32 %v1636, 1.0
        %v1639 = vrcp.pop %v1637
        %v1640 = vmul.f32 %v1637, %v1639
        %v1641 = vsub.f32 1.0, %v1640
        %v1642 = vmul.f32 %v1639, %v1641
        %v1643 = vadd.f32 %v1639, %v1642
        %vm1644 = vweird.f32 %v1637
        %vm1645 = vweird.f32 %v1639
        %vm1646 = vmor %vm1644, %vm1645
        %v1647 = vsel %vm1646, %v1639, %v1643
        %v1648 = vand.u32 2147483647, %v1637
        %vm1649 = vcmp.eq.f32.partialorder %v1648, 8.507059e+37
        %v1650 = vand.u32 %v1637, 2147483648
        %v1651 = vor.u32 1.1754944e-38, %v1650
        %v1652 = vsel %vm1649, %v1651, %v1647
        %v1653 = vmul.f32 1.0, %v1652
        %v1654 = vrcp.pop %v1638
        %v1655 = vmul.f32 %v1638, %v1654
        %v1656 = vsub.f32 1.0, %v1655
        %v1657 = vmul.f32 %v1654, %v1656
        %v1658 = vadd.f32 %v1654, %v1657
        %vm1659 = vweird.f32 %v1638
        %vm1660 = vweird.f32 %v1654
        %vm1661 = vmor %vm1659, %vm1660
        %v1662 = vsel %vm1661, %v1654, %v1658
        %v1663 = vand.u32 2147483647, %v1638
        %vm1664 = vcmp.eq.f32.partialorder %v1663, 8.507059e+37
        %v1665 = vand.u32 %v1638, 2147483648
        %v1666 = vor.u32 1.1754944e-38, %v1665
        %v1667 = vsel %vm1664, %v1666, %v1662
        %v1668 = vmul.f32 1.0, %v1667
        %v1669 = vmul.f32 %v1613, %v1471
        %v1670 = vmul.f32 %v1628, %v1472
        %v1671 = vmul.f32 %v1575, %v1629
        %v1672 = vmul.f32 %v1590, %v1630
        %v1673 = vadd.f32 %v1669, %v1671
        %v1674 = vadd.f32 %v1670, %v1672
        %v1675 = vtanh.pop %v1673
        %v1676 = vtanh.pop %v1674
        %v1677 = vmul.f32 %v1653, %v1675
        %v1678 = vmul.f32 %v1668, %v1676
        %v1679 = vstv %s1476
        %vm1680 = vcmp.lt.s32.totalorder %v1679, %v356
        %vm1681 = vcmp.lt.s32.totalorder %v1679, %v357
        %v1682 = vsel %vm1680, 1, 0
        %v1683 = vsel %vm1681, 1, 0
        %1684 = vset.pattern.permute.xlu0 0
        %1685 = vperm.xlu0 %1684, %v1682
        %v1686 = vpop.permute.xlu0 %1685
        %1687 = vset.pattern.permute.xlu0 0
        %1688 = vperm.xlu0 %1687, %v1683
        %v1689 = vpop.permute.xlu0 %1688
        %vm1690 = vcmp.eq.s32.totalorder %v1686, 1
        %vm1691 = vcmp.eq.s32.totalorder %v1689, 1
        %v1692 = vsel %vm1690, %v1677, 0.0
        %v1693 = vsel %vm1691, %v1678, 0.0
        %s1694 = smul.u32 %s1475, 16
        %s1695 = scalar_lea.vmem %s291, %s1694 [#allocation2]
        %1696 = vst [vmem:[%s1695] sm:$0xff] %v1692
        %1697 = vst [vmem:[%s1695 + $0x8] sm:$0xff] %v1693
        %v1698 = vsel %vm1690, %v1677, %v1469
        %v1699 = vsel %vm1691, %v1678, %v1470
        %v1700 = vsel %vm1690, %v1673, %v1471
        %v1701 = vsel %vm1691, %v1674, %v1472
        %s1702 = smul.u32 %s390, 5
        %s1703 = smul.u32 %s21, 2
        %s1704 = sadd.s32 %s1702, %s1703
        %s1705 = sadd.s32 %s395, %s1704
        %s1706 = smul.u32 %s1704, 8
        %s1707 = smul.addr %s1706, 8
        %s1708 = scalar_lea.vmem %s320, %s1707
        %v1709 = vld [vmem:[%s1708] sm:$0xff]
        %v1710 = vld [vmem:[%s1708 + $0x8] sm:$0xff]
        %v1711 = vld [vmem:[%s1708 + $0x10] sm:$0xff]
        %v1712 = vld [vmem:[%s1708 + $0x18] sm:$0xff]
        %v1713 = vld [vmem:[%s1708 + $0x20] sm:$0xff]
        %v1714 = vld [vmem:[%s1708 + $0x28] sm:$0xff]
        %v1715 = vld [vmem:[%s1708 + $0x30] sm:$0xff]
        %v1716 = vld [vmem:[%s1708 + $0x38] sm:$0xff]
        %v1717 = vpack.c.bf16 %v1699, %v1698
        %1718 = vmatpush.bf16.msra.mxu0 %v538
        %1719 = vmatpush.bf16.msra.mxu0 %v534
        %1720 = vmatpush.bf16.msra.mxu0 %v530
        %1721 = vmatpush.bf16.msra.mxu0 %v526
        %1722 = vmatpush.bf16.msra.mxu0 %v522
        %1723 = vmatpush.bf16.msra.mxu0 %v518
        %1724 = vmatpush.bf16.msra.mxu0 %v514
        %1725 = vmatpush.bf16.msra.mxu0 %v510
        %1726 = vmatmul.bf16.gmra.mxu0 %v1717
        %v1727 = vpop.f32.mrf.mxu0
        %v1728 = vadd.f32 0.0, %v1727
        %v1729 = vpop.f32.mrf.mxu0
        %v1730 = vadd.f32 0.0, %v1729
        %1731 = vdwg.mxu0
        %1732 = vmatpush.bf16.msra.mxu0 %v539
        %1733 = vmatpush.bf16.msra.mxu0 %v535
        %1734 = vmatpush.bf16.msra.mxu0 %v531
        %1735 = vmatpush.bf16.msra.mxu0 %v527
        %1736 = vmatpush.bf16.msra.mxu0 %v523
        %1737 = vmatpush.bf16.msra.mxu0 %v519
        %1738 = vmatpush.bf16.msra.mxu0 %v515
        %1739 = vmatpush.bf16.msra.mxu0 %v511
        %1740 = vmatmul.bf16.gmra.mxu0 %v1717
        %v1741 = vpop.f32.mrf.mxu0
        %v1742 = vadd.f32 0.0, %v1741
        %v1743 = vpop.f32.mrf.mxu0
        %v1744 = vadd.f32 0.0, %v1743
        %1745 = vdwg.mxu0
        %1746 = vmatpush.bf16.msra.mxu0 %v540
        %1747 = vmatpush.bf16.msra.mxu0 %v536
        %1748 = vmatpush.bf16.msra.mxu0 %v532
        %1749 = vmatpush.bf16.msra.mxu0 %v528
        %1750 = vmatpush.bf16.msra.mxu0 %v524
        %1751 = vmatpush.bf16.msra.mxu0 %v520
        %1752 = vmatpush.bf16.msra.mxu0 %v516
        %1753 = vmatpush.bf16.msra.mxu0 %v512
        %1754 = vmatmul.bf16.gmra.mxu0 %v1717
        %v1755 = vpop.f32.mrf.mxu0
        %v1756 = vadd.f32 0.0, %v1755
        %v1757 = vpop.f32.mrf.mxu0
        %v1758 = vadd.f32 0.0, %v1757
        %1759 = vdwg.mxu0
        %1760 = vmatpush.bf16.msra.mxu0 %v541
        %1761 = vmatpush.bf16.msra.mxu0 %v537
        %1762 = vmatpush.bf16.msra.mxu0 %v533
        %1763 = vmatpush.bf16.msra.mxu0 %v529
        %1764 = vmatpush.bf16.msra.mxu0 %v525
        %1765 = vmatpush.bf16.msra.mxu0 %v521
        %1766 = vmatpush.bf16.msra.mxu0 %v517
        %1767 = vmatpush.bf16.msra.mxu0 %v513
        %1768 = vmatmul.bf16.gmra.mxu0 %v1717
        %v1769 = vpop.f32.mrf.mxu0
        %v1770 = vadd.f32 0.0, %v1769
        %v1771 = vpop.f32.mrf.mxu0
        %v1772 = vadd.f32 0.0, %v1771
        %1773 = vdwg.mxu0
        %v1774 = vadd.f32 %v1709, %v1728
        %v1775 = vadd.f32 %v1710, %v1742
        %v1776 = vadd.f32 %v1711, %v1756
        %v1777 = vadd.f32 %v1712, %v1770
        %v1778 = vadd.f32 %v1713, %v1730
        %v1779 = vadd.f32 %v1714, %v1744
        %v1780 = vadd.f32 %v1715, %v1758
        %v1781 = vadd.f32 %v1716, %v1772
        %v1782 = vxor.u32 %v1774, 2147483648
        %v1783 = vxor.u32 %v1778, 2147483648
        %v1784 = vmul.f32 %v1782, 1.442695
        %v1785 = vpow.pop %v1784
        %v1786 = vmul.f32 %v1783, 1.442695
        %v1787 = vpow.pop %v1786
        %v1788 = vadd.f32 %v1785, 1.0
        %v1789 = vadd.f32 %v1787, 1.0
        %v1790 = vrcp.pop %v1788
        %v1791 = vmul.f32 %v1788, %v1790
        %v1792 = vsub.f32 1.0, %v1791
        %v1793 = vmul.f32 %v1790, %v1792
        %v1794 = vadd.f32 %v1790, %v1793
        %vm1795 = vweird.f32 %v1788
        %vm1796 = vweird.f32 %v1790
        %vm1797 = vmor %vm1795, %vm1796
        %v1798 = vsel %vm1797, %v1790, %v1794
        %v1799 = vand.u32 2147483647, %v1788
        %vm1800 = vcmp.eq.f32.partialorder %v1799, 8.507059e+37
        %v1801 = vand.u32 %v1788, 2147483648
        %v1802 = vor.u32 1.1754944e-38, %v1801
        %v1803 = vsel %vm1800, %v1802, %v1798
        %v1804 = vmul.f32 1.0, %v1803
        %v1805 = vrcp.pop %v1789
        %v1806 = vmul.f32 %v1789, %v1805
        %v1807 = vsub.f32 1.0, %v1806
        %v1808 = vmul.f32 %v1805, %v1807
        %v1809 = vadd.f32 %v1805, %v1808
        %vm1810 = vweird.f32 %v1789
        %vm1811 = vweird.f32 %v1805
        %vm1812 = vmor %vm1810, %vm1811
        %v1813 = vsel %vm1812, %v1805, %v1809
        %v1814 = vand.u32 2147483647, %v1789
        %vm1815 = vcmp.eq.f32.partialorder %v1814, 8.507059e+37
        %v1816 = vand.u32 %v1789, 2147483648
        %v1817 = vor.u32 1.1754944e-38, %v1816
        %v1818 = vsel %vm1815, %v1817, %v1813
        %v1819 = vmul.f32 1.0, %v1818
        %v1820 = vxor.u32 %v1775, 2147483648
        %v1821 = vxor.u32 %v1779, 2147483648
        %v1822 = vmul.f32 %v1820, 1.442695
        %v1823 = vpow.pop %v1822
        %v1824 = vmul.f32 %v1821, 1.442695
        %v1825 = vpow.pop %v1824
        %v1826 = vadd.f32 %v1823, 1.0
        %v1827 = vadd.f32 %v1825, 1.0
        %v1828 = vrcp.pop %v1826
        %v1829 = vmul.f32 %v1826, %v1828
        %v1830 = vsub.f32 1.0, %v1829
        %v1831 = vmul.f32 %v1828, %v1830
        %v1832 = vadd.f32 %v1828, %v1831
        %vm1833 = vweird.f32 %v1826
        %vm1834 = vweird.f32 %v1828
        %vm1835 = vmor %vm1833, %vm1834
        %v1836 = vsel %vm1835, %v1828, %v1832
        %v1837 = vand.u32 2147483647, %v1826
        %vm1838 = vcmp.eq.f32.partialorder %v1837, 8.507059e+37
        %v1839 = vand.u32 %v1826, 2147483648
        %v1840 = vor.u32 1.1754944e-38, %v1839
        %v1841 = vsel %vm1838, %v1840, %v1836
        %v1842 = vmul.f32 1.0, %v1841
        %v1843 = vrcp.pop %v1827
        %v1844 = vmul.f32 %v1827, %v1843
        %v1845 = vsub.f32 1.0, %v1844
        %v1846 = vmul.f32 %v1843, %v1845
        %v1847 = vadd.f32 %v1843, %v1846
        %vm1848 = vweird.f32 %v1827
        %vm1849 = vweird.f32 %v1843
        %vm1850 = vmor %vm1848, %vm1849
        %v1851 = vsel %vm1850, %v1843, %v1847
        %v1852 = vand.u32 2147483647, %v1827
        %vm1853 = vcmp.eq.f32.partialorder %v1852, 8.507059e+37
        %v1854 = vand.u32 %v1827, 2147483648
        %v1855 = vor.u32 1.1754944e-38, %v1854
        %v1856 = vsel %vm1853, %v1855, %v1851
        %v1857 = vmul.f32 1.0, %v1856
        %v1858 = vtanh.pop %v1776
        %v1859 = vtanh.pop %v1780
        %v1860 = vxor.u32 %v1777, 2147483648
        %v1861 = vxor.u32 %v1781, 2147483648
        %v1862 = vmul.f32 %v1860, 1.442695
        %v1863 = vpow.pop %v1862
        %v1864 = vmul.f32 %v1861, 1.442695
        %v1865 = vpow.pop %v1864
        %v1866 = vadd.f32 %v1863, 1.0
        %v1867 = vadd.f32 %v1865, 1.0
        %v1868 = vrcp.pop %v1866
        %v1869 = vmul.f32 %v1866, %v1868
        %v1870 = vsub.f32 1.0, %v1869
        %v1871 = vmul.f32 %v1868, %v1870
        %v1872 = vadd.f32 %v1868, %v1871
        %vm1873 = vweird.f32 %v1866
        %vm1874 = vweird.f32 %v1868
        %vm1875 = vmor %vm1873, %vm1874
        %v1876 = vsel %vm1875, %v1868, %v1872
        %v1877 = vand.u32 2147483647, %v1866
        %vm1878 = vcmp.eq.f32.partialorder %v1877, 8.507059e+37
        %v1879 = vand.u32 %v1866, 2147483648
        %v1880 = vor.u32 1.1754944e-38, %v1879
        %v1881 = vsel %vm1878, %v1880, %v1876
        %v1882 = vmul.f32 1.0, %v1881
        %v1883 = vrcp.pop %v1867
        %v1884 = vmul.f32 %v1867, %v1883
        %v1885 = vsub.f32 1.0, %v1884
        %v1886 = vmul.f32 %v1883, %v1885
        %v1887 = vadd.f32 %v1883, %v1886
        %vm1888 = vweird.f32 %v1867
        %vm1889 = vweird.f32 %v1883
        %vm1890 = vmor %vm1888, %vm1889
        %v1891 = vsel %vm1890, %v1883, %v1887
        %v1892 = vand.u32 2147483647, %v1867
        %vm1893 = vcmp.eq.f32.partialorder %v1892, 8.507059e+37
        %v1894 = vand.u32 %v1867, 2147483648
        %v1895 = vor.u32 1.1754944e-38, %v1894
        %v1896 = vsel %vm1893, %v1895, %v1891
        %v1897 = vmul.f32 1.0, %v1896
        %v1898 = vmul.f32 %v1842, %v1700
        %v1899 = vmul.f32 %v1857, %v1701
        %v1900 = vmul.f32 %v1804, %v1858
        %v1901 = vmul.f32 %v1819, %v1859
        %v1902 = vadd.f32 %v1898, %v1900
        %v1903 = vadd.f32 %v1899, %v1901
        %v1904 = vtanh.pop %v1902
        %v1905 = vtanh.pop %v1903
        %v1906 = vmul.f32 %v1882, %v1904
        %v1907 = vmul.f32 %v1897, %v1905
        %v1908 = vstv %s1705
        %vm1909 = vcmp.lt.s32.totalorder %v1908, %v356
        %vm1910 = vcmp.lt.s32.totalorder %v1908, %v357
        %v1911 = vsel %vm1909, 1, 0
        %v1912 = vsel %vm1910, 1, 0
        %1913 = vset.pattern.permute.xlu0 0
        %1914 = vperm.xlu0 %1913, %v1911
        %v1915 = vpop.permute.xlu0 %1914
        %1916 = vset.pattern.permute.xlu0 0
        %1917 = vperm.xlu0 %1916, %v1912
        %v1918 = vpop.permute.xlu0 %1917
        %vm1919 = vcmp.eq.s32.totalorder %v1915, 1
        %vm1920 = vcmp.eq.s32.totalorder %v1918, 1
        %v1921 = vsel %vm1919, %v1906, 0.0
        %v1922 = vsel %vm1920, %v1907, 0.0
        %s1923 = smul.u32 %s1704, 16
        %s1924 = scalar_lea.vmem %s291, %s1923 [#allocation2]
        %1925 = vst [vmem:[%s1924] sm:$0xff] %v1921
        %1926 = vst [vmem:[%s1924 + $0x8] sm:$0xff] %v1922
        %v1927 = vsel %vm1919, %v1906, %v1698
        %v1928 = vsel %vm1920, %v1907, %v1699
        %v1929 = vsel %vm1919, %v1902, %v1700
        %v1930 = vsel %vm1920, %v1903, %v1701
        %s1931 = smul.u32 %s390, 6
        %s1932 = sadd.s32 %s1931, %s21
        %s1933 = sadd.s32 %s395, %s1932
        %s1934 = smul.u32 %s1932, 8
        %s1935 = smul.addr %s1934, 8
        %s1936 = scalar_lea.vmem %s320, %s1935
        %v1937 = vld [vmem:[%s1936] sm:$0xff]
        %v1938 = vld [vmem:[%s1936 + $0x8] sm:$0xff]
        %v1939 = vld [vmem:[%s1936 + $0x10] sm:$0xff]
        %v1940 = vld [vmem:[%s1936 + $0x18] sm:$0xff]
        %v1941 = vld [vmem:[%s1936 + $0x20] sm:$0xff]
        %v1942 = vld [vmem:[%s1936 + $0x28] sm:$0xff]
        %v1943 = vld [vmem:[%s1936 + $0x30] sm:$0xff]
        %v1944 = vld [vmem:[%s1936 + $0x38] sm:$0xff]
        %v1945 = vpack.c.bf16 %v1928, %v1927
        %1946 = vmatpush.bf16.msra.mxu0 %v538
        %1947 = vmatpush.bf16.msra.mxu0 %v534
        %1948 = vmatpush.bf16.msra.mxu0 %v530
        %1949 = vmatpush.bf16.msra.mxu0 %v526
        %1950 = vmatpush.bf16.msra.mxu0 %v522
        %1951 = vmatpush.bf16.msra.mxu0 %v518
        %1952 = vmatpush.bf16.msra.mxu0 %v514
        %1953 = vmatpush.bf16.msra.mxu0 %v510
        %1954 = vmatmul.bf16.gmra.mxu0 %v1945
        %v1955 = vpop.f32.mrf.mxu0
        %v1956 = vadd.f32 0.0, %v1955
        %v1957 = vpop.f32.mrf.mxu0
        %v1958 = vadd.f32 0.0, %v1957
        %1959 = vdwg.mxu0
        %1960 = vmatpush.bf16.msra.mxu0 %v539
        %1961 = vmatpush.bf16.msra.mxu0 %v535
        %1962 = vmatpush.bf16.msra.mxu0 %v531
        %1963 = vmatpush.bf16.msra.mxu0 %v527
        %1964 = vmatpush.bf16.msra.mxu0 %v523
        %1965 = vmatpush.bf16.msra.mxu0 %v519
        %1966 = vmatpush.bf16.msra.mxu0 %v515
        %1967 = vmatpush.bf16.msra.mxu0 %v511
        %1968 = vmatmul.bf16.gmra.mxu0 %v1945
        %v1969 = vpop.f32.mrf.mxu0
        %v1970 = vadd.f32 0.0, %v1969
        %v1971 = vpop.f32.mrf.mxu0
        %v1972 = vadd.f32 0.0, %v1971
        %1973 = vdwg.mxu0
        %1974 = vmatpush.bf16.msra.mxu0 %v540
        %1975 = vmatpush.bf16.msra.mxu0 %v536
        %1976 = vmatpush.bf16.msra.mxu0 %v532
        %1977 = vmatpush.bf16.msra.mxu0 %v528
        %1978 = vmatpush.bf16.msra.mxu0 %v524
        %1979 = vmatpush.bf16.msra.mxu0 %v520
        %1980 = vmatpush.bf16.msra.mxu0 %v516
        %1981 = vmatpush.bf16.msra.mxu0 %v512
        %1982 = vmatmul.bf16.gmra.mxu0 %v1945
        %v1983 = vpop.f32.mrf.mxu0
        %v1984 = vadd.f32 0.0, %v1983
        %v1985 = vpop.f32.mrf.mxu0
        %v1986 = vadd.f32 0.0, %v1985
        %1987 = vdwg.mxu0
        %1988 = vmatpush.bf16.msra.mxu0 %v541
        %1989 = vmatpush.bf16.msra.mxu0 %v537
        %1990 = vmatpush.bf16.msra.mxu0 %v533
        %1991 = vmatpush.bf16.msra.mxu0 %v529
        %1992 = vmatpush.bf16.msra.mxu0 %v525
        %1993 = vmatpush.bf16.msra.mxu0 %v521
        %1994 = vmatpush.bf16.msra.mxu0 %v517
        %1995 = vmatpush.bf16.msra.mxu0 %v513
        %1996 = vmatmul.bf16.gmra.mxu0 %v1945
        %v1997 = vpop.f32.mrf.mxu0
        %v1998 = vadd.f32 0.0, %v1997
        %v1999 = vpop.f32.mrf.mxu0
        %v2000 = vadd.f32 0.0, %v1999
        %2001 = vdwg.mxu0
        %v2002 = vadd.f32 %v1937, %v1956
        %v2003 = vadd.f32 %v1938, %v1970
        %v2004 = vadd.f32 %v1939, %v1984
        %v2005 = vadd.f32 %v1940, %v1998
        %v2006 = vadd.f32 %v1941, %v1958
        %v2007 = vadd.f32 %v1942, %v1972
        %v2008 = vadd.f32 %v1943, %v1986
        %v2009 = vadd.f32 %v1944, %v2000
        %v2010 = vxor.u32 %v2002, 2147483648
        %v2011 = vxor.u32 %v2006, 2147483648
        %v2012 = vmul.f32 %v2010, 1.442695
        %v2013 = vpow.pop %v2012
        %v2014 = vmul.f32 %v2011, 1.442695
        %v2015 = vpow.pop %v2014
        %v2016 = vadd.f32 %v2013, 1.0
        %v2017 = vadd.f32 %v2015, 1.0
        %v2018 = vrcp.pop %v2016
        %v2019 = vmul.f32 %v2016, %v2018
        %v2020 = vsub.f32 1.0, %v2019
        %v2021 = vmul.f32 %v2018, %v2020
        %v2022 = vadd.f32 %v2018, %v2021
        %vm2023 = vweird.f32 %v2016
        %vm2024 = vweird.f32 %v2018
        %vm2025 = vmor %vm2023, %vm2024
        %v2026 = vsel %vm2025, %v2018, %v2022
        %v2027 = vand.u32 2147483647, %v2016
        %vm2028 = vcmp.eq.f32.partialorder %v2027, 8.507059e+37
        %v2029 = vand.u32 %v2016, 2147483648
        %v2030 = vor.u32 1.1754944e-38, %v2029
        %v2031 = vsel %vm2028, %v2030, %v2026
        %v2032 = vmul.f32 1.0, %v2031
        %v2033 = vrcp.pop %v2017
        %v2034 = vmul.f32 %v2017, %v2033
        %v2035 = vsub.f32 1.0, %v2034
        %v2036 = vmul.f32 %v2033, %v2035
        %v2037 = vadd.f32 %v2033, %v2036
        %vm2038 = vweird.f32 %v2017
        %vm2039 = vweird.f32 %v2033
        %vm2040 = vmor %vm2038, %vm2039
        %v2041 = vsel %vm2040, %v2033, %v2037
        %v2042 = vand.u32 2147483647, %v2017
        %vm2043 = vcmp.eq.f32.partialorder %v2042, 8.507059e+37
        %v2044 = vand.u32 %v2017, 2147483648
        %v2045 = vor.u32 1.1754944e-38, %v2044
        %v2046 = vsel %vm2043, %v2045, %v2041
        %v2047 = vmul.f32 1.0, %v2046
        %v2048 = vxor.u32 %v2003, 2147483648
        %v2049 = vxor.u32 %v2007, 2147483648
        %v2050 = vmul.f32 %v2048, 1.442695
        %v2051 = vpow.pop %v2050
        %v2052 = vmul.f32 %v2049, 1.442695
        %v2053 = vpow.pop %v2052
        %v2054 = vadd.f32 %v2051, 1.0
        %v2055 = vadd.f32 %v2053, 1.0
        %v2056 = vrcp.pop %v2054
        %v2057 = vmul.f32 %v2054, %v2056
        %v2058 = vsub.f32 1.0, %v2057
        %v2059 = vmul.f32 %v2056, %v2058
        %v2060 = vadd.f32 %v2056, %v2059
        %vm2061 = vweird.f32 %v2054
        %vm2062 = vweird.f32 %v2056
        %vm2063 = vmor %vm2061, %vm2062
        %v2064 = vsel %vm2063, %v2056, %v2060
        %v2065 = vand.u32 2147483647, %v2054
        %vm2066 = vcmp.eq.f32.partialorder %v2065, 8.507059e+37
        %v2067 = vand.u32 %v2054, 2147483648
        %v2068 = vor.u32 1.1754944e-38, %v2067
        %v2069 = vsel %vm2066, %v2068, %v2064
        %v2070 = vmul.f32 1.0, %v2069
        %v2071 = vrcp.pop %v2055
        %v2072 = vmul.f32 %v2055, %v2071
        %v2073 = vsub.f32 1.0, %v2072
        %v2074 = vmul.f32 %v2071, %v2073
        %v2075 = vadd.f32 %v2071, %v2074
        %vm2076 = vweird.f32 %v2055
        %vm2077 = vweird.f32 %v2071
        %vm2078 = vmor %vm2076, %vm2077
        %v2079 = vsel %vm2078, %v2071, %v2075
        %v2080 = vand.u32 2147483647, %v2055
        %vm2081 = vcmp.eq.f32.partialorder %v2080, 8.507059e+37
        %v2082 = vand.u32 %v2055, 2147483648
        %v2083 = vor.u32 1.1754944e-38, %v2082
        %v2084 = vsel %vm2081, %v2083, %v2079
        %v2085 = vmul.f32 1.0, %v2084
        %v2086 = vtanh.pop %v2004
        %v2087 = vtanh.pop %v2008
        %v2088 = vxor.u32 %v2005, 2147483648
        %v2089 = vxor.u32 %v2009, 2147483648
        %v2090 = vmul.f32 %v2088, 1.442695
        %v2091 = vpow.pop %v2090
        %v2092 = vmul.f32 %v2089, 1.442695
        %v2093 = vpow.pop %v2092
        %v2094 = vadd.f32 %v2091, 1.0
        %v2095 = vadd.f32 %v2093, 1.0
        %v2096 = vrcp.pop %v2094
        %v2097 = vmul.f32 %v2094, %v2096
        %v2098 = vsub.f32 1.0, %v2097
        %v2099 = vmul.f32 %v2096, %v2098
        %v2100 = vadd.f32 %v2096, %v2099
        %vm2101 = vweird.f32 %v2094
        %vm2102 = vweird.f32 %v2096
        %vm2103 = vmor %vm2101, %vm2102
        %v2104 = vsel %vm2103, %v2096, %v2100
        %v2105 = vand.u32 2147483647, %v2094
        %vm2106 = vcmp.eq.f32.partialorder %v2105, 8.507059e+37
        %v2107 = vand.u32 %v2094, 2147483648
        %v2108 = vor.u32 1.1754944e-38, %v2107
        %v2109 = vsel %vm2106, %v2108, %v2104
        %v2110 = vmul.f32 1.0, %v2109
        %v2111 = vrcp.pop %v2095
        %v2112 = vmul.f32 %v2095, %v2111
        %v2113 = vsub.f32 1.0, %v2112
        %v2114 = vmul.f32 %v2111, %v2113
        %v2115 = vadd.f32 %v2111, %v2114
        %vm2116 = vweird.f32 %v2095
        %vm2117 = vweird.f32 %v2111
        %vm2118 = vmor %vm2116, %vm2117
        %v2119 = vsel %vm2118, %v2111, %v2115
        %v2120 = vand.u32 2147483647, %v2095
        %vm2121 = vcmp.eq.f32.partialorder %v2120, 8.507059e+37
        %v2122 = vand.u32 %v2095, 2147483648
        %v2123 = vor.u32 1.1754944e-38, %v2122
        %v2124 = vsel %vm2121, %v2123, %v2119
        %v2125 = vmul.f32 1.0, %v2124
        %v2126 = vmul.f32 %v2070, %v1929
        %v2127 = vmul.f32 %v2085, %v1930
        %v2128 = vmul.f32 %v2032, %v2086
        %v2129 = vmul.f32 %v2047, %v2087
        %v2130 = vadd.f32 %v2126, %v2128
        %v2131 = vadd.f32 %v2127, %v2129
        %v2132 = vtanh.pop %v2130
        %v2133 = vtanh.pop %v2131
        %v2134 = vmul.f32 %v2110, %v2132
        %v2135 = vmul.f32 %v2125, %v2133
        %v2136 = vstv %s1933
        %vm2137 = vcmp.lt.s32.totalorder %v2136, %v356
        %vm2138 = vcmp.lt.s32.totalorder %v2136, %v357
        %v2139 = vsel %vm2137, 1, 0
        %v2140 = vsel %vm2138, 1, 0
        %2141 = vset.pattern.permute.xlu0 0
        %2142 = vperm.xlu0 %2141, %v2139
        %v2143 = vpop.permute.xlu0 %2142
        %2144 = vset.pattern.permute.xlu0 0
        %2145 = vperm.xlu0 %2144, %v2140
        %v2146 = vpop.permute.xlu0 %2145
        %vm2147 = vcmp.eq.s32.totalorder %v2143, 1
        %vm2148 = vcmp.eq.s32.totalorder %v2146, 1
        %v2149 = vsel %vm2147, %v2134, 0.0
        %v2150 = vsel %vm2148, %v2135, 0.0
        %s2151 = smul.u32 %s1932, 16
        %s2152 = scalar_lea.vmem %s291, %s2151 [#allocation2]
        %2153 = vst [vmem:[%s2152] sm:$0xff] %v2149
        %2154 = vst [vmem:[%s2152 + $0x8] sm:$0xff] %v2150
        %v2155 = vsel %vm2147, %v2134, %v1927
        %v2156 = vsel %vm2148, %v2135, %v1928
        %v2157 = vsel %vm2147, %v2130, %v1929
        %v2158 = vsel %vm2148, %v2131, %v1930
        %s2159 = smul.u32 %s390, 7
        %s2160 = sadd.s32 %s395, %s2159
        %s2161 = smul.u32 %s2159, 8
        %s2162 = smul.addr %s2161, 8
        %s2163 = scalar_lea.vmem %s320, %s2162
        %v2164 = vld [vmem:[%s2163] sm:$0xff]
        %v2165 = vld [vmem:[%s2163 + $0x8] sm:$0xff]
        %v2166 = vld [vmem:[%s2163 + $0x10] sm:$0xff]
        %v2167 = vld [vmem:[%s2163 + $0x18] sm:$0xff]
        %v2168 = vld [vmem:[%s2163 + $0x20] sm:$0xff]
        %v2169 = vld [vmem:[%s2163 + $0x28] sm:$0xff]
        %v2170 = vld [vmem:[%s2163 + $0x30] sm:$0xff]
        %v2171 = vld [vmem:[%s2163 + $0x38] sm:$0xff]
        %v2172 = vpack.c.bf16 %v2156, %v2155
        %2173 = vmatpush.bf16.msra.mxu0 %v538
        %2174 = vmatpush.bf16.msra.mxu0 %v534
        %2175 = vmatpush.bf16.msra.mxu0 %v530
        %2176 = vmatpush.bf16.msra.mxu0 %v526
        %2177 = vmatpush.bf16.msra.mxu0 %v522
        %2178 = vmatpush.bf16.msra.mxu0 %v518
        %2179 = vmatpush.bf16.msra.mxu0 %v514
        %2180 = vmatpush.bf16.msra.mxu0 %v510
        %2181 = vmatmul.bf16.gmra.mxu0 %v2172
        %v2182 = vpop.f32.mrf.mxu0
        %v2183 = vadd.f32 0.0, %v2182
        %v2184 = vpop.f32.mrf.mxu0
        %v2185 = vadd.f32 0.0, %v2184
        %2186 = vdwg.mxu0
        %2187 = vmatpush.bf16.msra.mxu0 %v539
        %2188 = vmatpush.bf16.msra.mxu0 %v535
        %2189 = vmatpush.bf16.msra.mxu0 %v531
        %2190 = vmatpush.bf16.msra.mxu0 %v527
        %2191 = vmatpush.bf16.msra.mxu0 %v523
        %2192 = vmatpush.bf16.msra.mxu0 %v519
        %2193 = vmatpush.bf16.msra.mxu0 %v515
        %2194 = vmatpush.bf16.msra.mxu0 %v511
        %2195 = vmatmul.bf16.gmra.mxu0 %v2172
        %v2196 = vpop.f32.mrf.mxu0
        %v2197 = vadd.f32 0.0, %v2196
        %v2198 = vpop.f32.mrf.mxu0
        %v2199 = vadd.f32 0.0, %v2198
        %2200 = vdwg.mxu0
        %2201 = vmatpush.bf16.msra.mxu0 %v540
        %2202 = vmatpush.bf16.msra.mxu0 %v536
        %2203 = vmatpush.bf16.msra.mxu0 %v532
        %2204 = vmatpush.bf16.msra.mxu0 %v528
        %2205 = vmatpush.bf16.msra.mxu0 %v524
        %2206 = vmatpush.bf16.msra.mxu0 %v520
        %2207 = vmatpush.bf16.msra.mxu0 %v516
        %2208 = vmatpush.bf16.msra.mxu0 %v512
        %2209 = vmatmul.bf16.gmra.mxu0 %v2172
        %v2210 = vpop.f32.mrf.mxu0
        %v2211 = vadd.f32 0.0, %v2210
        %v2212 = vpop.f32.mrf.mxu0
        %v2213 = vadd.f32 0.0, %v2212
        %2214 = vdwg.mxu0
        %2215 = vmatpush.bf16.msra.mxu0 %v541
        %2216 = vmatpush.bf16.msra.mxu0 %v537
        %2217 = vmatpush.bf16.msra.mxu0 %v533
        %2218 = vmatpush.bf16.msra.mxu0 %v529
        %2219 = vmatpush.bf16.msra.mxu0 %v525
        %2220 = vmatpush.bf16.msra.mxu0 %v521
        %2221 = vmatpush.bf16.msra.mxu0 %v517
        %2222 = vmatpush.bf16.msra.mxu0 %v513
        %2223 = vmatmul.bf16.gmra.mxu0 %v2172
        %v2224 = vpop.f32.mrf.mxu0
        %v2225 = vadd.f32 0.0, %v2224
        %v2226 = vpop.f32.mrf.mxu0
        %v2227 = vadd.f32 0.0, %v2226
        %2228 = vdwg.mxu0
        %v2229 = vadd.f32 %v2164, %v2183
        %v2230 = vadd.f32 %v2165, %v2197
        %v2231 = vadd.f32 %v2166, %v2211
        %v2232 = vadd.f32 %v2167, %v2225
        %v2233 = vadd.f32 %v2168, %v2185
        %v2234 = vadd.f32 %v2169, %v2199
        %v2235 = vadd.f32 %v2170, %v2213
        %v2236 = vadd.f32 %v2171, %v2227
        %v2237 = vxor.u32 %v2229, 2147483648
        %v2238 = vxor.u32 %v2233, 2147483648
        %v2239 = vmul.f32 %v2237, 1.442695
        %v2240 = vpow.pop %v2239
        %v2241 = vmul.f32 %v2238, 1.442695
        %v2242 = vpow.pop %v2241
        %v2243 = vadd.f32 %v2240, 1.0
        %v2244 = vadd.f32 %v2242, 1.0
        %v2245 = vrcp.pop %v2243
        %v2246 = vmul.f32 %v2243, %v2245
        %v2247 = vsub.f32 1.0, %v2246
        %v2248 = vmul.f32 %v2245, %v2247
        %v2249 = vadd.f32 %v2245, %v2248
        %vm2250 = vweird.f32 %v2243
        %vm2251 = vweird.f32 %v2245
        %vm2252 = vmor %vm2250, %vm2251
        %v2253 = vsel %vm2252, %v2245, %v2249
        %v2254 = vand.u32 2147483647, %v2243
        %vm2255 = vcmp.eq.f32.partialorder %v2254, 8.507059e+37
        %v2256 = vand.u32 %v2243, 2147483648
        %v2257 = vor.u32 1.1754944e-38, %v2256
        %v2258 = vsel %vm2255, %v2257, %v2253
        %v2259 = vmul.f32 1.0, %v2258
        %v2260 = vrcp.pop %v2244
        %v2261 = vmul.f32 %v2244, %v2260
        %v2262 = vsub.f32 1.0, %v2261
        %v2263 = vmul.f32 %v2260, %v2262
        %v2264 = vadd.f32 %v2260, %v2263
        %vm2265 = vweird.f32 %v2244
        %vm2266 = vweird.f32 %v2260
        %vm2267 = vmor %vm2265, %vm2266
        %v2268 = vsel %vm2267, %v2260, %v2264
        %v2269 = vand.u32 2147483647, %v2244
        %vm2270 = vcmp.eq.f32.partialorder %v2269, 8.507059e+37
        %v2271 = vand.u32 %v2244, 2147483648
        %v2272 = vor.u32 1.1754944e-38, %v2271
        %v2273 = vsel %vm2270, %v2272, %v2268
        %v2274 = vmul.f32 1.0, %v2273
        %v2275 = vxor.u32 %v2230, 2147483648
        %v2276 = vxor.u32 %v2234, 2147483648
        %v2277 = vmul.f32 %v2275, 1.442695
        %v2278 = vpow.pop %v2277
        %v2279 = vmul.f32 %v2276, 1.442695
        %v2280 = vpow.pop %v2279
        %v2281 = vadd.f32 %v2278, 1.0
        %v2282 = vadd.f32 %v2280, 1.0
        %v2283 = vrcp.pop %v2281
        %v2284 = vmul.f32 %v2281, %v2283
        %v2285 = vsub.f32 1.0, %v2284
        %v2286 = vmul.f32 %v2283, %v2285
        %v2287 = vadd.f32 %v2283, %v2286
        %vm2288 = vweird.f32 %v2281
        %vm2289 = vweird.f32 %v2283
        %vm2290 = vmor %vm2288, %vm2289
        %v2291 = vsel %vm2290, %v2283, %v2287
        %v2292 = vand.u32 2147483647, %v2281
        %vm2293 = vcmp.eq.f32.partialorder %v2292, 8.507059e+37
        %v2294 = vand.u32 %v2281, 2147483648
        %v2295 = vor.u32 1.1754944e-38, %v2294
        %v2296 = vsel %vm2293, %v2295, %v2291
        %v2297 = vmul.f32 1.0, %v2296
        %v2298 = vrcp.pop %v2282
        %v2299 = vmul.f32 %v2282, %v2298
        %v2300 = vsub.f32 1.0, %v2299
        %v2301 = vmul.f32 %v2298, %v2300
        %v2302 = vadd.f32 %v2298, %v2301
        %vm2303 = vweird.f32 %v2282
        %vm2304 = vweird.f32 %v2298
        %vm2305 = vmor %vm2303, %vm2304
        %v2306 = vsel %vm2305, %v2298, %v2302
        %v2307 = vand.u32 2147483647, %v2282
        %vm2308 = vcmp.eq.f32.partialorder %v2307, 8.507059e+37
        %v2309 = vand.u32 %v2282, 2147483648
        %v2310 = vor.u32 1.1754944e-38, %v2309
        %v2311 = vsel %vm2308, %v2310, %v2306
        %v2312 = vmul.f32 1.0, %v2311
        %v2313 = vtanh.pop %v2231
        %v2314 = vtanh.pop %v2235
        %v2315 = vxor.u32 %v2232, 2147483648
        %v2316 = vxor.u32 %v2236, 2147483648
        %v2317 = vmul.f32 %v2315, 1.442695
        %v2318 = vpow.pop %v2317
        %v2319 = vmul.f32 %v2316, 1.442695
        %v2320 = vpow.pop %v2319
        %v2321 = vadd.f32 %v2318, 1.0
        %v2322 = vadd.f32 %v2320, 1.0
        %v2323 = vrcp.pop %v2321
        %v2324 = vmul.f32 %v2321, %v2323
        %v2325 = vsub.f32 1.0, %v2324
        %v2326 = vmul.f32 %v2323, %v2325
        %v2327 = vadd.f32 %v2323, %v2326
        %vm2328 = vweird.f32 %v2321
        %vm2329 = vweird.f32 %v2323
        %vm2330 = vmor %vm2328, %vm2329
        %v2331 = vsel %vm2330, %v2323, %v2327
        %v2332 = vand.u32 2147483647, %v2321
        %vm2333 = vcmp.eq.f32.partialorder %v2332, 8.507059e+37
        %v2334 = vand.u32 %v2321, 2147483648
        %v2335 = vor.u32 1.1754944e-38, %v2334
        %v2336 = vsel %vm2333, %v2335, %v2331
        %v2337 = vmul.f32 1.0, %v2336
        %v2338 = vrcp.pop %v2322
        %v2339 = vmul.f32 %v2322, %v2338
        %v2340 = vsub.f32 1.0, %v2339
        %v2341 = vmul.f32 %v2338, %v2340
        %v2342 = vadd.f32 %v2338, %v2341
        %vm2343 = vweird.f32 %v2322
        %vm2344 = vweird.f32 %v2338
        %vm2345 = vmor %vm2343, %vm2344
        %v2346 = vsel %vm2345, %v2338, %v2342
        %v2347 = vand.u32 2147483647, %v2322
        %vm2348 = vcmp.eq.f32.partialorder %v2347, 8.507059e+37
        %v2349 = vand.u32 %v2322, 2147483648
        %v2350 = vor.u32 1.1754944e-38, %v2349
        %v2351 = vsel %vm2348, %v2350, %v2346
        %v2352 = vmul.f32 1.0, %v2351
        %v2353 = vmul.f32 %v2297, %v2157
        %v2354 = vmul.f32 %v2312, %v2158
        %v2355 = vmul.f32 %v2259, %v2313
        %v2356 = vmul.f32 %v2274, %v2314
        %v2357 = vadd.f32 %v2353, %v2355
        %v2358 = vadd.f32 %v2354, %v2356
        %v2359 = vtanh.pop %v2357
        %v2360 = vtanh.pop %v2358
        %v2361 = vmul.f32 %v2337, %v2359
        %v2362 = vmul.f32 %v2352, %v2360
        %v2363 = vstv %s2160
        %vm2364 = vcmp.lt.s32.totalorder %v2363, %v356
        %vm2365 = vcmp.lt.s32.totalorder %v2363, %v357
        %v2366 = vsel %vm2364, 1, 0
        %v2367 = vsel %vm2365, 1, 0
        %2368 = vset.pattern.permute.xlu0 0
        %2369 = vperm.xlu0 %2368, %v2366
        %v2370 = vpop.permute.xlu0 %2369
        %2371 = vset.pattern.permute.xlu0 0
        %2372 = vperm.xlu0 %2371, %v2367
        %v2373 = vpop.permute.xlu0 %2372
        %vm2374 = vcmp.eq.s32.totalorder %v2370, 1
        %vm2375 = vcmp.eq.s32.totalorder %v2373, 1
        %v2376 = vsel %vm2374, %v2361, 0.0
        %v2377 = vsel %vm2375, %v2362, 0.0
        %s2378 = smul.u32 %s2159, 16
        %s2379 = scalar_lea.vmem %s291, %s2378 [#allocation2]
        %2380 = vst [vmem:[%s2379] sm:$0xff] %v2376
        %2381 = vst [vmem:[%s2379 + $0x8] sm:$0xff] %v2377
        %v2382 = vsel %vm2374, %v2361, %v2155
        %v2383 = vsel %vm2375, %v2362, %v2156
        %v2384 = vsel %vm2374, %v2357, %v2157
        %v2385 = vsel %vm2375, %v2358, %v2158
        %2386 = vst [vmem:[%s342] sm:$0xff] %v2382
        %2387 = vst [vmem:[%s342 + $0x8] sm:$0xff] %v2383
        %2388 = vst [vmem:[%s347] sm:$0xff] %v2384
        %2389 = vst [vmem:[%s347 + $0x8] sm:$0xff] %v2385
        %s2390 = sand.u32 %s134, 1
        %s2391 = sand.u32 %s134, 1
        %s2392 = smul.addr %s2391, 128
        %s2393 = scalar_lea.vmem [#allocation2], %s2392
        %p2394 = scmp.lt.s32.totalorder %s21, 1
        %s2395 = scalar_select %p2394, %s21, 1
        %s2396 = smul.addr %s2395, 2
        %s2397 = smul.addr %s2396, 8
        %s2398 = scalar_lea.vmem %s4, %s2397
        %p2399 = scmp.lt.s32.totalorder %s21, 1
        %s2400 = scalar_select %p2399, %s21, 1
        %s2401 = smul.addr %s2400, 2
        %s2402 = smul.addr %s2401, 8
        %s2403 = scalar_lea.vmem %s5, %s2402
        // Predicated region
        $region37: #{encoder_forward.3} parent=31 // pred_check
          %p2404 = pneg %p144
        $region38: #{encoder_forward.3} parent=31 // pred_check_branch
          %2406 = sbr.rel (%p2404) target = $region40
        $region39: #{encoder_forward.3} parent=31 // pred_region
          %s2407 = ssub.s32 1, %s21
          %s2408 = smul.u32 %s2407, %s22
          %s2409 = ssub.s32 0, %s22
          %s2410 = smul.u32 %s21, %s2409
          %s2411 = sadd.s32 %s2408, %s2410
          %s2412 = smul.u32 8, %s2411
          %s2413 = smul.addr %s2412, 4
          %s2414 = sadd.s32 %s21, %s2413
          %s2415 = smul.addr %s2414, 8
          %s2416 = scalar_lea.vmem %s3, %s2415
          // Predicated region
          $region41: #{encoder_forward.3} parent=39 // pred_check
            _
          $region42: #{encoder_forward.3} parent=39 // pred_check_branch
            %2418 = sbr.rel (0) target = $region44
          $region43: #{encoder_forward.3} parent=39 // pred_region
            // Predicated region
            $region45: #{encoder_forward.3} parent=43 // pred_check
              _
            $region46: #{encoder_forward.3} parent=43 // pred_check_branch
              %2420 = sbr.rel (0) target = $region48
            $region47: #{encoder_forward.3} parent=43 // pred_region
              // Predicated region
              $region60: #{encoder_forward.3} parent=47 // pred_check
                _
              $region61: #{encoder_forward.3} parent=47 // pred_check_branch
                %2466 = sbr.rel (0) target = $region63
              $region62: #{encoder_forward.3} parent=47 // pred_region
                loop: start=0, step=1, limit=1
                $region64: #{encoder_forward.3} parent=62 // loop_pre_header
                  _
                $region65: #{encoder_forward.3} parent=62 // loop_header
                  %s2468 = sphi 0, %s2472
                  %p2469 = scmp.ge.s32.totalorder %s2468, 1
                  %s2473 = sphi %s2393, %s2393
                  %s2474 = sphi %s2416, %s2416
                $region66: #{encoder_forward.3} parent=62 // loop_header_branch
                  %2471 = sbr.rel (%p2469) target = $region70
                $region67: #{encoder_forward.3} parent=62 // loop_body
                  %v2475 = vld [vmem:[%s2473] sm:$0xff]
                  %2476 = vst [vmem:[%s2474] sm:$0xff] %v2475
                  %v2477 = vld [vmem:[%s2473 + $0x8] sm:$0xff]
                  %2478 = vst [vmem:[%s2474 + $0x10] sm:$0xff] %v2477
                  %v2479 = vld [vmem:[%s2473 + $0x10] sm:$0xff]
                  %2480 = vst [vmem:[%s2474 + $0x20] sm:$0xff] %v2479
                  %v2481 = vld [vmem:[%s2473 + $0x18] sm:$0xff]
                  %2482 = vst [vmem:[%s2474 + $0x30] sm:$0xff] %v2481
                  %v2483 = vld [vmem:[%s2473 + $0x20] sm:$0xff]
                  %2484 = vst [vmem:[%s2474 + $0x40] sm:$0xff] %v2483
                  %v2485 = vld [vmem:[%s2473 + $0x28] sm:$0xff]
                  %2486 = vst [vmem:[%s2474 + $0x50] sm:$0xff] %v2485
                  %v2487 = vld [vmem:[%s2473 + $0x30] sm:$0xff]
                  %2488 = vst [vmem:[%s2474 + $0x60] sm:$0xff] %v2487
                  %v2489 = vld [vmem:[%s2473 + $0x38] sm:$0xff]
                  %2490 = vst [vmem:[%s2474 + $0x70] sm:$0xff] %v2489
                  %v2491 = vld [vmem:[%s2473 + $0x40] sm:$0xff]
                  %2492 = vst [vmem:[%s2474 + $0x80] sm:$0xff] %v2491
                  %v2493 = vld [vmem:[%s2473 + $0x48] sm:$0xff]
                  %2494 = vst [vmem:[%s2474 + $0x90] sm:$0xff] %v2493
                  %v2495 = vld [vmem:[%s2473 + $0x50] sm:$0xff]
                  %2496 = vst [vmem:[%s2474 + $0xa0] sm:$0xff] %v2495
                  %v2497 = vld [vmem:[%s2473 + $0x58] sm:$0xff]
                  %2498 = vst [vmem:[%s2474 + $0xb0] sm:$0xff] %v2497
                  %v2499 = vld [vmem:[%s2473 + $0x60] sm:$0xff]
                  %2500 = vst [vmem:[%s2474 + $0xc0] sm:$0xff] %v2499
                  %v2501 = vld [vmem:[%s2473 + $0x68] sm:$0xff]
                  %2502 = vst [vmem:[%s2474 + $0xd0] sm:$0xff] %v2501
                  %v2503 = vld [vmem:[%s2473 + $0x70] sm:$0xff]
                  %2504 = vst [vmem:[%s2474 + $0xe0] sm:$0xff] %v2503
                  %v2505 = vld [vmem:[%s2473 + $0x78] sm:$0xff]
                  %2506 = vst [vmem:[%s2474 + $0xf0] sm:$0xff] %v2505
                $region68: #{encoder_forward.3} parent=62 // loop_footer
                  %s2472 = sadd.s32 1, %s2468
                $region69: #{encoder_forward.3} parent=62 // loop_footer_branch
                  %2467 = sbr.rel target = $region65
                $region70: #{encoder_forward.3} parent=62 // loop_exit
                  _
              $region63: #{encoder_forward.3} parent=47 // pred_fallthru
                _
              // Predicated region
              $region71: #{encoder_forward.3} parent=47 // pred_check
                _
              $region72: #{encoder_forward.3} parent=47 // pred_check_branch
                %2508 = sbr.rel target = $region74
              $region73: #{encoder_forward.3} parent=47 // pred_region
                _
              $region74: #{encoder_forward.3} parent=47 // pred_fallthru
                _
            $region48: #{encoder_forward.3} parent=43 // pred_fallthru
              _
            // Predicated region
            $region49: #{encoder_forward.3} parent=43 // pred_check
              _
            $region50: #{encoder_forward.3} parent=43 // pred_check_branch
              %2422 = sbr.rel target = $region52
            $region51: #{encoder_forward.3} parent=43 // pred_region
              %s2424 = ssub.s32 256, 1
              loop: start=0, step=1, limit=1
              $region53: #{encoder_forward.3} parent=51 // loop_pre_header
                _
              $region54: #{encoder_forward.3} parent=51 // loop_header
                %s2426 = sphi 0, %s2430
                %p2427 = scmp.ge.s32.totalorder %s2426, 1
                %s2431 = sphi %s2393, %s2393
                %s2432 = sphi %s2416, %s2416
              $region55: #{encoder_forward.3} parent=51 // loop_header_branch
                %2429 = sbr.rel (%p2427) target = $region59
              $region56: #{encoder_forward.3} parent=51 // loop_body
                %v2433 = vld [vmem:[%s2431] sm:%s2424]
                %2434 = vst [vmem:[%s2432] sm:%s2424] %v2433
                %v2435 = vld [vmem:[%s2431 + $0x8] sm:%s2424]
                %2436 = vst [vmem:[%s2432 + $0x10] sm:%s2424] %v2435
                %v2437 = vld [vmem:[%s2431 + $0x10] sm:%s2424]
                %2438 = vst [vmem:[%s2432 + $0x20] sm:%s2424] %v2437
                %v2439 = vld [vmem:[%s2431 + $0x18] sm:%s2424]
                %2440 = vst [vmem:[%s2432 + $0x30] sm:%s2424] %v2439
                %v2441 = vld [vmem:[%s2431 + $0x20] sm:%s2424]
                %2442 = vst [vmem:[%s2432 + $0x40] sm:%s2424] %v2441
                %v2443 = vld [vmem:[%s2431 + $0x28] sm:%s2424]
                %2444 = vst [vmem:[%s2432 + $0x50] sm:%s2424] %v2443
                %v2445 = vld [vmem:[%s2431 + $0x30] sm:%s2424]
                %2446 = vst [vmem:[%s2432 + $0x60] sm:%s2424] %v2445
                %v2447 = vld [vmem:[%s2431 + $0x38] sm:%s2424]
                %2448 = vst [vmem:[%s2432 + $0x70] sm:%s2424] %v2447
                %v2449 = vld [vmem:[%s2431 + $0x40] sm:%s2424]
                %2450 = vst [vmem:[%s2432 + $0x80] sm:%s2424] %v2449
                %v2451 = vld [vmem:[%s2431 + $0x48] sm:%s2424]
                %2452 = vst [vmem:[%s2432 + $0x90] sm:%s2424] %v2451
                %v2453 = vld [vmem:[%s2431 + $0x50] sm:%s2424]
                %2454 = vst [vmem:[%s2432 + $0xa0] sm:%s2424] %v2453
                %v2455 = vld [vmem:[%s2431 + $0x58] sm:%s2424]
                %2456 = vst [vmem:[%s2432 + $0xb0] sm:%s2424] %v2455
                %v2457 = vld [vmem:[%s2431 + $0x60] sm:%s2424]
                %2458 = vst [vmem:[%s2432 + $0xc0] sm:%s2424] %v2457
                %v2459 = vld [vmem:[%s2431 + $0x68] sm:%s2424]
                %2460 = vst [vmem:[%s2432 + $0xd0] sm:%s2424] %v2459
                %v2461 = vld [vmem:[%s2431 + $0x70] sm:%s2424]
                %2462 = vst [vmem:[%s2432 + $0xe0] sm:%s2424] %v2461
                %v2463 = vld [vmem:[%s2431 + $0x78] sm:%s2424]
                %2464 = vst [vmem:[%s2432 + $0xf0] sm:%s2424] %v2463
              $region57: #{encoder_forward.3} parent=51 // loop_footer
                %s2430 = sadd.s32 1, %s2426
              $region58: #{encoder_forward.3} parent=51 // loop_footer_branch
                %2425 = sbr.rel target = $region54
              $region59: #{encoder_forward.3} parent=51 // loop_exit
                _
            $region52: #{encoder_forward.3} parent=43 // pred_fallthru
              _
          $region44: #{encoder_forward.3} parent=39 // pred_fallthru
            _
          %2509 = vnop
        $region40: #{encoder_forward.3} parent=31 // pred_fallthru
          _
        // Predicated region
        $region75: #{encoder_forward.3} parent=31 // pred_check
          %p2510 = pneg %p170
        $region76: #{encoder_forward.3} parent=31 // pred_check_branch
          %2512 = sbr.rel (%p2510) target = $region78
        $region77: #{encoder_forward.3} parent=31 // pred_region
          _
        $region78: #{encoder_forward.3} parent=31 // pred_fallthru
          _
        // Predicated region
        $region79: #{encoder_forward.3} parent=31 // pred_check
          %p2513 = pneg %p196
        $region80: #{encoder_forward.3} parent=31 // pred_check_branch
          %2515 = sbr.rel (%p2513) target = $region82
        $region81: #{encoder_forward.3} parent=31 // pred_region
          _
        $region82: #{encoder_forward.3} parent=31 // pred_fallthru
          _
      $region32: #{encoder_forward.3} parent=5 // pred_fallthru
        _
      %p2516 = scmp.le.s32.totalorder 2, %s12
      // Predicated region
      $region83: #{encoder_forward.3} parent=5 // pred_check
        %p2517 = pneg %p2516
      $region84: #{encoder_forward.3} parent=5 // pred_check_branch
        %2519 = sbr.rel (%p2517) target = $region86
      $region85: #{encoder_forward.3} parent=5 // pred_region
        %s2520 = ssub.s32 %s12, 2
        // Predicated region
        $region87: #{encoder_forward.3} parent=85 // pred_check
          %p2521 = pneg %p150
        $region88: #{encoder_forward.3} parent=85 // pred_check_branch
          %2523 = sbr.rel (%p2521) target = $region90
        $region89: #{encoder_forward.3} parent=85 // pred_region
          %s2524 = sand.u32 %s135, 1
          %s2525 = sand.u32 %s135, 1
          %s2526 = smul.addr %s2525, 128
          %s2527 = scalar_lea.vmem [#allocation2], %s2526
        $region90: #{encoder_forward.3} parent=85 // pred_fallthru
          _
        // Predicated region
        $region91: #{encoder_forward.3} parent=85 // pred_check
          %p2528 = pneg %p176
        $region92: #{encoder_forward.3} parent=85 // pred_check_branch
          %2530 = sbr.rel (%p2528) target = $region94
        $region93: #{encoder_forward.3} parent=85 // pred_region
          %p2531 = scmp.lt.s32.totalorder %s23, 1
          %s2532 = scalar_select %p2531, %s23, 1
          %s2533 = smul.addr %s2532, 2
          %s2534 = smul.addr %s2533, 8
          %s2535 = scalar_lea.vmem %s4, %s2534
        $region94: #{encoder_forward.3} parent=85 // pred_fallthru
          _
        // Predicated region
        $region95: #{encoder_forward.3} parent=85 // pred_check
          %p2536 = pneg %p202
        $region96: #{encoder_forward.3} parent=85 // pred_check_branch
          %2538 = sbr.rel (%p2536) target = $region98
        $region97: #{encoder_forward.3} parent=85 // pred_region
          %p2539 = scmp.lt.s32.totalorder %s23, 1
          %s2540 = scalar_select %p2539, %s23, 1
          %s2541 = smul.addr %s2540, 2
          %s2542 = smul.addr %s2541, 8
          %s2543 = scalar_lea.vmem %s5, %s2542
        $region98: #{encoder_forward.3} parent=85 // pred_fallthru
          _
      $region86: #{encoder_forward.3} parent=5 // pred_fallthru
        _
    $region6: #{encoder_forward.3} parent=1 // loop_footer
      %s16 = sadd.s32 1, %s12
    $region7: #{encoder_forward.3} parent=1 // loop_footer_branch
      %11 = sbr.rel target = $region3
    $region8: #{encoder_forward.3} parent=1 // loop_exit
      _

</llo_original>
